<compile_context>
chip_gen: v7x
topology: tpu7x:2x2x1
jax: 0.10.0
libtpu: 0.0.40
codegen_flags: <defaults>
</compile_context>

<pallas_src>
import functools

import jax
import jax.numpy as jnp
from jax import lax
from jax.experimental import pallas as pl
from jax.experimental.pallas import tpu as pltpu

EPS = 1e-5
_INV_SQRT2 = 0.7071067811865476


def _round_up(n, m):
    return ((n + m - 1) // m) * m


def _gelu(x):
    # Exact (erf) GELU, matching torch.nn.GELU() default numerics.
    return 0.5 * x * (1.0 + lax.erf(x * _INV_SQRT2))


# --------------------------------------------------------------------------------------
# Hardware-aware sizing (v5e/v6e: 128 MiB VMEM, 1 TC; v7x: 64 MiB VMEM, 2 TCs).
# --------------------------------------------------------------------------------------

@functools.lru_cache(maxsize=1)
def _vmem_capacity_bytes():
    try:
        cap = int(pltpu.get_tpu_info().vmem_capacity_bytes)
        if (16 << 20) <= cap <= (1 << 30):
            return cap
    except Exception:
        pass
    return 64 << 20            # conservative fallback == v7x per-TensorCore VMEM


def _vmem_limit_bytes():
    return int(min((_vmem_capacity_bytes() * 7) // 8, 120 << 20))


def _is_small_vmem_chip():
    # 64 MiB-VMEM chips (v7x-like) have 2 TensorCores -> keep >= 2 "parallel" grid steps.
    return _vmem_capacity_bytes() <= (96 << 20)


# --------------------------------------------------------------------------------------
# Fused multi-MixerBlock kernel (padded feature / patch axes).
# --------------------------------------------------------------------------------------

_WKEYS = ("ln1w", "ln1b", "w1t", "b1", "w2t", "b2",
          "ln2w", "ln2b", "w3t", "b3", "w4t", "b4")


def _layernorm(x, w, b, *, f_true, fp):
    """LayerNorm over the (possibly padded) last axis; statistics use the true F lanes."""
    if f_true == fp:
        mean = jnp.mean(x, axis=-1, keepdims=True)
        d = x - mean
        var = jnp.mean(d * d, axis=-1, keepdims=True)
    else:
        mask = lax.broadcasted_iota(jnp.int32, (1, 1, fp), 2) < f_true
        inv = 1.0 / float(f_true)
        xm = jnp.where(mask, x, 0.0)
        mean = jnp.sum(xm, axis=-1, keepdims=True) * inv
        d = jnp.where(mask, x - mean, 0.0)
        var = jnp.sum(d * d, axis=-1, keepdims=True) * inv
    return d * lax.rsqrt(var + EPS) * w + b


def _mixer_block_body(x, w, *, bt, pp, fp, f_true):
    """One MixerBlock on a VMEM-resident [bt, pp, fp] f32 tile."""
    bf16 = jnp.bfloat16

    # ------------------------------ Token mixer ------------------------------
    xn = _layernorm(x, w["ln1w"][...], w["ln1b"][...], f_true=f_true, fp=fp)
    # Minor-dims transpose + leading-dim collapse -> rows are (b, f) pairs so the MXU
    # sees ONE matmul with M = bt*fp instead of bt small per-batch matmuls.
    xt = jnp.transpose(xn, (0, 2, 1)).reshape(bt * fp, pp).astype(bf16)     # [(b,f), p]
    h = jnp.dot(xt, w["w1t"][...], preferred_element_type=jnp.float32) + w["b1"][...]
    t = jnp.dot(_gelu(h).astype(bf16), w["w2t"][...],
                preferred_element_type=jnp.float32) + w["b2"][...]          # [(b,f), p]
    x = jnp.transpose(t.reshape(bt, fp, pp), (0, 2, 1)) + x                 # residual

    # ----------------------------- Channel mixer -----------------------------
    xn = _layernorm(x, w["ln2w"][...], w["ln2b"][...], f_true=f_true, fp=fp)
    x2 = xn.astype(bf16).reshape(bt * pp, fp)                               # [(b,p), f]
    h = jnp.dot(x2, w["w3t"][...], preferred_element_type=jnp.float32) + w["b3"][...]
    o = jnp.dot(_gelu(h).astype(bf16), w["w4t"][...],
                preferred_element_type=jnp.float32) + w["b4"][...]
    return o.reshape(bt, pp, fp) + x                                        # residual


def _make_group_kernel(n_blocks, *, bt, pp, fp, f_true):
    def kernel(x_ref, *refs):
        o_ref = refs[-1]
        wrefs = refs[:-1]
        x = x_ref[...]                                                       # f32 tile
        for g in range(n_blocks):                # blocks fused: no HBM round trip here
            w = {k: wrefs[12 * g + j] for j, k in enumerate(_WKEYS)}
            x = _mixer_block_body(x, w, bt=bt, pp=pp, fp=fp, f_true=f_true)
        o_ref[...] = x
    return kernel


def _prep_block_params(blk, pp, fp):
    """Pad / transpose / bf16-cast block weights once, outside the kernel."""
    pad1 = lambda v, n: jnp.pad(v, (0, n - v.shape[0]))
    pad2 = lambda m, r, c: jnp.pad(m, ((0, r - m.shape[0]), (0, c - m.shape[1])))
    return dict(
        ln1w=pad1(blk["ln1w"], fp).reshape(1, fp),
        ln1b=pad1(blk["ln1b"], fp).reshape(1, fp),
        w1t=pad2(blk["w1"].T, pp, fp).astype(jnp.bfloat16),    # Linear(P->F).weight.T -> [Pp, Fp]
        b1=pad1(blk["b1"], fp).reshape(1, fp),
        w2t=pad2(blk["w2"].T, fp, pp).astype(jnp.bfloat16),    # Linear(F->P).weight.T -> [Fp, Pp]
        b2=pad1(blk["b2"], pp).reshape(1, pp),
        ln2w=pad1(blk["ln2w"], fp).reshape(1, fp),
        ln2b=pad1(blk["ln2b"], fp).reshape(1, fp),
        w3t=pad2(blk["w3"].T, fp, fp).astype(jnp.bfloat16),    # [Fp, Fp]
        b3=pad1(blk["b3"], fp).reshape(1, fp),
        w4t=pad2(blk["w4"].T, fp, fp).astype(jnp.bfloat16),    # [Fp, Fp]
        b4=pad1(blk["b4"], fp).reshape(1, fp),
    )


def _plan_mixer(batch, pp, fp, n_blocks):
    """Choose (block grouping, batch tile bt) from the chip's VMEM capacity."""
    usable = (_vmem_capacity_bytes() * 5) // 8

    blk_w = 2 * (2 * fp * fp + 2 * pp * fp) + 4 * (6 * fp + pp)   # bf16 matmuls + f32 rows
    # Fuse as many blocks per pallas_call as fit in ~half the budget (inputs are
    # double-buffered by the pipeline even with constant index_maps -> factor 2).
    max_group = max(1, min(max(n_blocks, 1), (usable // 2) // max(1, 2 * blk_w)))
    groups = [list(range(i, min(i + max_group, n_blocks)))
              for i in range(0, n_blocks, max_group)]
    wg_bytes = 2 * max_group * blk_w

    # Per-batch-element activation footprint: in/out double buffers plus the largest
    # compiler-managed intermediates (token-mixer hidden is ~ (fp/pp) x the tile).
    per_b = pp * fp * 4
    scratch_factor = 6.0 + 2.0 * (float(fp) / float(pp))
    bt = max(1, int((usable - wg_bytes) // max(1, int(per_b * scratch_factor))))
    bt = min(bt, batch)
    if _is_small_vmem_chip():
        while bt > 1 and batch // bt < 2:       # keep both v7x TensorCores busy
            bt -= 1
    while batch % bt:                           # full blocks only (no OOB garbage)
        bt -= 1
    return groups, bt


def _mixer_group(xp, group_params, *, f_true, bt):
    batch, pp, fp = xp.shape
    flat_w = [blk[k] for blk in group_params for k in _WKEYS]
    kernel = _make_group_kernel(len(group_params), bt=bt, pp=pp, fp=fp, f_true=f_true)
    # Weights use constant index_maps so they stay VMEM-resident across the batch grid.
    # TODO(synk): on v7x, pipeline_mode=pl.Buffered(1) on the weight specs would halve
    # their VMEM footprint; left at the default for maximum lowering compatibility.
    in_specs = ([pl.BlockSpec((bt, pp, fp), lambda i: (i, 0, 0))]
                + [pl.BlockSpec(w.shape, lambda i: (0, 0)) for w in flat_w])
    return pl.pallas_call(
        kernel,
        out_shape=jax.ShapeDtypeStruct((batch, pp, fp), jnp.float32),
        grid_spec=pltpu.PrefetchScalarGridSpec(
            num_scalar_prefetch=0,
            grid=(batch // bt,),
            in_specs=in_specs,
            out_specs=pl.BlockSpec((bt, pp, fp), lambda i: (i, 0, 0)),
        ),
        compiler_params=pltpu.CompilerParams(
            dimension_semantics=("parallel",),
            vmem_limit_bytes=_vmem_limit_bytes(),
        ),
    )(xp, *flat_w)


# --------------------------------------------------------------------------------------
# Patch embedding (row-tiled bf16 matmul) and pooled classifier head.
# --------------------------------------------------------------------------------------

def _linear_kernel(x_ref, w_ref, b_ref, o_ref):
    o_ref[...] = (jnp.dot(x_ref[...], w_ref[...],
                          preferred_element_type=jnp.float32) + b_ref[...])


def pallas_linear(x2d, w, b, *, tm=512):
    m, k = x2d.shape
    n = w.shape[1]
    if m <= tm:
        tm = m
        grid = (1,)
    else:
        mp = _round_up(m, tm)
        if mp != m:                                 # keep every block full (zero rows)
            x2d = jnp.pad(x2d, ((0, mp - m), (0, 0)))
        grid = (mp // tm,)
    out = pl.pallas_call(
        _linear_kernel,
        out_shape=jax.ShapeDtypeStruct((grid[0] * tm, n), jnp.float32),
        grid_spec=pltpu.PrefetchScalarGridSpec(
            num_scalar_prefetch=0,
            grid=grid,
            in_specs=[pl.BlockSpec((tm, k), lambda i: (i, 0)),
                      pl.BlockSpec((k, n), lambda i: (0, 0)),
                      pl.BlockSpec((1, n), lambda i: (0, 0))],
            out_specs=pl.BlockSpec((tm, n), lambda i: (i, 0)),
        ),
        compiler_params=pltpu.CompilerParams(
            dimension_semantics=("parallel",),
            vmem_limit_bytes=_vmem_limit_bytes(),
        ),
    )(x2d, w, b)
    return out[:m] if out.shape[0] != m else out


def _make_head_kernel(p_true, pp):
    inv_p = 1.0 / float(p_true)

    def kernel(x_ref, w_ref, b_ref, o_ref):
        x = x_ref[...]                                             # [bh, pp, fp] f32
        if p_true != pp:                                           # mask pad patch rows
            rmask = lax.broadcasted_iota(jnp.int32, (1, pp, 1), 1) < p_true
            x = jnp.where(rmask, x, 0.0)
        pooled = jnp.sum(x, axis=1) * inv_p                        # [bh, fp]
        # Pad feature lanes of `pooled` may hold (finite) garbage, but the classifier
        # weight rows for f >= F are zero, so they contribute exactly 0.
        o_ref[...] = (jnp.dot(pooled, w_ref[...],
                              preferred_element_type=jnp.float32) + b_ref[...])
    return kernel


def pallas_pool_classify(zp, cls_wt_pad, cls_b, *, p_true):
    batch, pp, fp = zp.shape
    ncls = cls_wt_pad.shape[1]
    per_b = pp * fp * 4
    budget = _vmem_capacity_bytes() // 4
    bh = batch
    if batch * per_b * 3 > budget and batch % 8 == 0:
        bh = 8
        while batch % (bh * 2) == 0 and (bh * 2) * per_b * 3 <= budget:
            bh *= 2
    return pl.pallas_call(
        _make_head_kernel(p_true, pp),
        out_shape=jax.ShapeDtypeStruct((batch, ncls), jnp.float32),
        grid_spec=pltpu.PrefetchScalarGridSpec(
            num_scalar_prefetch=0,
            grid=(batch // bh,),
            in_specs=[pl.BlockSpec((bh, pp, fp), lambda i: (i, 0, 0)),
                      pl.BlockSpec((fp, ncls), lambda i: (0, 0)),
                      pl.BlockSpec((1, ncls), lambda i: (0, 0))],
            out_specs=pl.BlockSpec((bh, ncls), lambda i: (i, 0)),
        ),
        compiler_params=pltpu.CompilerParams(
            dimension_semantics=("parallel",),
            vmem_limit_bytes=_vmem_limit_bytes(),
        ),
    )(zp, cls_wt_pad, cls_b)


# --------------------------------------------------------------------------------------
# Full MLPMixer forward (wrapper) and pure-JAX reference.
# --------------------------------------------------------------------------------------

def mlpmixer_forward(x, params, *, patch_size):
    batch, in_ch, height, width = x.shape
    gy, gx = height // patch_size, width // patch_size
    num_patches = gy * gx
    num_features = params["emb_b"].shape[0]

    # ---- patch embedding: Conv2d(C, F, k=p, s=p) == patchify + linear (Pallas, bf16) ----
    patches = x.reshape(batch, in_ch, gy, patch_size, gx, patch_size)
    patches = patches.transpose(0, 2, 4, 1, 3, 5).reshape(
        batch * num_patches, in_ch * patch_size * patch_size)
    emb_wt = params["emb_w"].reshape(num_features, -1).T.astype(jnp.bfloat16)   # [C*p*p, F]
    emb_b = params["emb_b"].reshape(1, num_features)
    emb = pallas_linear(patches.astype(jnp.bfloat16), emb_wt, emb_b)            # [B*P, F]

    # reproduce PyTorch's `conv_out.view(-1, P, F)` raw reinterpretation of [B, F, Gy, Gx]
    z = emb.reshape(batch, num_patches, num_features).transpose(0, 2, 1)         # [B, F, P]
    z = z.reshape(batch, num_patches, num_features)

    # ---- mixer blocks: fused multi-block Pallas kernels on a padded layout ----
    fp = _round_up(num_features, 128)      # lane-dense feature axis
    pp = _round_up(num_patches, 16)        # bf16 sublane packing on the patch axis
    zp = jnp.pad(z, ((0, 0), (0, pp - num_patches), (0, fp - num_features)))

    n_blocks = len(params["blocks"])
    groups, bt = _plan_mixer(batch, pp, fp, n_blocks)
    prepped = [_prep_block_params(blk, pp, fp) for blk in params["blocks"]]
    for g in groups:                       # activations stay in VMEM within each group
        zp = _mixer_group(zp, [prepped[i] for i in g], f_true=num_features, bt=bt)

    # ---- head: masked mean over patches + classifier directly on the padded layout ----
    cls_wt = jnp.pad(params["cls_w"].T, ((0, fp - num_features), (0, 0)))         # [Fp, n_cls]
    cls_b = params["cls_b"].reshape(1, -1)
    return pallas_pool_classify(zp, cls_wt, cls_b, p_true=num_patches)


def _mixer_block_ref(x, p):
    def ln(z, w, b):
        m = z.mean(-1, keepdims=True)
        v = ((z - m) ** 2).mean(-1, keepdims=True)
        return (z - m) / jnp.sqrt(v + EPS) * w + b

    r = x
    xn = ln(x, p["ln1w"], p["ln1b"])
    xt = jnp.swapaxes(xn, 1, 2)
    h = _gelu(xt @ p["w1"].T + p["b1"])
    ot = h @ p["w2"].T + p["b2"]
    x = jnp.swapaxes(ot, 1, 2) + r

    r = x
    xn = ln(x, p["ln2w"], p["ln2b"])
    h = _gelu(xn @ p["w3"].T + p["b3"])
    o = h @ p["w4"].T + p["b4"]
    return o + r


def mlpmixer_ref(x, params, *, patch_size):
    """Pure-JAX reference matching the PyTorch MLPMixer forward."""
    batch, in_ch, height, width = x.shape
    gy, gx = height // patch_size, width // patch_size
    num_patches = gy * gx
    num_features = params["emb_b"].shape[0]

    patches = x.reshape(batch, in_ch, gy, patch_size, gx, patch_size)
    patches = patches.transpose(0, 2, 4, 1, 3, 5).reshape(batch, num_patches, -1)
    wf = params["emb_w"].reshape(num_features, -1)
    conv = jnp.einsum("bpk,fk->bfp", patches, wf) + params["emb_b"][None, :, None]
    z = conv.reshape(batch, num_patches, num_features)   # torch .view(-1, P, F)

    for blk in params["blocks"]:
        z = _mixer_block_ref(z, blk)

    pooled = z.mean(axis=1)
    return pooled @ params["cls_w"].T + params["cls_b"][None, :]


def init_params(key, *, image_size, patch_size, input_channels, num_features,
                num_mixer_blocks, num_classes):
    num_patches = (image_size // patch_size) ** 2
    keys = iter(jax.random.split(key, 4 + 12 * num_mixer_blocks))
    s = 0.02
    nrm = lambda shape: s * jax.random.normal(next(keys), shape, jnp.float32)
    params = {
        "emb_w": nrm((num_features, input_channels, patch_size, patch_size)),
        "emb_b": nrm((num_features,)),
        "cls_w": nrm((num_classes, num_features)),
        "cls_b": nrm((num_classes,)),
        "blocks": [],
    }
    for _ in range(num_mixer_blocks):
        params["blocks"].append({
            "ln1w": 1.0 + nrm((num_features,)),
            "ln1b": nrm((num_features,)),
            "w1": nrm((num_features, num_patches)),   # TokenMixer Linear(P -> F).weight
            "b1": nrm((num_features,)),
            "w2": nrm((num_patches, num_features)),   # TokenMixer Linear(F -> P).weight
            "b2": nrm((num_patches,)),
            "ln2w": 1.0 + nrm((num_features,)),
            "ln2b": nrm((num_features,)),
            "w3": nrm((num_features, num_features)),  # ChannelMixer Linear(F -> F).weight
            "b3": nrm((num_features,)),
            "w4": nrm((num_features, num_features)),  # ChannelMixer Linear(F -> F).weight
            "b4": nrm((num_features,)),
        })
    return params


if __name__ == "__main__":
    IMAGE_SIZE, PATCH_SIZE, IN_CH = 16, 4, 4
    NUM_FEATURES, NUM_BLOCKS, NUM_CLASSES = 32, 2, 10
    BATCH = 2

    key = jax.random.PRNGKey(0)
    kx, kp = jax.random.split(key)
    x = jax.random.normal(kx, (BATCH, IN_CH, IMAGE_SIZE, IMAGE_SIZE), jnp.float32)
    params = init_params(kp, image_size=IMAGE_SIZE, patch_size=PATCH_SIZE,
                         input_channels=IN_CH, num_features=NUM_FEATURES,
                         num_mixer_blocks=NUM_BLOCKS, num_classes=NUM_CLASSES)

    fwd = jax.jit(functools.partial(mlpmixer_forward, patch_size=PATCH_SIZE))
    logits = jax.block_until_ready(fwd(x, params))

    ref = mlpmixer_ref(x, params, patch_size=PATCH_SIZE)
    assert logits.shape == (BATCH, NUM_CLASSES)
    assert bool(jnp.all(jnp.isfinite(logits))), "non-finite logits"
    max_err = float(jnp.max(jnp.abs(logits - ref)))
    assert jnp.allclose(logits, ref, atol=5e-3, rtol=5e-3), \
        f"mismatch vs reference (max abs err {max_err})"
    print("KERNEL_OK")
</pallas_src>

<mosaic_0001>
module attributes {stable_mosaic.version = 11 : i64} {
  func.func @_linear_kernel(%arg0: i32, %arg1: memref<32x64xbf16, #tpu.memory_space<vmem>>, %arg2: memref<64x32xbf16, #tpu.memory_space<vmem>>, %arg3: memref<1x32xf32, #tpu.memory_space<vmem>>, %arg4: memref<32x32xf32, #tpu.memory_space<vmem>>) attributes {dimension_semantics = [#tpu.dimension_semantics<parallel>], iteration_bounds = array<i64: 1>, scalar_prefetch = 0 : i64, scratch_operands = 0 : i64, tpu.core_type = #tpu.core_type<tc>, window_params = [{transform_indices = @transform_0, window_bounds = array<i64: 32, 64>}, {pipeline_mode = #tpu.pipeline_mode<synchronous>, transform_indices = @transform_1, window_bounds = array<i64: 64, 32>}, {pipeline_mode = #tpu.pipeline_mode<synchronous>, transform_indices = @transform_2, window_bounds = array<i64: 1, 32>}, {transform_indices = @transform_3, window_bounds = array<i64: 32, 32>}]} {
    %c0 = arith.constant 0 : index
    %c0_0 = arith.constant 0 : index
    %0 = vector.load %arg1[%c0, %c0_0] : memref<32x64xbf16, #tpu.memory_space<vmem>>, vector<32x64xbf16>
    %c0_1 = arith.constant 0 : index
    %c0_2 = arith.constant 0 : index
    %1 = vector.load %arg2[%c0_1, %c0_2] : memref<64x32xbf16, #tpu.memory_space<vmem>>, vector<64x32xbf16>
    %cst = arith.constant dense<0.000000e+00> : vector<32x32xf32>
    %2 = tpu.matmul %0, %1, %cst {dimension_numbers = #tpu.dot_dimension_numbers<[1], [0], [0], [1], [0, 0, 1, 1], [], []>} : vector<32x64xbf16>, vector<64x32xbf16>, vector<32x32xf32> -> vector<32x32xf32>
    %c0_3 = arith.constant 0 : index
    %c0_4 = arith.constant 0 : index
    %3 = vector.load %arg3[%c0_3, %c0_4] : memref<1x32xf32, #tpu.memory_space<vmem>>, vector<1x32xf32>
    %4 = vector.broadcast %3 : vector<1x32xf32> to vector<32x32xf32>
    %5 = arith.addf %2, %4 : vector<32x32xf32>
    %c0_5 = arith.constant 0 : index
    %c0_6 = arith.constant 0 : index
    %6 = vector.load %arg4[%c0_5, %c0_6] : memref<32x32xf32, #tpu.memory_space<vmem>>, vector<32x32xf32>
    tpu.vector_store %arg4[%c0_5, %c0_6], %5 {strides = array<i32>} : memref<32x32xf32, #tpu.memory_space<vmem>>, vector<32x32xf32>,
    return
  }
  func.func @transform_0(%arg0: i32) -> (i32, i32) {
    %c0_i32 = arith.constant 0 : i32
    %c0_i32_0 = arith.constant 0 : i32
    return %arg0, %c0_i32 : i32, i32
  }
  func.func @transform_1(%arg0: i32) -> (i32, i32) {
    %c0_i32 = arith.constant 0 : i32
    %c0_i32_0 = arith.constant 0 : i32
    %c0_i32_1 = arith.constant 0 : i32
    return %c0_i32, %c0_i32_0 : i32, i32
  }
  func.func @transform_2(%arg0: i32) -> (i32, i32) {
    %c0_i32 = arith.constant 0 : i32
    %c0_i32_0 = arith.constant 0 : i32
    %c0_i32_1 = arith.constant 0 : i32
    return %c0_i32, %c0_i32_0 : i32, i32
  }
  func.func @transform_3(%arg0: i32) -> (i32, i32) {
    %c0_i32 = arith.constant 0 : i32
    %c0_i32_0 = arith.constant 0 : i32
    return %arg0, %c0_i32 : i32, i32
  }
}

module attributes {stable_mosaic.version = 11 : i64} {
  func.func @kernel(%arg0: i32, %arg1: memref<1x16x128xf32, #tpu.memory_space<vmem>>, %arg2: memref<1x128xf32, #tpu.memory_space<vmem>>, %arg3: memref<1x128xf32, #tpu.memory_space<vmem>>, %arg4: memref<16x128xbf16, #tpu.memory_space<vmem>>, %arg5: memref<1x128xf32, #tpu.memory_space<vmem>>, %arg6: memref<128x16xbf16, #tpu.memory_space<vmem>>, %arg7: memref<1x16xf32, #tpu.memory_space<vmem>>, %arg8: memref<1x128xf32, #tpu.memory_space<vmem>>, %arg9: memref<1x128xf32, #tpu.memory_space<vmem>>, %arg10: memref<128x128xbf16, #tpu.memory_space<vmem>>, %arg11: memref<1x128xf32, #tpu.memory_space<vmem>>, %arg12: memref<128x128xbf16, #tpu.memory_space<vmem>>, %arg13: memref<1x128xf32, #tpu.memory_space<vmem>>, %arg14: memref<1x128xf32, #tpu.memory_space<vmem>>, %arg15: memref<1x128xf32, #tpu.memory_space<vmem>>, %arg16: memref<16x128xbf16, #tpu.memory_space<vmem>>, %arg17: memref<1x128xf32, #tpu.memory_space<vmem>>, %arg18: memref<128x16xbf16, #tpu.memory_space<vmem>>, %arg19: memref<1x16xf32, #tpu.memory_space<vmem>>, %arg20: memref<1x128xf32, #tpu.memory_space<vmem>>, %arg21: memref<1x128xf32, #tpu.memory_space<vmem>>, %arg22: memref<128x128xbf16, #tpu.memory_space<vmem>>, %arg23: memref<1x128xf32, #tpu.memory_space<vmem>>, %arg24: memref<128x128xbf16, #tpu.memory_space<vmem>>, %arg25: memref<1x128xf32, #tpu.memory_space<vmem>>, %arg26: memref<1x16x128xf32, #tpu.memory_space<vmem>>) attributes {dimension_semantics = [#tpu.dimension_semantics<parallel>], iteration_bounds = array<i64: 2>, scalar_prefetch = 0 : i64, scratch_operands = 0 : i64, tpu.core_type = #tpu.core_type<tc>, window_params = [{transform_indices = @transform_0, window_bounds = array<i64: 1, 16, 128>}, {pipeline_mode = #tpu.pipeline_mode<synchronous>, transform_indices = @transform_1, window_bounds = array<i64: 1, 128>}, {pipeline_mode = #tpu.pipeline_mode<synchronous>, transform_indices = @transform_2, window_bounds = array<i64: 1, 128>}, {pipeline_mode = #tpu.pipeline_mode<synchronous>, transform_indices = @transform_3, window_bounds = array<i64: 16, 128>}, {pipeline_mode = #tpu.pipeline_mode<synchronous>, transform_indices = @transform_4, window_bounds = array<i64: 1, 128>}, {pipeline_mode = #tpu.pipeline_mode<synchronous>, transform_indices = @transform_5, window_bounds = array<i64: 128, 16>}, {pipeline_mode = #tpu.pipeline_mode<synchronous>, transform_indices = @transform_6, window_bounds = array<i64: 1, 16>}, {pipeline_mode = #tpu.pipeline_mode<synchronous>, transform_indices = @transform_7, window_bounds = array<i64: 1, 128>}, {pipeline_mode = #tpu.pipeline_mode<synchronous>, transform_indices = @transform_8, window_bounds = array<i64: 1, 128>}, {pipeline_mode = #tpu.pipeline_mode<synchronous>, transform_indices = @transform_9, window_bounds = array<i64: 128, 128>}, {pipeline_mode = #tpu.pipeline_mode<synchronous>, transform_indices = @transform_10, window_bounds = array<i64: 1, 128>}, {pipeline_mode = #tpu.pipeline_mode<synchronous>, transform_indices = @transform_11, window_bounds = array<i64: 128, 128>}, {pipeline_mode = #tpu.pipeline_mode<synchronous>, transform_indices = @transform_12, window_bounds = array<i64: 1, 128>}, {pipeline_mode = #tpu.pipeline_mode<synchronous>, transform_indices = @transform_13, window_bounds = array<i64: 1, 128>}, {pipeline_mode = #tpu.pipeline_mode<synchronous>, transform_indices = @transform_14, window_bounds = array<i64: 1, 128>}, {pipeline_mode = #tpu.pipeline_mode<synchronous>, transform_indices = @transform_15, window_bounds = array<i64: 16, 128>}, {pipeline_mode = #tpu.pipeline_mode<synchronous>, transform_indices = @transform_16, window_bounds = array<i64: 1, 128>}, {pipeline_mode = #tpu.pipeline_mode<synchronous>, transform_indices = @transform_17, window_bounds = array<i64: 128, 16>}, {pipeline_mode = #tpu.pipeline_mode<synchronous>, transform_indices = @transform_18, window_bounds = array<i64: 1, 16>}, {pipeline_mode = #tpu.pipeline_mode<synchronous>, transform_indices = @transform_19, window_bounds = array<i64: 1, 128>}, {pipeline_mode = #tpu.pipeline_mode<synchronous>, transform_indices = @transform_20, window_bounds = array<i64: 1, 128>}, {pipeline_mode = #tpu.pipeline_mode<synchronous>, transform_indices = @transform_21, window_bounds = array<i64: 128, 128>}, {pipeline_mode = #tpu.pipeline_mode<synchronous>, transform_indices = @transform_22, window_bounds = array<i64: 1, 128>}, {pipeline_mode = #tpu.pipeline_mode<synchronous>, transform_indices = @transform_23, window_bounds = array<i64: 128, 128>}, {pipeline_mode = #tpu.pipeline_mode<synchronous>, transform_indices = @transform_24, window_bounds = array<i64: 1, 128>}, {transform_indices = @transform_25, window_bounds = array<i64: 1, 16, 128>}]} {
    %c0 = arith.constant 0 : index
    %c0_0 = arith.constant 0 : index
    %c0_1 = arith.constant 0 : index
    %0 = vector.load %arg1[%c0, %c0_0, %c0_1] : memref<1x16x128xf32, #tpu.memory_space<vmem>>, vector<1x16x128xf32>
    %c0_2 = arith.constant 0 : index
    %c0_3 = arith.constant 0 : index
    %1 = vector.load %arg2[%c0_2, %c0_3] : memref<1x128xf32, #tpu.memory_space<vmem>>, vector<1x128xf32>
    %c0_4 = arith.constant 0 : index
    %c0_5 = arith.constant 0 : index
    %2 = vector.load %arg3[%c0_4, %c0_5] : memref<1x128xf32, #tpu.memory_space<vmem>>, vector<1x128xf32>
    %3 = tpu.iota {dimensions = array<i32: 2>} : vector<1x1x128xi32>
    %c32_i32 = arith.constant 32 : i32
    %4 = vector.broadcast %c32_i32 : i32 to vector<1x1x128xi32>
    %5 = arith.cmpi slt, %3, %4 : vector<1x1x128xi32>
    %cst = arith.constant 0.000000e+00 : f32
    %6 = vector.shape_cast %5 : vector<1x1x128xi1> to vector<1x1x128xi1>
    %7 = vector.broadcast %6 : vector<1x1x128xi1> to vector<1x16x128xi1>
    %8 = vector.broadcast %cst : f32 to vector<1x16x128xf32>
    %9 = arith.select %7, %0, %8 : vector<1x16x128xi1>, vector<1x16x128xf32>
    %cst_6 = arith.constant dense<0.000000e+00> : vector<1x16xf32>
    %10 = vector.multi_reduction <add>, %9, %cst_6 [2] : vector<1x16x128xf32> to vector<1x16xf32>
    %11 = vector.shape_cast %10 : vector<1x16xf32> to vector<1x16x1xf32>
    %cst_7 = arith.constant 3.125000e-02 : f32
    %12 = vector.broadcast %cst_7 : f32 to vector<1x16x1xf32>
    %13 = arith.mulf %11, %12 : vector<1x16x1xf32>
    %14 = vector.broadcast %13 : vector<1x16x1xf32> to vector<1x16x128xf32>
    %15 = arith.subf %0, %14 : vector<1x16x128xf32>
    %cst_8 = arith.constant 0.000000e+00 : f32
    %16 = vector.shape_cast %5 : vector<1x1x128xi1> to vector<1x1x128xi1>
    %17 = vector.broadcast %16 : vector<1x1x128xi1> to vector<1x16x128xi1>
    %18 = vector.broadcast %cst_8 : f32 to vector<1x16x128xf32>
    %19 = arith.select %17, %15, %18 : vector<1x16x128xi1>, vector<1x16x128xf32>
    %20 = arith.mulf %19, %19 : vector<1x16x128xf32>
    %cst_9 = arith.constant dense<0.000000e+00> : vector<1x16xf32>
    %21 = vector.multi_reduction <add>, %20, %cst_9 [2] : vector<1x16x128xf32> to vector<1x16xf32>
    %22 = vector.shape_cast %21 : vector<1x16xf32> to vector<1x16x1xf32>
    %cst_10 = arith.constant 3.125000e-02 : f32
    %23 = vector.broadcast %cst_10 : f32 to vector<1x16x1xf32>
    %24 = arith.mulf %22, %23 : vector<1x16x1xf32>
    %cst_11 = arith.constant 9.99999974E-6 : f32
    %25 = vector.broadcast %cst_11 : f32 to vector<1x16x1xf32>
    %26 = arith.addf %24, %25 : vector<1x16x1xf32>
    %27 = math.rsqrt %26 : vector<1x16x1xf32>
    %28 = vector.broadcast %27 : vector<1x16x1xf32> to vector<1x16x128xf32>
    %29 = arith.mulf %19, %28 : vector<1x16x128xf32>
    %30 = vector.shape_cast %1 : vector<1x128xf32> to vector<1x1x128xf32>
    %31 = vector.broadcast %30 : vector<1x1x128xf32> to vector<1x16x128xf32>
    %32 = arith.mulf %29, %31 : vector<1x16x128xf32>
    %33 = vector.shape_cast %2 : vector<1x128xf32> to vector<1x1x128xf32>
    %34 = vector.broadcast %33 : vector<1x1x128xf32> to vector<1x16x128xf32>
    %35 = arith.addf %32, %34 : vector<1x16x128xf32>
    %36 = tpu.transpose %35, [0, 2, 1] : vector<1x16x128xf32> -> vector<1x128x16xf32>
    %37 = vector.shape_cast %36 : vector<1x128x16xf32> to vector<128x16xf32>
    %38 = arith.truncf %37 : vector<128x16xf32> to vector<128x16xbf16>
    %c0_12 = arith.constant 0 : index
    %c0_13 = arith.constant 0 : index
    %39 = vector.load %arg4[%c0_12, %c0_13] : memref<16x128xbf16, #tpu.memory_space<vmem>>, vector<16x128xbf16>
    %cst_14 = arith.constant dense<0.000000e+00> : vector<128x128xf32>
    %40 = tpu.matmul %38, %39, %cst_14 {dimension_numbers = #tpu.dot_dimension_numbers<[1], [0], [0], [1], [0, 0, 1, 1], [], []>} : vector<128x16xbf16>, vector<16x128xbf16>, vector<128x128xf32> -> vector<128x128xf32>
    %c0_15 = arith.constant 0 : index
    %c0_16 = arith.constant 0 : index
    %41 = vector.load %arg5[%c0_15, %c0_16] : memref<1x128xf32, #tpu.memory_space<vmem>>, vector<1x128xf32>
    %42 = vector.broadcast %41 : vector<1x128xf32> to vector<128x128xf32>
    %43 = arith.addf %40, %42 : vector<128x128xf32>
    %cst_17 = arith.constant 5.000000e-01 : f32
    %44 = vector.broadcast %cst_17 : f32 to vector<128x128xf32>
    %45 = arith.mulf %44, %43 : vector<128x128xf32>
    %cst_18 = arith.constant 0.707106769 : f32
    %46 = vector.broadcast %cst_18 : f32 to vector<128x128xf32>
    %47 = arith.mulf %43, %46 : vector<128x128xf32>
    %48 = math.erf %47 : vector<128x128xf32>
    %cst_19 = arith.constant 1.000000e+00 : f32
    %49 = vector.broadcast %cst_19 : f32 to vector<128x128xf32>
    %50 = arith.addf %49, %48 : vector<128x128xf32>
    %51 = arith.mulf %45, %50 : vector<128x128xf32>
    %52 = arith.truncf %51 : vector<128x128xf32> to vector<128x128xbf16>
    %c0_20 = arith.constant 0 : index
    %c0_21 = arith.constant 0 : index
    %53 = vector.load %arg6[%c0_20, %c0_21] : memref<128x16xbf16, #tpu.memory_space<vmem>>, vector<128x16xbf16>
    %cst_22 = arith.constant dense<0.000000e+00> : vector<128x16xf32>
    %54 = tpu.matmul %52, %53, %cst_22 {dimension_numbers = #tpu.dot_dimension_numbers<[1], [0], [0], [1], [0, 0, 1, 1], [], []>} : vector<128x128xbf16>, vector<128x16xbf16>, vector<128x16xf32> -> vector<128x16xf32>
    %c0_23 = arith.constant 0 : index
    %c0_24 = arith.constant 0 : index
    %55 = vector.load %arg7[%c0_23, %c0_24] : memref<1x16xf32, #tpu.memory_space<vmem>>, vector<1x16xf32>
    %56 = vector.broadcast %55 : vector<1x16xf32> to vector<128x16xf32>
    %57 = arith.addf %54, %56 : vector<128x16xf32>
    %58 = vector.shape_cast %57 : vector<128x16xf32> to vector<1x128x16xf32>
    %59 = tpu.transpose %58, [0, 2, 1] : vector<1x128x16xf32> -> vector<1x16x128xf32>
    %60 = arith.addf %59, %0 : vector<1x16x128xf32>
    %c0_25 = arith.constant 0 : index
    %c0_26 = arith.constant 0 : index
    %61 = vector.load %arg8[%c0_25, %c0_26] : memref<1x128xf32, #tpu.memory_space<vmem>>, vector<1x128xf32>
    %c0_27 = arith.constant 0 : index
    %c0_28 = arith.constant 0 : index
    %62 = vector.load %arg9[%c0_27, %c0_28] : memref<1x128xf32, #tpu.memory_space<vmem>>, vector<1x128xf32>
    %63 = tpu.iota {dimensions = array<i32: 2>} : vector<1x1x128xi32>
    %c32_i32_29 = arith.constant 32 : i32
    %64 = vector.broadcast %c32_i32_29 : i32 to vector<1x1x128xi32>
    %65 = arith.cmpi slt, %63, %64 : vector<1x1x128xi32>
    %cst_30 = arith.constant 0.000000e+00 : f32
    %66 = vector.shape_cast %65 : vector<1x1x128xi1> to vector<1x1x128xi1>
    %67 = vector.broadcast %66 : vector<1x1x128xi1> to vector<1x16x128xi1>
    %68 = vector.broadcast %cst_30 : f32 to vector<1x16x128xf32>
    %69 = arith.select %67, %60, %68 : vector<1x16x128xi1>, vector<1x16x128xf32>
    %cst_31 = arith.constant dense<0.000000e+00> : vector<1x16xf32>
    %70 = vector.multi_reduction <add>, %69, %cst_31 [2] : vector<1x16x128xf32> to vector<1x16xf32>
    %71 = vector.shape_cast %70 : vector<1x16xf32> to vector<1x16x1xf32>
    %cst_32 = arith.constant 3.125000e-02 : f32
    %72 = vector.broadcast %cst_32 : f32 to vector<1x16x1xf32>
    %73 = arith.mulf %71, %72 : vector<1x16x1xf32>
    %74 = vector.broadcast %73 : vector<1x16x1xf32> to vector<1x16x128xf32>
    %75 = arith.subf %60, %74 : vector<1x16x128xf32>
    %cst_33 = arith.constant 0.000000e+00 : f32
    %76 = vector.shape_cast %65 : vector<1x1x128xi1> to vector<1x1x128xi1>
    %77 = vector.broadcast %76 : vector<1x1x128xi1> to vector<1x16x128xi1>
    %78 = vector.broadcast %cst_33 : f32 to vector<1x16x128xf32>
    %79 = arith.select %77, %75, %78 : vector<1x16x128xi1>, vector<1x16x128xf32>
    %80 = arith.mulf %79, %79 : vector<1x16x128xf32>
    %cst_34 = arith.constant dense<0.000000e+00> : vector<1x16xf32>
    %81 = vector.multi_reduction <add>, %80, %cst_34 [2] : vector<1x16x128xf32> to vector<1x16xf32>
    %82 = vector.shape_cast %81 : vector<1x16xf32> to vector<1x16x1xf32>
    %cst_35 = arith.constant 3.125000e-02 : f32
    %83 = vector.broadcast %cst_35 : f32 to vector<1x16x1xf32>
    %84 = arith.mulf %82, %83 : vector<1x16x1xf32>
    %cst_36 = arith.constant 9.99999974E-6 : f32
    %85 = vector.broadcast %cst_36 : f32 to vector<1x16x1xf32>
    %86 = arith.addf %84, %85 : vector<1x16x1xf32>
    %87 = math.rsqrt %86 : vector<1x16x1xf32>
    %88 = vector.broadcast %87 : vector<1x16x1xf32> to vector<1x16x128xf32>
    %89 = arith.mulf %79, %88 : vector<1x16x128xf32>
    %90 = vector.shape_cast %61 : vector<1x128xf32> to vector<1x1x128xf32>
    %91 = vector.broadcast %90 : vector<1x1x128xf32> to vector<1x16x128xf32>
    %92 = arith.mulf %89, %91 : vector<1x16x128xf32>
    %93 = vector.shape_cast %62 : vector<1x128xf32> to vector<1x1x128xf32>
    %94 = vector.broadcast %93 : vector<1x1x128xf32> to vector<1x16x128xf32>
    %95 = arith.addf %92, %94 : vector<1x16x128xf32>
    %96 = arith.truncf %95 : vector<1x16x128xf32> to vector<1x16x128xbf16>
    %97 = vector.shape_cast %96 : vector<1x16x128xbf16> to vector<16x128xbf16>
    %c0_37 = arith.constant 0 : index
    %c0_38 = arith.constant 0 : index
    %98 = vector.load %arg10[%c0_37, %c0_38] : memref<128x128xbf16, #tpu.memory_space<vmem>>, vector<128x128xbf16>
    %cst_39 = arith.constant dense<0.000000e+00> : vector<16x128xf32>
    %99 = tpu.matmul %97, %98, %cst_39 {dimension_numbers = #tpu.dot_dimension_numbers<[1], [0], [0], [1], [0, 0, 1, 1], [], []>} : vector<16x128xbf16>, vector<128x128xbf16>, vector<16x128xf32> -> vector<16x128xf32>
    %c0_40 = arith.constant 0 : index
    %c0_41 = arith.constant 0 : index
    %100 = vector.load %arg11[%c0_40, %c0_41] : memref<1x128xf32, #tpu.memory_space<vmem>>, vector<1x128xf32>
    %101 = vector.broadcast %100 : vector<1x128xf32> to vector<16x128xf32>
    %102 = arith.addf %99, %101 : vector<16x128xf32>
    %cst_42 = arith.constant 5.000000e-01 : f32
    %103 = vector.broadcast %cst_42 : f32 to vector<16x128xf32>
    %104 = arith.mulf %103, %102 : vector<16x128xf32>
    %cst_43 = arith.constant 0.707106769 : f32
    %105 = vector.broadcast %cst_43 : f32 to vector<16x128xf32>
    %106 = arith.mulf %102, %105 : vector<16x128xf32>
    %107 = math.erf %106 : vector<16x128xf32>
    %cst_44 = arith.constant 1.000000e+00 : f32
    %108 = vector.broadcast %cst_44 : f32 to vector<16x128xf32>
    %109 = arith.addf %108, %107 : vector<16x128xf32>
    %110 = arith.mulf %104, %109 : vector<16x128xf32>
    %111 = arith.truncf %110 : vector<16x128xf32> to vector<16x128xbf16>
    %c0_45 = arith.constant 0 : index
    %c0_46 = arith.constant 0 : index
    %112 = vector.load %arg12[%c0_45, %c0_46] : memref<128x128xbf16, #tpu.memory_space<vmem>>, vector<128x128xbf16>
    %cst_47 = arith.constant dense<0.000000e+00> : vector<16x128xf32>
    %113 = tpu.matmul %111, %112, %cst_47 {dimension_numbers = #tpu.dot_dimension_numbers<[1], [0], [0], [1], [0, 0, 1, 1], [], []>} : vector<16x128xbf16>, vector<128x128xbf16>, vector<16x128xf32> -> vector<16x128xf32>
    %c0_48 = arith.constant 0 : index
    %c0_49 = arith.constant 0 : index
    %114 = vector.load %arg13[%c0_48, %c0_49] : memref<1x128xf32, #tpu.memory_space<vmem>>, vector<1x128xf32>
    %115 = vector.broadcast %114 : vector<1x128xf32> to vector<16x128xf32>
    %116 = arith.addf %113, %115 : vector<16x128xf32>
    %117 = vector.shape_cast %116 : vector<16x128xf32> to vector<1x16x128xf32>
    %118 = arith.addf %117, %60 : vector<1x16x128xf32>
    %c0_50 = arith.constant 0 : index
    %c0_51 = arith.constant 0 : index
    %119 = vector.load %arg14[%c0_50, %c0_51] : memref<1x128xf32, #tpu.memory_space<vmem>>, vector<1x128xf32>
    %c0_52 = arith.constant 0 : index
    %c0_53 = arith.constant 0 : index
    %120 = vector.load %arg15[%c0_52, %c0_53] : memref<1x128xf32, #tpu.memory_space<vmem>>, vector<1x128xf32>
    %121 = tpu.iota {dimensions = array<i32: 2>} : vector<1x1x128xi32>
    %c32_i32_54 = arith.constant 32 : i32
    %122 = vector.broadcast %c32_i32_54 : i32 to vector<1x1x128xi32>
    %123 = arith.cmpi slt, %121, %122 : vector<1x1x128xi32>
    %cst_55 = arith.constant 0.000000e+00 : f32
    %124 = vector.shape_cast %123 : vector<1x1x128xi1> to vector<1x1x128xi1>
    %125 = vector.broadcast %124 : vector<1x1x128xi1> to vector<1x16x128xi1>
    %126 = vector.broadcast %cst_55 : f32 to vector<1x16x128xf32>
    %127 = arith.select %125, %118, %126 : vector<1x16x128xi1>, vector<1x16x128xf32>
    %cst_56 = arith.constant dense<0.000000e+00> : vector<1x16xf32>
    %128 = vector.multi_reduction <add>, %127, %cst_56 [2] : vector<1x16x128xf32> to vector<1x16xf32>
    %129 = vector.shape_cast %128 : vector<1x16xf32> to vector<1x16x1xf32>
    %cst_57 = arith.constant 3.125000e-02 : f32
    %130 = vector.broadcast %cst_57 : f32 to vector<1x16x1xf32>
    %131 = arith.mulf %129, %130 : vector<1x16x1xf32>
    %132 = vector.broadcast %131 : vector<1x16x1xf32> to vector<1x16x128xf32>
    %133 = arith.subf %118, %132 : vector<1x16x128xf32>
    %cst_58 = arith.constant 0.000000e+00 : f32
    %134 = vector.shape_cast %123 : vector<1x1x128xi1> to vector<1x1x128xi1>
    %135 = vector.broadcast %134 : vector<1x1x128xi1> to vector<1x16x128xi1>
    %136 = vector.broadcast %cst_58 : f32 to vector<1x16x128xf32>
    %137 = arith.select %135, %133, %136 : vector<1x16x128xi1>, vector<1x16x128xf32>
    %138 = arith.mulf %137, %137 : vector<1x16x128xf32>
    %cst_59 = arith.constant dense<0.000000e+00> : vector<1x16xf32>
    %139 = vector.multi_reduction <add>, %138, %cst_59 [2] : vector<1x16x128xf32> to vector<1x16xf32>
    %140 = vector.shape_cast %139 : vector<1x16xf32> to vector<1x16x1xf32>
    %cst_60 = arith.constant 3.125000e-02 : f32
    %141 = vector.broadcast %cst_60 : f32 to vector<1x16x1xf32>
    %142 = arith.mulf %140, %141 : vector<1x16x1xf32>
    %cst_61 = arith.constant 9.99999974E-6 : f32
    %143 = vector.broadcast %cst_61 : f32 to vector<1x16x1xf32>
    %144 = arith.addf %142, %143 : vector<1x16x1xf32>
    %145 = math.rsqrt %144 : vector<1x16x1xf32>
    %146 = vector.broadcast %145 : vector<1x16x1xf32> to vector<1x16x128xf32>
    %147 = arith.mulf %137, %146 : vector<1x16x128xf32>
    %148 = vector.shape_cast %119 : vector<1x128xf32> to vector<1x1x128xf32>
    %149 = vector.broadcast %148 : vector<1x1x128xf32> to vector<1x16x128xf32>
    %150 = arith.mulf %147, %149 : vector<1x16x128xf32>
    %151 = vector.shape_cast %120 : vector<1x128xf32> to vector<1x1x128xf32>
    %152 = vector.broadcast %151 : vector<1x1x128xf32> to vector<1x16x128xf32>
    %153 = arith.addf %150, %152 : vector<1x16x128xf32>
    %154 = tpu.transpose %153, [0, 2, 1] : vector<1x16x128xf32> -> vector<1x128x16xf32>
    %155 = vector.shape_cast %154 : vector<1x128x16xf32> to vector<128x16xf32>
    %156 = arith.truncf %155 : vector<128x16xf32> to vector<128x16xbf16>
    %c0_62 = arith.constant 0 : index
    %c0_63 = arith.constant 0 : index
    %157 = vector.load %arg16[%c0_62, %c0_63] : memref<16x128xbf16, #tpu.memory_space<vmem>>, vector<16x128xbf16>
    %cst_64 = arith.constant dense<0.000000e+00> : vector<128x128xf32>
    %158 = tpu.matmul %156, %157, %cst_64 {dimension_numbers = #tpu.dot_dimension_numbers<[1], [0], [0], [1], [0, 0, 1, 1], [], []>} : vector<128x16xbf16>, vector<16x128xbf16>, vector<128x128xf32> -> vector<128x128xf32>
    %c0_65 = arith.constant 0 : index
    %c0_66 = arith.constant 0 : index
    %159 = vector.load %arg17[%c0_65, %c0_66] : memref<1x128xf32, #tpu.memory_space<vmem>>, vector<1x128xf32>
    %160 = vector.broadcast %159 : vector<1x128xf32> to vector<128x128xf32>
    %161 = arith.addf %158, %160 : vector<128x128xf32>
    %cst_67 = arith.constant 5.000000e-01 : f32
    %162 = vector.broadcast %cst_67 : f32 to vector<128x128xf32>
    %163 = arith.mulf %162, %161 : vector<128x128xf32>
    %cst_68 = arith.constant 0.707106769 : f32
    %164 = vector.broadcast %cst_68 : f32 to vector<128x128xf32>
    %165 = arith.mulf %161, %164 : vector<128x128xf32>
    %166 = math.erf %165 : vector<128x128xf32>
    %cst_69 = arith.constant 1.000000e+00 : f32
    %167 = vector.broadcast %cst_69 : f32 to vector<128x128xf32>
    %168 = arith.addf %167, %166 : vector<128x128xf32>
    %169 = arith.mulf %163, %168 : vector<128x128xf32>
    %170 = arith.truncf %169 : vector<128x128xf32> to vector<128x128xbf16>
    %c0_70 = arith.constant 0 : index
    %c0_71 = arith.constant 0 : index
    %171 = vector.load %arg18[%c0_70, %c0_71] : memref<128x16xbf16, #tpu.memory_space<vmem>>, vector<128x16xbf16>
    %cst_72 = arith.constant dense<0.000000e+00> : vector<128x16xf32>
    %172 = tpu.matmul %170, %171, %cst_72 {dimension_numbers = #tpu.dot_dimension_numbers<[1], [0], [0], [1], [0, 0, 1, 1], [], []>} : vector<128x128xbf16>, vector<128x16xbf16>, vector<128x16xf32> -> vector<128x16xf32>
    %c0_73 = arith.constant 0 : index
    %c0_74 = arith.constant 0 : index
    %173 = vector.load %arg19[%c0_73, %c0_74] : memref<1x16xf32, #tpu.memory_space<vmem>>, vector<1x16xf32>
    %174 = vector.broadcast %173 : vector<1x16xf32> to vector<128x16xf32>
    %175 = arith.addf %172, %174 : vector<128x16xf32>
    %176 = vector.shape_cast %175 : vector<128x16xf32> to vector<1x128x16xf32>
    %177 = tpu.transpose %176, [0, 2, 1] : vector<1x128x16xf32> -> vector<1x16x128xf32>
    %178 = arith.addf %177, %118 : vector<1x16x128xf32>
    %c0_75 = arith.constant 0 : index
    %c0_76 = arith.constant 0 : index
    %179 = vector.load %arg20[%c0_75, %c0_76] : memref<1x128xf32, #tpu.memory_space<vmem>>, vector<1x128xf32>
    %c0_77 = arith.constant 0 : index
    %c0_78 = arith.constant 0 : index
    %180 = vector.load %arg21[%c0_77, %c0_78] : memref<1x128xf32, #tpu.memory_space<vmem>>, vector<1x128xf32>
    %181 = tpu.iota {dimensions = array<i32: 2>} : vector<1x1x128xi32>
    %c32_i32_79 = arith.constant 32 : i32
    %182 = vector.broadcast %c32_i32_79 : i32 to vector<1x1x128xi32>
    %183 = arith.cmpi slt, %181, %182 : vector<1x1x128xi32>
    %cst_80 = arith.constant 0.000000e+00 : f32
    %184 = vector.shape_cast %183 : vector<1x1x128xi1> to vector<1x1x128xi1>
    %185 = vector.broadcast %184 : vector<1x1x128xi1> to vector<1x16x128xi1>
    %186 = vector.broadcast %cst_80 : f32 to vector<1x16x128xf32>
    %187 = arith.select %185, %178, %186 : vector<1x16x128xi1>, vector<1x16x128xf32>
    %cst_81 = arith.constant dense<0.000000e+00> : vector<1x16xf32>
    %188 = vector.multi_reduction <add>, %187, %cst_81 [2] : vector<1x16x128xf32> to vector<1x16xf32>
    %189 = vector.shape_cast %188 : vector<1x16xf32> to vector<1x16x1xf32>
    %cst_82 = arith.constant 3.125000e-02 : f32
    %190 = vector.broadcast %cst_82 : f32 to vector<1x16x1xf32>
    %191 = arith.mulf %189, %190 : vector<1x16x1xf32>
    %192 = vector.broadcast %191 : vector<1x16x1xf32> to vector<1x16x128xf32>
    %193 = arith.subf %178, %192 : vector<1x16x128xf32>
    %cst_83 = arith.constant 0.000000e+00 : f32
    %194 = vector.shape_cast %183 : vector<1x1x128xi1> to vector<1x1x128xi1>
    %195 = vector.broadcast %194 : vector<1x1x128xi1> to vector<1x16x128xi1>
    %196 = vector.broadcast %cst_83 : f32 to vector<1x16x128xf32>
    %197 = arith.select %195, %193, %196 : vector<1x16x128xi1>, vector<1x16x128xf32>
    %198 = arith.mulf %197, %197 : vector<1x16x128xf32>
    %cst_84 = arith.constant dense<0.000000e+00> : vector<1x16xf32>
    %199 = vector.multi_reduction <add>, %198, %cst_84 [2] : vector<1x16x128xf32> to vector<1x16xf32>
    %200 = vector.shape_cast %199 : vector<1x16xf32> to vector<1x16x1xf32>
    %cst_85 = arith.constant 3.125000e-02 : f32
    %201 = vector.broadcast %cst_85 : f32 to vector<1x16x1xf32>
    %202 = arith.mulf %200, %201 : vector<1x16x1xf32>
    %cst_86 = arith.constant 9.99999974E-6 : f32
    %203 = vector.broadcast %cst_86 : f32 to vector<1x16x1xf32>
    %204 = arith.addf %202, %203 : vector<1x16x1xf32>
    %205 = math.rsqrt %204 : vector<1x16x1xf32>
    %206 = vector.broadcast %205 : vector<1x16x1xf32> to vector<1x16x128xf32>
    %207 = arith.mulf %197, %206 : vector<1x16x128xf32>
    %208 = vector.shape_cast %179 : vector<1x128xf32> to vector<1x1x128xf32>
    %209 = vector.broadcast %208 : vector<1x1x128xf32> to vector<1x16x128xf32>
    %210 = arith.mulf %207, %209 : vector<1x16x128xf32>
    %211 = vector.shape_cast %180 : vector<1x128xf32> to vector<1x1x128xf32>
    %212 = vector.broadcast %211 : vector<1x1x128xf32> to vector<1x16x128xf32>
    %213 = arith.addf %210, %212 : vector<1x16x128xf32>
    %214 = arith.truncf %213 : vector<1x16x128xf32> to vector<1x16x128xbf16>
    %215 = vector.shape_cast %214 : vector<1x16x128xbf16> to vector<16x128xbf16>
    %c0_87 = arith.constant 0 : index
    %c0_88 = arith.constant 0 : index
    %216 = vector.load %arg22[%c0_87, %c0_88] : memref<128x128xbf16, #tpu.memory_space<vmem>>, vector<128x128xbf16>
    %cst_89 = arith.constant dense<0.000000e+00> : vector<16x128xf32>
    %217 = tpu.matmul %215, %216, %cst_89 {dimension_numbers = #tpu.dot_dimension_numbers<[1], [0], [0], [1], [0, 0, 1, 1], [], []>} : vector<16x128xbf16>, vector<128x128xbf16>, vector<16x128xf32> -> vector<16x128xf32>
    %c0_90 = arith.constant 0 : index
    %c0_91 = arith.constant 0 : index
    %218 = vector.load %arg23[%c0_90, %c0_91] : memref<1x128xf32, #tpu.memory_space<vmem>>, vector<1x128xf32>
    %219 = vector.broadcast %218 : vector<1x128xf32> to vector<16x128xf32>
    %220 = arith.addf %217, %219 : vector<16x128xf32>
    %cst_92 = arith.constant 5.000000e-01 : f32
    %221 = vector.broadcast %cst_92 : f32 to vector<16x128xf32>
    %222 = arith.mulf %221, %220 : vector<16x128xf32>
    %cst_93 = arith.constant 0.707106769 : f32
    %223 = vector.broadcast %cst_93 : f32 to vector<16x128xf32>
    %224 = arith.mulf %220, %223 : vector<16x128xf32>
    %225 = math.erf %224 : vector<16x128xf32>
    %cst_94 = arith.constant 1.000000e+00 : f32
    %226 = vector.broadcast %cst_94 : f32 to vector<16x128xf32>
    %227 = arith.addf %226, %225 : vector<16x128xf32>
    %228 = arith.mulf %222, %227 : vector<16x128xf32>
    %229 = arith.truncf %228 : vector<16x128xf32> to vector<16x128xbf16>
    %c0_95 = arith.constant 0 : index
    %c0_96 = arith.constant 0 : index
    %230 = vector.load %arg24[%c0_95, %c0_96] : memref<128x128xbf16, #tpu.memory_space<vmem>>, vector<128x128xbf16>
    %cst_97 = arith.constant dense<0.000000e+00> : vector<16x128xf32>
    %231 = tpu.matmul %229, %230, %cst_97 {dimension_numbers = #tpu.dot_dimension_numbers<[1], [0], [0], [1], [0, 0, 1, 1], [], []>} : vector<16x128xbf16>, vector<128x128xbf16>, vector<16x128xf32> -> vector<16x128xf32>
    %c0_98 = arith.constant 0 : index
    %c0_99 = arith.constant 0 : index
    %232 = vector.load %arg25[%c0_98, %c0_99] : memref<1x128xf32, #tpu.memory_space<vmem>>, vector<1x128xf32>
    %233 = vector.broadcast %232 : vector<1x128xf32> to vector<16x128xf32>
    %234 = arith.addf %231, %233 : vector<16x128xf32>
    %235 = vector.shape_cast %234 : vector<16x128xf32> to vector<1x16x128xf32>
    %236 = arith.addf %235, %178 : vector<1x16x128xf32>
    %c0_100 = arith.constant 0 : index
    %c0_101 = arith.constant 0 : index
    %c0_102 = arith.constant 0 : index
    %237 = vector.load %arg26[%c0_100, %c0_101, %c0_102] : memref<1x16x128xf32, #tpu.memory_space<vmem>>, vector<1x16x128xf32>
    tpu.vector_store %arg26[%c0_100, %c0_101, %c0_102], %236 {strides = array<i32>} : memref<1x16x128xf32, #tpu.memory_space<vmem>>, vector<1x16x128xf32>,
    return
  }
  func.func @transform_0(%arg0: i32) -> (i32, i32, i32) {
    %c0_i32 = arith.constant 0 : i32
    %c0_i32_0 = arith.constant 0 : i32
    %c0_i32_1 = arith.constant 0 : i32
    return %arg0, %c0_i32, %c0_i32_0 : i32, i32, i32
  }
  func.func @transform_1(%arg0: i32) -> (i32, i32) {
    %c0_i32 = arith.constant 0 : i32
    %c0_i32_0 = arith.constant 0 : i32
    %c0_i32_1 = arith.constant 0 : i32
    return %c0_i32, %c0_i32_0 : i32, i32
  }
  func.func @transform_2(%arg0: i32) -> (i32, i32) {
    %c0_i32 = arith.constant 0 : i32
    %c0_i32_0 = arith.constant 0 : i32
    %c0_i32_1 = arith.constant 0 : i32
    return %c0_i32, %c0_i32_0 : i32, i32
  }
  func.func @transform_3(%arg0: i32) -> (i32, i32) {
    %c0_i32 = arith.constant 0 : i32
    %c0_i32_0 = arith.constant 0 : i32
    %c0_i32_1 = arith.constant 0 : i32
    return %c0_i32, %c0_i32_0 : i32, i32
  }
  func.func @transform_4(%arg0: i32) -> (i32, i32) {
    %c0_i32 = arith.constant 0 : i32
    %c0_i32_0 = arith.constant 0 : i32
    %c0_i32_1 = arith.constant 0 : i32
    return %c0_i32, %c0_i32_0 : i32, i32
  }
  func.func @transform_5(%arg0: i32) -> (i32, i32) {
    %c0_i32 = arith.constant 0 : i32
    %c0_i32_0 = arith.constant 0 : i32
    %c0_i32_1 = arith.constant 0 : i32
    return %c0_i32, %c0_i32_0 : i32, i32
  }
  func.func @transform_6(%arg0: i32) -> (i32, i32) {
    %c0_i32 = arith.constant 0 : i32
    %c0_i32_0 = arith.constant 0 : i32
    %c0_i32_1 = arith.constant 0 : i32
    return %c0_i32, %c0_i32_0 : i32, i32
  }
  func.func @transform_7(%arg0: i32) -> (i32, i32) {
    %c0_i32 = arith.constant 0 : i32
    %c0_i32_0 = arith.constant 0 : i32
    %c0_i32_1 = arith.constant 0 : i32
    return %c0_i32, %c0_i32_0 : i32, i32
  }
  func.func @transform_8(%arg0: i32) -> (i32, i32) {
    %c0_i32 = arith.constant 0 : i32
    %c0_i32_0 = arith.constant 0 : i32
    %c0_i32_1 = arith.constant 0 : i32
    return %c0_i32, %c0_i32_0 : i32, i32
  }
  func.func @transform_9(%arg0: i32) -> (i32, i32) {
    %c0_i32 = arith.constant 0 : i32
    %c0_i32_0 = arith.constant 0 : i32
    %c0_i32_1 = arith.constant 0 : i32
    return %c0_i32, %c0_i32_0 : i32, i32
  }
  func.func @transform_10(%arg0: i32) -> (i32, i32) {
    %c0_i32 = arith.constant 0 : i32
    %c0_i32_0 = arith.constant 0 : i32
    %c0_i32_1 = arith.constant 0 : i32
    return %c0_i32, %c0_i32_0 : i32, i32
  }
  func.func @transform_11(%arg0: i32) -> (i32, i32) {
    %c0_i32 = arith.constant 0 : i32
    %c0_i32_0 = arith.constant 0 : i32
    %c0_i32_1 = arith.constant 0 : i32
    return %c0_i32, %c0_i32_0 : i32, i32
  }
  func.func @transform_12(%arg0: i32) -> (i32, i32) {
    %c0_i32 = arith.constant 0 : i32
    %c0_i32_0 = arith.constant 0 : i32
    %c0_i32_1 = arith.constant 0 : i32
    return %c0_i32, %c0_i32_0 : i32, i32
  }
  func.func @transform_13(%arg0: i32) -> (i32, i32) {
    %c0_i32 = arith.constant 0 : i32
    %c0_i32_0 = arith.constant 0 : i32
    %c0_i32_1 = arith.constant 0 : i32
    return %c0_i32, %c0_i32_0 : i32, i32
  }
  func.func @transform_14(%arg0: i32) -> (i32, i32) {
    %c0_i32 = arith.constant 0 : i32
    %c0_i32_0 = arith.constant 0 : i32
    %c0_i32_1 = arith.constant 0 : i32
    return %c0_i32, %c0_i32_0 : i32, i32
  }
  func.func @transform_15(%arg0: i32) -> (i32, i32) {
    %c0_i32 = arith.constant 0 : i32
    %c0_i32_0 = arith.constant 0 : i32
    %c0_i32_1 = arith.constant 0 : i32
    return %c0_i32, %c0_i32_0 : i32, i32
  }
  func.func @transform_16(%arg0: i32) -> (i32, i32) {
    %c0_i32 = arith.constant 0 : i32
    %c0_i32_0 = arith.constant 0 : i32
    %c0_i32_1 = arith.constant 0 : i32
    return %c0_i32, %c0_i32_0 : i32, i32
  }
  func.func @transform_17(%arg0: i32) -> (i32, i32) {
    %c0_i32 = arith.constant 0 : i32
    %c0_i32_0 = arith.constant 0 : i32
    %c0_i32_1 = arith.constant 0 : i32
    return %c0_i32, %c0_i32_0 : i32, i32
  }
  func.func @transform_18(%arg0: i32) -> (i32, i32) {
    %c0_i32 = arith.constant 0 : i32
    %c0_i32_0 = arith.constant 0 : i32
    %c0_i32_1 = arith.constant 0 : i32
    return %c0_i32, %c0_i32_0 : i32, i32
  }
  func.func @transform_19(%arg0: i32) -> (i32, i32) {
    %c0_i32 = arith.constant 0 : i32
    %c0_i32_0 = arith.constant 0 : i32
    %c0_i32_1 = arith.constant 0 : i32
    return %c0_i32, %c0_i32_0 : i32, i32
  }
  func.func @transform_20(%arg0: i32) -> (i32, i32) {
    %c0_i32 = arith.constant 0 : i32
    %c0_i32_0 = arith.constant 0 : i32
    %c0_i32_1 = arith.constant 0 : i32
    return %c0_i32, %c0_i32_0 : i32, i32
  }
  func.func @transform_21(%arg0: i32) -> (i32, i32) {
    %c0_i32 = arith.constant 0 : i32
    %c0_i32_0 = arith.constant 0 : i32
    %c0_i32_1 = arith.constant 0 : i32
    return %c0_i32, %c0_i32_0 : i32, i32
  }
  func.func @transform_22(%arg0: i32) -> (i32, i32) {
    %c0_i32 = arith.constant 0 : i32
    %c0_i32_0 = arith.constant 0 : i32
    %c0_i32_1 = arith.constant 0 : i32
    return %c0_i32, %c0_i32_0 : i32, i32
  }
  func.func @transform_23(%arg0: i32) -> (i32, i32) {
    %c0_i32 = arith.constant 0 : i32
    %c0_i32_0 = arith.constant 0 : i32
    %c0_i32_1 = arith.constant 0 : i32
    return %c0_i32, %c0_i32_0 : i32, i32
  }
  func.func @transform_24(%arg0: i32) -> (i32, i32) {
    %c0_i32 = arith.constant 0 : i32
    %c0_i32_0 = arith.constant 0 : i32
    %c0_i32_1 = arith.constant 0 : i32
    return %c0_i32, %c0_i32_0 : i32, i32
  }
  func.func @transform_25(%arg0: i32) -> (i32, i32, i32) {
    %c0_i32 = arith.constant 0 : i32
    %c0_i32_0 = arith.constant 0 : i32
    %c0_i32_1 = arith.constant 0 : i32
    return %arg0, %c0_i32, %c0_i32_0 : i32, i32, i32
  }
}

module attributes {stable_mosaic.version = 11 : i64} {
  func.func @kernel(%arg0: i32, %arg1: memref<2x16x128xf32, #tpu.memory_space<vmem>>, %arg2: memref<128x10xf32, #tpu.memory_space<vmem>>, %arg3: memref<1x10xf32, #tpu.memory_space<vmem>>, %arg4: memref<2x10xf32, #tpu.memory_space<vmem>>) attributes {dimension_semantics = [#tpu.dimension_semantics<parallel>], iteration_bounds = array<i64: 1>, scalar_prefetch = 0 : i64, scratch_operands = 0 : i64, tpu.core_type = #tpu.core_type<tc>, window_params = [{transform_indices = @transform_0, window_bounds = array<i64: 2, 16, 128>}, {pipeline_mode = #tpu.pipeline_mode<synchronous>, transform_indices = @transform_1, window_bounds = array<i64: 128, 10>}, {pipeline_mode = #tpu.pipeline_mode<synchronous>, transform_indices = @transform_2, window_bounds = array<i64: 1, 10>}, {transform_indices = @transform_3, window_bounds = array<i64: 2, 10>}]} {
    %c0 = arith.constant 0 : index
    %c0_0 = arith.constant 0 : index
    %c0_1 = arith.constant 0 : index
    %0 = vector.load %arg1[%c0, %c0_0, %c0_1] : memref<2x16x128xf32, #tpu.memory_space<vmem>>, vector<2x16x128xf32>
    %cst = arith.constant dense<0.000000e+00> : vector<2x128xf32>
    %1 = vector.multi_reduction <add>, %0, %cst [1] : vector<2x16x128xf32> to vector<2x128xf32>
    %cst_2 = arith.constant 6.250000e-02 : f32
    %2 = vector.broadcast %cst_2 : f32 to vector<2x128xf32>
    %3 = arith.mulf %1, %2 : vector<2x128xf32>
    %c0_3 = arith.constant 0 : index
    %c0_4 = arith.constant 0 : index
    %4 = vector.load %arg2[%c0_3, %c0_4] : memref<128x10xf32, #tpu.memory_space<vmem>>, vector<128x10xf32>
    %cst_5 = arith.constant dense<0.000000e+00> : vector<2x10xf32>
    %5 = tpu.matmul %3, %4, %cst_5 {dimension_numbers = #tpu.dot_dimension_numbers<[1], [0], [0], [1], [0, 0, 1, 1], [], []>} : vector<2x128xf32>, vector<128x10xf32>, vector<2x10xf32> -> vector<2x10xf32>
    %c0_6 = arith.constant 0 : index
    %c0_7 = arith.constant 0 : index
    %6 = vector.load %arg3[%c0_6, %c0_7] : memref<1x10xf32, #tpu.memory_space<vmem>>, vector<1x10xf32>
    %7 = vector.broadcast %6 : vector<1x10xf32> to vector<2x10xf32>
    %8 = arith.addf %5, %7 : vector<2x10xf32>
    %c0_8 = arith.constant 0 : index
    %c0_9 = arith.constant 0 : index
    %9 = vector.load %arg4[%c0_8, %c0_9] : memref<2x10xf32, #tpu.memory_space<vmem>>, vector<2x10xf32>
    tpu.vector_store %arg4[%c0_8, %c0_9], %8 {strides = array<i32>} : memref<2x10xf32, #tpu.memory_space<vmem>>, vector<2x10xf32>,
    return
  }
  func.func @transform_0(%arg0: i32) -> (i32, i32, i32) {
    %c0_i32 = arith.constant 0 : i32
    %c0_i32_0 = arith.constant 0 : i32
    %c0_i32_1 = arith.constant 0 : i32
    return %arg0, %c0_i32, %c0_i32_0 : i32, i32, i32
  }
  func.func @transform_1(%arg0: i32) -> (i32, i32) {
    %c0_i32 = arith.constant 0 : i32
    %c0_i32_0 = arith.constant 0 : i32
    %c0_i32_1 = arith.constant 0 : i32
    return %c0_i32, %c0_i32_0 : i32, i32
  }
  func.func @transform_2(%arg0: i32) -> (i32, i32) {
    %c0_i32 = arith.constant 0 : i32
    %c0_i32_0 = arith.constant 0 : i32
    %c0_i32_1 = arith.constant 0 : i32
    return %c0_i32, %c0_i32_0 : i32, i32
  }
  func.func @transform_3(%arg0: i32) -> (i32, i32) {
    %c0_i32 = arith.constant 0 : i32
    %c0_i32_0 = arith.constant 0 : i32
    return %arg0, %c0_i32 : i32, i32
  }
}

</mosaic_0001>

<llo_original>
// kernel: mlpmixer_forward.3
$region0: #{mlpmixer_forward.3}
  #allocation0 [shape = 'u32[]', space=smem, size = 0x4, offset = 0x4, fixed_abs, tag = 'smem constant byte address 0x4 - core index']
  #allocation1 [shape = 'u32[144,128]{1,0:T(1,128)}', space=vmem, size = 0x12000, scoped, tag = 'internal scratch']
  %s0 = inlined_call_operand.vmem [shape: bf16[32,64], index: 0, kind: input, shape index: {}]
  %s1 = inlined_call_operand.vmem [shape: bf16[64,32], index: 1, kind: input, shape index: {}]
  %s2 = inlined_call_operand.vmem [shape: f32[1,32], index: 2, kind: input, shape index: {}]
  %s3 = inlined_call_operand.vmem [shape: f32[32,32], index: 3, kind: output, shape index: {}]
  %s4 = sld [smem:[#allocation0]]
  $region22: #{mlpmixer_forward.3} parent=0
    _
  %s6 = ssub.s32 1, %s4
  %s7 = scalar_select 0, %s6, %s4
  // Predicated region
  $region2: #{mlpmixer_forward.3} parent=0 // pred_check
    _
  $region3: #{mlpmixer_forward.3} parent=0 // pred_check_branch
    %9 = sbr.rel (0) target = $region5
  $region4: #{mlpmixer_forward.3} parent=0 // pred_region
    _
  $region5: #{mlpmixer_forward.3} parent=0 // pred_fallthru
    _
  // Predicated region
  $region6: #{mlpmixer_forward.3} parent=0 // pred_check
    _
  $region7: #{mlpmixer_forward.3} parent=0 // pred_check_branch
    %11 = sbr.rel (0) target = $region9
  $region8: #{mlpmixer_forward.3} parent=0 // pred_region
    _
  $region9: #{mlpmixer_forward.3} parent=0 // pred_fallthru
    _
  // Predicated region
  $region10: #{mlpmixer_forward.3} parent=0 // pred_check
    _
  $region11: #{mlpmixer_forward.3} parent=0 // pred_check_branch
    %13 = sbr.rel (0) target = $region13
  $region12: #{mlpmixer_forward.3} parent=0 // pred_region
    _
  $region13: #{mlpmixer_forward.3} parent=0 // pred_fallthru
    _
  %v15 = vld [vmem:[%s0] sm:$0xf]
  %v16 = vld [vmem:[%s0 + $0x4] sm:$0xf]
  %v17 = vld [vmem:[%s0 + $0x8] sm:$0xf]
  %v18 = vld [vmem:[%s0 + $0xc] sm:$0xf]
  %v19 = vld [vmem:[%s1] sm:$0xf]
  %v20 = vld [vmem:[%s1 + $0x4] sm:$0xf]
  %v21 = vld [vmem:[%s1 + $0x8] sm:$0xf]
  %v22 = vld [vmem:[%s1 + $0xc] sm:$0xf]
  %v23 = vld [vmem:[%s1 + $0x10] sm:$0xf]
  %v24 = vld [vmem:[%s1 + $0x14] sm:$0xf]
  %v25 = vld [vmem:[%s1 + $0x18] sm:$0xf]
  %v26 = vld [vmem:[%s1 + $0x1c] sm:$0xf]
  %v27 = vld [vmem:[%s2] sm:$0x1]
  %v29 = vlaneseq
  %v30 = vshrl.u32 %v29, 7
  %v31 = vsub.s32 0, %v30
  %v32 = vrot.slane %v27, %v31
  %v38 = vunpack.c.l.b16 %v15
  %v39 = vunpack.c.l.b16 %v16
  %v40 = vunpack.c.l.b16 %v17
  %v41 = vunpack.c.l.b16 %v18
  %v42 = vpack.c.b16 %v39, %v38
  %v43 = vpack.c.b16 %v41, %v40
  %v52 = vunpack.c.l.b16 %v19
  %v53 = vunpack.c.l.b16 %v20
  %v54 = vunpack.c.l.b16 %v21
  %v55 = vunpack.c.l.b16 %v22
  %v56 = vunpack.c.l.b16 %v23
  %v57 = vunpack.c.l.b16 %v24
  %v58 = vunpack.c.l.b16 %v25
  %v59 = vunpack.c.l.b16 %v26
  %v60 = vpack.c.b16 %v53, %v52
  %v61 = vpack.c.b16 %v55, %v54
  %v62 = vpack.c.b16 %v57, %v56
  %v63 = vpack.c.b16 %v59, %v58
  %vm68 = vcmask 523264
  %v70 = vsel %vm68, %v42, 0
  %v73 = vsel %vm68, %v43, 0
  %75 = vmatprep.subr.bf16.mxu0 0
  %76 = vmatpush1.bf16.msra.mxu0 %v60
  %77 = vmatprep.subr.bf16.mxu0 0
  %78 = vmatpush1.bf16.msra.mxu0 %v61
  %79 = vmatprep.subr.bf16.mxu0 0
  %80 = vmatpush1.bf16.msra.mxu0 %v62
  %81 = vmatprep.subr.bf16.mxu0 0
  %82 = vmatpush1.bf16.msra.mxu0 %v63
  %83 = vmatprep.subr.bf16.mxu0 0
  %84 = vmatpush1.bf16.msra.mxu0 0
  %85 = vmatprep.subr.bf16.mxu0 0
  %86 = vmatpush1.bf16.msra.mxu0 0
  %87 = vmatprep.subr.bf16.mxu0 0
  %88 = vmatpush1.bf16.msra.mxu0 0
  %89 = vmatprep.subr.bf16.mxu0 0
  %90 = vmatpush1.bf16.msra.mxu0 0
  %91 = vmatprep.subr.bf16.mxu0 0
  %92 = vmatpush1.bf16.msra.mxu0 0
  %93 = vmatprep.subr.bf16.mxu0 0
  %94 = vmatpush1.bf16.msra.mxu0 0
  %95 = vmatprep.subr.bf16.mxu0 0
  %96 = vmatpush1.bf16.msra.mxu0 0
  %97 = vmatprep.subr.bf16.mxu0 0
  %98 = vmatpush1.bf16.msra.mxu0 0
  %99 = vmatprep.subr.bf16.mxu0 0
  %100 = vmatpush1.bf16.msra.mxu0 0
  %101 = vmatprep.subr.bf16.mxu0 0
  %102 = vmatpush1.bf16.msra.mxu0 0
  %103 = vmatprep.subr.bf16.mxu0 0
  %104 = vmatpush1.bf16.msra.mxu0 0
  %105 = vmatprep.subr.bf16.mxu0 0
  %106 = vmatpush1.bf16.msra.mxu0 0
  %107 = vmatprep.mubr.bf16.mxu0 0
  %108 = vmatmul.mubr.bf16.gmra.mrb[0].mxu0 %v70
  %v109 = vpop.f32.mrb[0].mxu0
  %v110 = vadd.f32 %v32, %v109
  %v111 = vpop.f32.mrb[0].mxu0
  %v112 = vpop.f32.mrb[0].mxu0
  %v113 = vadd.f32 %v32, %v112
  %v114 = vpop.f32.mrb[0].mxu0
  %115 = vmatprep.mubr.bf16.mxu0 0
  %116 = vmatmul.mubr.bf16.gmra.mrb[0].mxu0 %v73
  %v117 = vpop.f32.mrb[0].mxu0
  %v118 = vadd.f32 %v32, %v117
  %v119 = vpop.f32.mrb[0].mxu0
  %v120 = vpop.f32.mrb[0].mxu0
  %v121 = vadd.f32 %v32, %v120
  %v122 = vpop.f32.mrb[0].mxu0
  %123 = vdwg.mxu0
  %vm124 = vcmask 261120
  %125 = vst.msk [vmem:[%s3] sm:$0xff] %vm124, %v110
  %126 = vst.msk [vmem:[%s3 + $0x8] sm:$0xff] %vm124, %v113
  %127 = vst.msk [vmem:[%s3 + $0x10] sm:$0xff] %vm124, %v118
  %128 = vst.msk [vmem:[%s3 + $0x18] sm:$0xff] %vm124, %v121
  // Predicated region
  $region14: #{mlpmixer_forward.3} parent=0 // pred_check
    _
  $region15: #{mlpmixer_forward.3} parent=0 // pred_check_branch
    %130 = sbr.rel (0) target = $region17
  $region16: #{mlpmixer_forward.3} parent=0 // pred_region
    _
  $region17: #{mlpmixer_forward.3} parent=0 // pred_fallthru
    _
  // Predicated region
  $region18: #{mlpmixer_forward.3} parent=0 // pred_check
    _
  $region19: #{mlpmixer_forward.3} parent=0 // pred_check_branch
    %132 = sbr.rel (0) target = $region21
  $region20: #{mlpmixer_forward.3} parent=0 // pred_region
    _
  $region21: #{mlpmixer_forward.3} parent=0 // pred_fallthru
    _

// kernel: mlpmixer_forward.5
$region0: #{mlpmixer_forward.5}
  #allocation0 [shape = 'u32[]', space=smem, size = 0x4, offset = 0x4, fixed_abs, tag = 'smem constant byte address 0x4 - core index']
  #allocation1 [shape = 'u32[144,128]{1,0:T(1,128)}', space=vmem, size = 0x12000, scoped, tag = 'internal scratch']
  %s0 = inlined_call_operand.vmem [shape: f32[2,16,128], index: 0, kind: input, shape index: {}]
  %s1 = inlined_call_operand.vmem [shape: f32[128,10], index: 1, kind: input, shape index: {}]
  %s2 = inlined_call_operand.vmem [shape: f32[1,10], index: 2, kind: input, shape index: {}]
  %s3 = inlined_call_operand.hbm [shape: f32[2,10], index: 3, kind: output, shape index: {}]
  %s4 = sld [smem:[#allocation0]]
  $region22: #{mlpmixer_forward.5} parent=0
    _
  %s6 = ssub.s32 1, %s4
  %s7 = scalar_select 0, %s6, %s4
  $region1: #{mlpmixer_forward.5} parent=0
    #allocation2 [shape = 'u8[1024]{0}', space=vmem, size = 0x400, scoped, tag = 'output window, operand 0, single buffered']
    #allocation3 [shape = 's32[1]{0}', space=sflag, size = 0x4, scoped, tag = 'scoped memory for mlpmixer_forward.5']
    %8 = vsyncpa [#allocation3], 0
    // Predicated region
    $region2: #{mlpmixer_forward.5} parent=1 // pred_check
      _
    $region3: #{mlpmixer_forward.5} parent=1 // pred_check_branch
      %10 = sbr.rel (0) target = $region5
    $region4: #{mlpmixer_forward.5} parent=1 // pred_region
      _
    $region5: #{mlpmixer_forward.5} parent=1 // pred_fallthru
      _
    // Predicated region
    $region6: #{mlpmixer_forward.5} parent=1 // pred_check
      _
    $region7: #{mlpmixer_forward.5} parent=1 // pred_check_branch
      %12 = sbr.rel (0) target = $region9
    $region8: #{mlpmixer_forward.5} parent=1 // pred_region
      _
    $region9: #{mlpmixer_forward.5} parent=1 // pred_fallthru
      _
    // Predicated region
    $region10: #{mlpmixer_forward.5} parent=1 // pred_check
      _
    $region11: #{mlpmixer_forward.5} parent=1 // pred_check_branch
      %14 = sbr.rel (0) target = $region13
    $region12: #{mlpmixer_forward.5} parent=1 // pred_region
      _
    $region13: #{mlpmixer_forward.5} parent=1 // pred_fallthru
      _
    %v15 = vld [vmem:[%s0] sm:$0xff]
    %v16 = vld [vmem:[%s0 + $0x8] sm:$0xff]
    %v17 = vld [vmem:[%s0 + $0x10] sm:$0xff]
    %v18 = vld [vmem:[%s0 + $0x18] sm:$0xff]
    %v19 = vadd.f32 %v15, %v16
    %v20 = vrot.slane %v19, 4
    %v21 = vadd.f32 %v19, %v20
    %v22 = vrot.slane %v21, 2
    %v23 = vadd.f32 %v21, %v22
    %v24 = vrot.slane %v23, 1
    %v25 = vadd.f32 %v23, %v24
    %v26 = vadd.f32 %v17, %v18
    %v27 = vrot.slane %v26, 4
    %v28 = vadd.f32 %v26, %v27
    %v29 = vrot.slane %v28, 2
    %v30 = vadd.f32 %v28, %v29
    %v31 = vrot.slane %v30, 1
    %v32 = vadd.f32 %v30, %v31
    %v33 = vmul.f32 %v25, 0.0625
    %v34 = vmul.f32 %v32, 0.0625
    %v35 = vld [vmem:[%s1] sm:$0xff]
    %v36 = vld [vmem:[%s1 + $0x8] sm:$0xff]
    %v37 = vld [vmem:[%s1 + $0x10] sm:$0xff]
    %v38 = vld [vmem:[%s1 + $0x18] sm:$0xff]
    %v39 = vld [vmem:[%s1 + $0x20] sm:$0xff]
    %v40 = vld [vmem:[%s1 + $0x28] sm:$0xff]
    %v41 = vld [vmem:[%s1 + $0x30] sm:$0xff]
    %v42 = vld [vmem:[%s1 + $0x38] sm:$0xff]
    %v43 = vld [vmem:[%s1 + $0x40] sm:$0xff]
    %v44 = vld [vmem:[%s1 + $0x48] sm:$0xff]
    %v45 = vld [vmem:[%s1 + $0x50] sm:$0xff]
    %v46 = vld [vmem:[%s1 + $0x58] sm:$0xff]
    %v47 = vld [vmem:[%s1 + $0x60] sm:$0xff]
    %v48 = vld [vmem:[%s1 + $0x68] sm:$0xff]
    %v49 = vld [vmem:[%s1 + $0x70] sm:$0xff]
    %v50 = vld [vmem:[%s1 + $0x78] sm:$0xff]
    %v51 = vld [vmem:[%s2] sm:$0x1]
    %v53 = vlaneseq
    %v54 = vshrl.u32 %v53, 7
    %v55 = vsub.s32 0, %v54
    %v56 = vrot.slane %v51, %v55
    %vm60 = vcmask 1041409
    %v61 = vsel %vm60, %v34, %v33
    %63 = vmatprep.subr.mxu0 0.0
    %64 = vmatpush1.msra.mxu0 %v35
    %65 = vmatprep.subr.mxu0 0.0
    %66 = vmatpush1.msra.mxu0 %v36
    %67 = vmatprep.subr.mxu0 0.0
    %68 = vmatpush1.msra.mxu0 %v37
    %69 = vmatprep.subr.mxu0 0.0
    %70 = vmatpush1.msra.mxu0 %v38
    %71 = vmatprep.subr.mxu0 0.0
    %72 = vmatpush1.msra.mxu0 %v39
    %73 = vmatprep.subr.mxu0 0.0
    %74 = vmatpush1.msra.mxu0 %v40
    %75 = vmatprep.subr.mxu0 0.0
    %76 = vmatpush1.msra.mxu0 %v41
    %77 = vmatprep.subr.mxu0 0.0
    %78 = vmatpush1.msra.mxu0 %v42
    %79 = vmatprep.subr.mxu0 0.0
    %80 = vmatpush1.msra.mxu0 %v43
    %81 = vmatprep.subr.mxu0 0.0
    %82 = vmatpush1.msra.mxu0 %v44
    %83 = vmatprep.subr.mxu0 0.0
    %84 = vmatpush1.msra.mxu0 %v45
    %85 = vmatprep.subr.mxu0 0.0
    %86 = vmatpush1.msra.mxu0 %v46
    %87 = vmatprep.subr.mxu0 0.0
    %88 = vmatpush1.msra.mxu0 %v47
    %89 = vmatprep.subr.mxu0 0.0
    %90 = vmatpush1.msra.mxu0 %v48
    %91 = vmatprep.subr.mxu0 0.0
    %92 = vmatpush1.msra.mxu0 %v49
    %93 = vmatprep.subr.mxu0 0.0
    %94 = vmatpush1.msra.mxu0 %v50
    %95 = vmatprep.subr.mxu0 0.0
    %96 = vmatpush1.msra.mxu0 0.0
    %97 = vmatprep.subr.mxu0 0.0
    %98 = vmatpush1.msra.mxu0 0.0
    %99 = vmatprep.subr.mxu0 0.0
    %100 = vmatpush1.msra.mxu0 0.0
    %101 = vmatprep.subr.mxu0 0.0
    %102 = vmatpush1.msra.mxu0 0.0
    %103 = vmatprep.subr.mxu0 0.0
    %104 = vmatpush1.msra.mxu0 0.0
    %105 = vmatprep.subr.mxu0 0.0
    %106 = vmatpush1.msra.mxu0 0.0
    %107 = vmatprep.subr.mxu0 0.0
    %108 = vmatpush1.msra.mxu0 0.0
    %109 = vmatprep.subr.mxu0 0.0
    %110 = vmatpush1.msra.mxu0 0.0
    %111 = vmatprep.subr.mxu0 0.0
    %112 = vmatpush1.msra.mxu0 0.0
    %113 = vmatprep.subr.mxu0 0.0
    %114 = vmatpush1.msra.mxu0 0.0
    %115 = vmatprep.subr.mxu0 0.0
    %116 = vmatpush1.msra.mxu0 0.0
    %117 = vmatprep.subr.mxu0 0.0
    %118 = vmatpush1.msra.mxu0 0.0
    %119 = vmatprep.subr.mxu0 0.0
    %120 = vmatpush1.msra.mxu0 0.0
    %121 = vmatprep.subr.mxu0 0.0
    %122 = vmatpush1.msra.mxu0 0.0
    %123 = vmatprep.subr.mxu0 0.0
    %124 = vmatpush1.msra.mxu0 0.0
    %125 = vmatprep.subr.mxu0 0.0
    %126 = vmatpush1.msra.mxu0 0.0
    %127 = vmatprep.mubr.f32.mxu0 0.0
    %128 = vmatmul.mubr.f32.gmra.mrb[0].mxu0 %v61
    %v129 = vpop.f32.mrb[0].mxu0
    %v130 = vadd.f32 %v56, %v129
    %v131 = vpop.f32.mrb[0].mxu0
    %132 = vdwg.mxu0
    %vm133 = vcmask 74752
    %134 = vst.msk [vmem:[#allocation2] sm:$0x3] %vm133, %v130
    // Predicated region
    $region14: #{mlpmixer_forward.5} parent=1 // pred_check
      _
    $region15: #{mlpmixer_forward.5} parent=1 // pred_check_branch
      %136 = sbr.rel (0) target = $region17
    $region16: #{mlpmixer_forward.5} parent=1 // pred_region
      %s138 = ssub.s32 32, 32
      %139 = vsyncadd [#allocation3], %s138
      %s141 = sshll.u32 [#allocation2], 4
      %s142 = int_to_ptr.vmem [resolvable:$true] %s141
      %144 = dma.vmem_to_hbm [thread:$0]  %s142, 32, %s3, [#allocation3]
    $region17: #{mlpmixer_forward.5} parent=1 // pred_fallthru
      _
    // Predicated region
    $region18: #{mlpmixer_forward.5} parent=1 // pred_check
      _
    $region19: #{mlpmixer_forward.5} parent=1 // pred_check_branch
      %146 = sbr.rel (0) target = $region21
    $region20: #{mlpmixer_forward.5} parent=1 // pred_region
      %147 = dma.done [#allocation3], 32
    $region21: #{mlpmixer_forward.5} parent=1 // pred_fallthru
      _
    %148 = vsyncpa [#allocation3], 1

// kernel: mlpmixer_forward.4
$region0: #{mlpmixer_forward.4}
  #allocation0 [shape = 'u32[]', space=smem, size = 0x4, offset = 0x4, fixed_abs, tag = 'smem constant byte address 0x4 - core index']
  #allocation1 [shape = 'u32[144,128]{1,0:T(1,128)}', space=vmem, size = 0x12000, scoped, tag = 'internal scratch']
  %s0 = inlined_call_operand.vmem [shape: f32[2,16,128], index: 0, kind: input, shape index: {}]
  %s1 = inlined_call_operand.vmem [shape: f32[1,128], index: 1, kind: input, shape index: {}]
  %s2 = inlined_call_operand.vmem [shape: f32[1,128], index: 2, kind: input, shape index: {}]
  %s3 = inlined_call_operand.vmem [shape: bf16[16,128], index: 3, kind: input, shape index: {}]
  %s4 = inlined_call_operand.vmem [shape: f32[1,128], index: 4, kind: input, shape index: {}]
  %s5 = inlined_call_operand.vmem [shape: bf16[128,16], index: 5, kind: input, shape index: {}]
  %s6 = inlined_call_operand.vmem [shape: f32[1,16], index: 6, kind: input, shape index: {}]
  %s7 = inlined_call_operand.vmem [shape: f32[1,128], index: 7, kind: input, shape index: {}]
  %s8 = inlined_call_operand.vmem [shape: f32[1,128], index: 8, kind: input, shape index: {}]
  %s9 = inlined_call_operand.vmem [shape: bf16[128,128], index: 9, kind: input, shape index: {}]
  %s10 = inlined_call_operand.vmem [shape: f32[1,128], index: 10, kind: input, shape index: {}]
  %s11 = inlined_call_operand.vmem [shape: bf16[128,128], index: 11, kind: input, shape index: {}]
  %s12 = inlined_call_operand.vmem [shape: f32[1,128], index: 12, kind: input, shape index: {}]
  %s13 = inlined_call_operand.vmem [shape: f32[1,128], index: 13, kind: input, shape index: {}]
  %s14 = inlined_call_operand.vmem [shape: f32[1,128], index: 14, kind: input, shape index: {}]
  %s15 = inlined_call_operand.vmem [shape: bf16[16,128], index: 15, kind: input, shape index: {}]
  %s16 = inlined_call_operand.vmem [shape: f32[1,128], index: 16, kind: input, shape index: {}]
  %s17 = inlined_call_operand.vmem [shape: bf16[128,16], index: 17, kind: input, shape index: {}]
  %s18 = inlined_call_operand.vmem [shape: f32[1,16], index: 18, kind: input, shape index: {}]
  %s19 = inlined_call_operand.vmem [shape: f32[1,128], index: 19, kind: input, shape index: {}]
  %s20 = inlined_call_operand.vmem [shape: f32[1,128], index: 20, kind: input, shape index: {}]
  %s21 = inlined_call_operand.vmem [shape: bf16[128,128], index: 21, kind: input, shape index: {}]
  %s22 = inlined_call_operand.vmem [shape: f32[1,128], index: 22, kind: input, shape index: {}]
  %s23 = inlined_call_operand.vmem [shape: bf16[128,128], index: 23, kind: input, shape index: {}]
  %s24 = inlined_call_operand.vmem [shape: f32[1,128], index: 24, kind: input, shape index: {}]
  %s25 = inlined_call_operand.vmem [shape: f32[2,16,128], index: 25, kind: output, shape index: {}]
  %s26 = sld [smem:[#allocation0]]
  $region133: #{mlpmixer_forward.4} parent=0
    _
  %s28 = ssub.s32 1, %s26
  %s29 = scalar_select 0, %s28, %s26
  loop: start=0, step=1, limit=4
  $region2: #{mlpmixer_forward.4} parent=0 // loop_pre_header
    _
  $region3: #{mlpmixer_forward.4} parent=0 // loop_header
    %s31 = sphi 0, %s35
    %p32 = scmp.ge.s32.totalorder %s31, 4
    %s41 = sphi 0, %s43
    %s44 = sphi 0, %s41
    %s45 = sphi 0, %s44
    %s61 = sphi 0, %s45
    %s65 = sphi 0, %s65
    %s67 = sphi 0, %s65
    %s68 = sphi 0, %s67
    %s82 = sphi 0, %s68
    %s86 = sphi 0, %s86
    %s88 = sphi 0, %s86
    %s89 = sphi 0, %s88
    %s103 = sphi 0, %s89
    %s107 = sphi 0, %s107
    %s109 = sphi 0, %s107
    %s110 = sphi 0, %s109
    %s124 = sphi 0, %s110
    %s128 = sphi 0, %s128
    %s130 = sphi 0, %s128
    %s131 = sphi 0, %s130
    %s145 = sphi 0, %s131
    %s149 = sphi 0, %s149
    %s151 = sphi 0, %s149
    %s152 = sphi 0, %s151
    %s166 = sphi 0, %s152
    %s170 = sphi 0, %s170
    %s172 = sphi 0, %s170
    %s173 = sphi 0, %s172
    %s187 = sphi 0, %s173
    %s191 = sphi 0, %s191
    %s193 = sphi 0, %s191
    %s194 = sphi 0, %s193
    %s208 = sphi 0, %s194
    %s212 = sphi 0, %s212
    %s214 = sphi 0, %s212
    %s215 = sphi 0, %s214
    %s229 = sphi 0, %s215
    %s233 = sphi 0, %s233
    %s235 = sphi 0, %s233
    %s236 = sphi 0, %s235
    %s250 = sphi 0, %s236
    %s254 = sphi 0, %s254
    %s256 = sphi 0, %s254
    %s257 = sphi 0, %s256
    %s271 = sphi 0, %s257
    %s275 = sphi 0, %s275
    %s277 = sphi 0, %s275
    %s278 = sphi 0, %s277
    %s292 = sphi 0, %s278
    %s296 = sphi 0, %s296
    %s298 = sphi 0, %s296
    %s299 = sphi 0, %s298
    %s313 = sphi 0, %s299
    %s317 = sphi 0, %s317
    %s319 = sphi 0, %s317
    %s320 = sphi 0, %s319
    %s334 = sphi 0, %s320
    %s338 = sphi 0, %s338
    %s340 = sphi 0, %s338
    %s341 = sphi 0, %s340
    %s355 = sphi 0, %s341
    %s359 = sphi 0, %s359
    %s361 = sphi 0, %s359
    %s362 = sphi 0, %s361
    %s376 = sphi 0, %s362
    %s380 = sphi 0, %s380
    %s382 = sphi 0, %s380
    %s383 = sphi 0, %s382
    %s397 = sphi 0, %s383
    %s401 = sphi 0, %s401
    %s403 = sphi 0, %s401
    %s404 = sphi 0, %s403
    %s418 = sphi 0, %s404
    %s422 = sphi 0, %s422
    %s424 = sphi 0, %s422
    %s425 = sphi 0, %s424
    %s439 = sphi 0, %s425
    %s443 = sphi 0, %s443
    %s445 = sphi 0, %s443
    %s446 = sphi 0, %s445
    %s460 = sphi 0, %s446
    %s464 = sphi 0, %s464
    %s466 = sphi 0, %s464
    %s467 = sphi 0, %s466
    %s481 = sphi 0, %s467
    %s485 = sphi 0, %s485
    %s487 = sphi 0, %s485
    %s488 = sphi 0, %s487
    %s502 = sphi 0, %s488
    %s506 = sphi 0, %s506
    %s508 = sphi 0, %s506
    %s509 = sphi 0, %s508
    %s523 = sphi 0, %s509
    %s527 = sphi 0, %s527
    %s529 = sphi 0, %s527
    %s530 = sphi 0, %s529
    %s544 = sphi 0, %s530
    %s548 = sphi 0, %s548
    %s550 = sphi 0, %s548
    %s551 = sphi 0, %s550
    %s565 = sphi 0, %s551
    %s571 = sphi 0, %s573
    %s574 = sphi 0, %s571
    %s575 = sphi 0, %s574
    %s591 = sphi 0, %s575
  $region4: #{mlpmixer_forward.4} parent=0 // loop_header_branch
    %34 = sbr.rel (%p32) target = $region8
  $region5: #{mlpmixer_forward.4} parent=0 // loop_body
    %s36 = ssub.s32 %s31, 1
    %s37 = ssub.s32 %s31, 2
    %s38 = sadd.s32 %s31, 1
    %s39 = ssub.s32 %s31, %s38
    %p40 = scmp.eq.s32.totalorder %s39, 0
    %s42 = sadd.s32 %s41, 1
    %s43 = scalar_select %p40, %s41, %s42
    %p46 = pneg %p40
    %p47 = scmp.eq.s32.totalorder %s31, 1
    %p48 = por %p46, %p47
    %p49 = scmp.ne.s32.totalorder %s41, %s44
    %p50 = scmp.eq.s32.totalorder %s31, 0
    %p51 = por %p49, %p50
    %p52 = scmp.ne.s32.totalorder %s41, %s44
    %p53 = scmp.eq.s32.totalorder %s36, 1
    %p54 = por %p52, %p53
    %p55 = scmp.ne.s32.totalorder %s44, %s45
    %p56 = scmp.eq.s32.totalorder %s36, 0
    %p57 = por %p55, %p56
    %p58 = scmp.ne.s32.totalorder %s44, %s45
    %p59 = scmp.eq.s32.totalorder %s37, 1
    %p60 = por %p58, %p59
    %p62 = scmp.ne.s32.totalorder %s45, %s61
    %p63 = scmp.eq.s32.totalorder %s37, 0
    %p64 = por %p62, %p63
    %s66 = sadd.s32 %s65, 1
    %p69 = scmp.eq.s32.totalorder %s31, 1
    %p70 = scmp.ne.s32.totalorder %s65, %s67
    %p71 = scmp.eq.s32.totalorder %s31, 0
    %p72 = por %p70, %p71
    %p73 = scmp.ne.s32.totalorder %s65, %s67
    %p74 = scmp.eq.s32.totalorder %s36, 1
    %p75 = por %p73, %p74
    %p76 = scmp.ne.s32.totalorder %s67, %s68
    %p77 = scmp.eq.s32.totalorder %s36, 0
    %p78 = por %p76, %p77
    %p79 = scmp.ne.s32.totalorder %s67, %s68
    %p80 = scmp.eq.s32.totalorder %s37, 1
    %p81 = por %p79, %p80
    %p83 = scmp.ne.s32.totalorder %s68, %s82
    %p84 = scmp.eq.s32.totalorder %s37, 0
    %p85 = por %p83, %p84
    %s87 = sadd.s32 %s86, 1
    %p90 = scmp.eq.s32.totalorder %s31, 1
    %p91 = scmp.ne.s32.totalorder %s86, %s88
    %p92 = scmp.eq.s32.totalorder %s31, 0
    %p93 = por %p91, %p92
    %p94 = scmp.ne.s32.totalorder %s86, %s88
    %p95 = scmp.eq.s32.totalorder %s36, 1
    %p96 = por %p94, %p95
    %p97 = scmp.ne.s32.totalorder %s88, %s89
    %p98 = scmp.eq.s32.totalorder %s36, 0
    %p99 = por %p97, %p98
    %p100 = scmp.ne.s32.totalorder %s88, %s89
    %p101 = scmp.eq.s32.totalorder %s37, 1
    %p102 = por %p100, %p101
    %p104 = scmp.ne.s32.totalorder %s89, %s103
    %p105 = scmp.eq.s32.totalorder %s37, 0
    %p106 = por %p104, %p105
    %s108 = sadd.s32 %s107, 1
    %p111 = scmp.eq.s32.totalorder %s31, 1
    %p112 = scmp.ne.s32.totalorder %s107, %s109
    %p113 = scmp.eq.s32.totalorder %s31, 0
    %p114 = por %p112, %p113
    %p115 = scmp.ne.s32.totalorder %s107, %s109
    %p116 = scmp.eq.s32.totalorder %s36, 1
    %p117 = por %p115, %p116
    %p118 = scmp.ne.s32.totalorder %s109, %s110
    %p119 = scmp.eq.s32.totalorder %s36, 0
    %p120 = por %p118, %p119
    %p121 = scmp.ne.s32.totalorder %s109, %s110
    %p122 = scmp.eq.s32.totalorder %s37, 1
    %p123 = por %p121, %p122
    %p125 = scmp.ne.s32.totalorder %s110, %s124
    %p126 = scmp.eq.s32.totalorder %s37, 0
    %p127 = por %p125, %p126
    %s129 = sadd.s32 %s128, 1
    %p132 = scmp.eq.s32.totalorder %s31, 1
    %p133 = scmp.ne.s32.totalorder %s128, %s130
    %p134 = scmp.eq.s32.totalorder %s31, 0
    %p135 = por %p133, %p134
    %p136 = scmp.ne.s32.totalorder %s128, %s130
    %p137 = scmp.eq.s32.totalorder %s36, 1
    %p138 = por %p136, %p137
    %p139 = scmp.ne.s32.totalorder %s130, %s131
    %p140 = scmp.eq.s32.totalorder %s36, 0
    %p141 = por %p139, %p140
    %p142 = scmp.ne.s32.totalorder %s130, %s131
    %p143 = scmp.eq.s32.totalorder %s37, 1
    %p144 = por %p142, %p143
    %p146 = scmp.ne.s32.totalorder %s131, %s145
    %p147 = scmp.eq.s32.totalorder %s37, 0
    %p148 = por %p146, %p147
    %s150 = sadd.s32 %s149, 1
    %p153 = scmp.eq.s32.totalorder %s31, 1
    %p154 = scmp.ne.s32.totalorder %s149, %s151
    %p155 = scmp.eq.s32.totalorder %s31, 0
    %p156 = por %p154, %p155
    %p157 = scmp.ne.s32.totalorder %s149, %s151
    %p158 = scmp.eq.s32.totalorder %s36, 1
    %p159 = por %p157, %p158
    %p160 = scmp.ne.s32.totalorder %s151, %s152
    %p161 = scmp.eq.s32.totalorder %s36, 0
    %p162 = por %p160, %p161
    %p163 = scmp.ne.s32.totalorder %s151, %s152
    %p164 = scmp.eq.s32.totalorder %s37, 1
    %p165 = por %p163, %p164
    %p167 = scmp.ne.s32.totalorder %s152, %s166
    %p168 = scmp.eq.s32.totalorder %s37, 0
    %p169 = por %p167, %p168
    %s171 = sadd.s32 %s170, 1
    %p174 = scmp.eq.s32.totalorder %s31, 1
    %p175 = scmp.ne.s32.totalorder %s170, %s172
    %p176 = scmp.eq.s32.totalorder %s31, 0
    %p177 = por %p175, %p176
    %p178 = scmp.ne.s32.totalorder %s170, %s172
    %p179 = scmp.eq.s32.totalorder %s36, 1
    %p180 = por %p178, %p179
    %p181 = scmp.ne.s32.totalorder %s172, %s173
    %p182 = scmp.eq.s32.totalorder %s36, 0
    %p183 = por %p181, %p182
    %p184 = scmp.ne.s32.totalorder %s172, %s173
    %p185 = scmp.eq.s32.totalorder %s37, 1
    %p186 = por %p184, %p185
    %p188 = scmp.ne.s32.totalorder %s173, %s187
    %p189 = scmp.eq.s32.totalorder %s37, 0
    %p190 = por %p188, %p189
    %s192 = sadd.s32 %s191, 1
    %p195 = scmp.eq.s32.totalorder %s31, 1
    %p196 = scmp.ne.s32.totalorder %s191, %s193
    %p197 = scmp.eq.s32.totalorder %s31, 0
    %p198 = por %p196, %p197
    %p199 = scmp.ne.s32.totalorder %s191, %s193
    %p200 = scmp.eq.s32.totalorder %s36, 1
    %p201 = por %p199, %p200
    %p202 = scmp.ne.s32.totalorder %s193, %s194
    %p203 = scmp.eq.s32.totalorder %s36, 0
    %p204 = por %p202, %p203
    %p205 = scmp.ne.s32.totalorder %s193, %s194
    %p206 = scmp.eq.s32.totalorder %s37, 1
    %p207 = por %p205, %p206
    %p209 = scmp.ne.s32.totalorder %s194, %s208
    %p210 = scmp.eq.s32.totalorder %s37, 0
    %p211 = por %p209, %p210
    %s213 = sadd.s32 %s212, 1
    %p216 = scmp.eq.s32.totalorder %s31, 1
    %p217 = scmp.ne.s32.totalorder %s212, %s214
    %p218 = scmp.eq.s32.totalorder %s31, 0
    %p219 = por %p217, %p218
    %p220 = scmp.ne.s32.totalorder %s212, %s214
    %p221 = scmp.eq.s32.totalorder %s36, 1
    %p222 = por %p220, %p221
    %p223 = scmp.ne.s32.totalorder %s214, %s215
    %p224 = scmp.eq.s32.totalorder %s36, 0
    %p225 = por %p223, %p224
    %p226 = scmp.ne.s32.totalorder %s214, %s215
    %p227 = scmp.eq.s32.totalorder %s37, 1
    %p228 = por %p226, %p227
    %p230 = scmp.ne.s32.totalorder %s215, %s229
    %p231 = scmp.eq.s32.totalorder %s37, 0
    %p232 = por %p230, %p231
    %s234 = sadd.s32 %s233, 1
    %p237 = scmp.eq.s32.totalorder %s31, 1
    %p238 = scmp.ne.s32.totalorder %s233, %s235
    %p239 = scmp.eq.s32.totalorder %s31, 0
    %p240 = por %p238, %p239
    %p241 = scmp.ne.s32.totalorder %s233, %s235
    %p242 = scmp.eq.s32.totalorder %s36, 1
    %p243 = por %p241, %p242
    %p244 = scmp.ne.s32.totalorder %s235, %s236
    %p245 = scmp.eq.s32.totalorder %s36, 0
    %p246 = por %p244, %p245
    %p247 = scmp.ne.s32.totalorder %s235, %s236
    %p248 = scmp.eq.s32.totalorder %s37, 1
    %p249 = por %p247, %p248
    %p251 = scmp.ne.s32.totalorder %s236, %s250
    %p252 = scmp.eq.s32.totalorder %s37, 0
    %p253 = por %p251, %p252
    %s255 = sadd.s32 %s254, 1
    %p258 = scmp.eq.s32.totalorder %s31, 1
    %p259 = scmp.ne.s32.totalorder %s254, %s256
    %p260 = scmp.eq.s32.totalorder %s31, 0
    %p261 = por %p259, %p260
    %p262 = scmp.ne.s32.totalorder %s254, %s256
    %p263 = scmp.eq.s32.totalorder %s36, 1
    %p264 = por %p262, %p263
    %p265 = scmp.ne.s32.totalorder %s256, %s257
    %p266 = scmp.eq.s32.totalorder %s36, 0
    %p267 = por %p265, %p266
    %p268 = scmp.ne.s32.totalorder %s256, %s257
    %p269 = scmp.eq.s32.totalorder %s37, 1
    %p270 = por %p268, %p269
    %p272 = scmp.ne.s32.totalorder %s257, %s271
    %p273 = scmp.eq.s32.totalorder %s37, 0
    %p274 = por %p272, %p273
    %s276 = sadd.s32 %s275, 1
    %p279 = scmp.eq.s32.totalorder %s31, 1
    %p280 = scmp.ne.s32.totalorder %s275, %s277
    %p281 = scmp.eq.s32.totalorder %s31, 0
    %p282 = por %p280, %p281
    %p283 = scmp.ne.s32.totalorder %s275, %s277
    %p284 = scmp.eq.s32.totalorder %s36, 1
    %p285 = por %p283, %p284
    %p286 = scmp.ne.s32.totalorder %s277, %s278
    %p287 = scmp.eq.s32.totalorder %s36, 0
    %p288 = por %p286, %p287
    %p289 = scmp.ne.s32.totalorder %s277, %s278
    %p290 = scmp.eq.s32.totalorder %s37, 1
    %p291 = por %p289, %p290
    %p293 = scmp.ne.s32.totalorder %s278, %s292
    %p294 = scmp.eq.s32.totalorder %s37, 0
    %p295 = por %p293, %p294
    %s297 = sadd.s32 %s296, 1
    %p300 = scmp.eq.s32.totalorder %s31, 1
    %p301 = scmp.ne.s32.totalorder %s296, %s298
    %p302 = scmp.eq.s32.totalorder %s31, 0
    %p303 = por %p301, %p302
    %p304 = scmp.ne.s32.totalorder %s296, %s298
    %p305 = scmp.eq.s32.totalorder %s36, 1
    %p306 = por %p304, %p305
    %p307 = scmp.ne.s32.totalorder %s298, %s299
    %p308 = scmp.eq.s32.totalorder %s36, 0
    %p309 = por %p307, %p308
    %p310 = scmp.ne.s32.totalorder %s298, %s299
    %p311 = scmp.eq.s32.totalorder %s37, 1
    %p312 = por %p310, %p311
    %p314 = scmp.ne.s32.totalorder %s299, %s313
    %p315 = scmp.eq.s32.totalorder %s37, 0
    %p316 = por %p314, %p315
    %s318 = sadd.s32 %s317, 1
    %p321 = scmp.eq.s32.totalorder %s31, 1
    %p322 = scmp.ne.s32.totalorder %s317, %s319
    %p323 = scmp.eq.s32.totalorder %s31, 0
    %p324 = por %p322, %p323
    %p325 = scmp.ne.s32.totalorder %s317, %s319
    %p326 = scmp.eq.s32.totalorder %s36, 1
    %p327 = por %p325, %p326
    %p328 = scmp.ne.s32.totalorder %s319, %s320
    %p329 = scmp.eq.s32.totalorder %s36, 0
    %p330 = por %p328, %p329
    %p331 = scmp.ne.s32.totalorder %s319, %s320
    %p332 = scmp.eq.s32.totalorder %s37, 1
    %p333 = por %p331, %p332
    %p335 = scmp.ne.s32.totalorder %s320, %s334
    %p336 = scmp.eq.s32.totalorder %s37, 0
    %p337 = por %p335, %p336
    %s339 = sadd.s32 %s338, 1
    %p342 = scmp.eq.s32.totalorder %s31, 1
    %p343 = scmp.ne.s32.totalorder %s338, %s340
    %p344 = scmp.eq.s32.totalorder %s31, 0
    %p345 = por %p343, %p344
    %p346 = scmp.ne.s32.totalorder %s338, %s340
    %p347 = scmp.eq.s32.totalorder %s36, 1
    %p348 = por %p346, %p347
    %p349 = scmp.ne.s32.totalorder %s340, %s341
    %p350 = scmp.eq.s32.totalorder %s36, 0
    %p351 = por %p349, %p350
    %p352 = scmp.ne.s32.totalorder %s340, %s341
    %p353 = scmp.eq.s32.totalorder %s37, 1
    %p354 = por %p352, %p353
    %p356 = scmp.ne.s32.totalorder %s341, %s355
    %p357 = scmp.eq.s32.totalorder %s37, 0
    %p358 = por %p356, %p357
    %s360 = sadd.s32 %s359, 1
    %p363 = scmp.eq.s32.totalorder %s31, 1
    %p364 = scmp.ne.s32.totalorder %s359, %s361
    %p365 = scmp.eq.s32.totalorder %s31, 0
    %p366 = por %p364, %p365
    %p367 = scmp.ne.s32.totalorder %s359, %s361
    %p368 = scmp.eq.s32.totalorder %s36, 1
    %p369 = por %p367, %p368
    %p370 = scmp.ne.s32.totalorder %s361, %s362
    %p371 = scmp.eq.s32.totalorder %s36, 0
    %p372 = por %p370, %p371
    %p373 = scmp.ne.s32.totalorder %s361, %s362
    %p374 = scmp.eq.s32.totalorder %s37, 1
    %p375 = por %p373, %p374
    %p377 = scmp.ne.s32.totalorder %s362, %s376
    %p378 = scmp.eq.s32.totalorder %s37, 0
    %p379 = por %p377, %p378
    %s381 = sadd.s32 %s380, 1
    %p384 = scmp.eq.s32.totalorder %s31, 1
    %p385 = scmp.ne.s32.totalorder %s380, %s382
    %p386 = scmp.eq.s32.totalorder %s31, 0
    %p387 = por %p385, %p386
    %p388 = scmp.ne.s32.totalorder %s380, %s382
    %p389 = scmp.eq.s32.totalorder %s36, 1
    %p390 = por %p388, %p389
    %p391 = scmp.ne.s32.totalorder %s382, %s383
    %p392 = scmp.eq.s32.totalorder %s36, 0
    %p393 = por %p391, %p392
    %p394 = scmp.ne.s32.totalorder %s382, %s383
    %p395 = scmp.eq.s32.totalorder %s37, 1
    %p396 = por %p394, %p395
    %p398 = scmp.ne.s32.totalorder %s383, %s397
    %p399 = scmp.eq.s32.totalorder %s37, 0
    %p400 = por %p398, %p399
    %s402 = sadd.s32 %s401, 1
    %p405 = scmp.eq.s32.totalorder %s31, 1
    %p406 = scmp.ne.s32.totalorder %s401, %s403
    %p407 = scmp.eq.s32.totalorder %s31, 0
    %p408 = por %p406, %p407
    %p409 = scmp.ne.s32.totalorder %s401, %s403
    %p410 = scmp.eq.s32.totalorder %s36, 1
    %p411 = por %p409, %p410
    %p412 = scmp.ne.s32.totalorder %s403, %s404
    %p413 = scmp.eq.s32.totalorder %s36, 0
    %p414 = por %p412, %p413
    %p415 = scmp.ne.s32.totalorder %s403, %s404
    %p416 = scmp.eq.s32.totalorder %s37, 1
    %p417 = por %p415, %p416
    %p419 = scmp.ne.s32.totalorder %s404, %s418
    %p420 = scmp.eq.s32.totalorder %s37, 0
    %p421 = por %p419, %p420
    %s423 = sadd.s32 %s422, 1
    %p426 = scmp.eq.s32.totalorder %s31, 1
    %p427 = scmp.ne.s32.totalorder %s422, %s424
    %p428 = scmp.eq.s32.totalorder %s31, 0
    %p429 = por %p427, %p428
    %p430 = scmp.ne.s32.totalorder %s422, %s424
    %p431 = scmp.eq.s32.totalorder %s36, 1
    %p432 = por %p430, %p431
    %p433 = scmp.ne.s32.totalorder %s424, %s425
    %p434 = scmp.eq.s32.totalorder %s36, 0
    %p435 = por %p433, %p434
    %p436 = scmp.ne.s32.totalorder %s424, %s425
    %p437 = scmp.eq.s32.totalorder %s37, 1
    %p438 = por %p436, %p437
    %p440 = scmp.ne.s32.totalorder %s425, %s439
    %p441 = scmp.eq.s32.totalorder %s37, 0
    %p442 = por %p440, %p441
    %s444 = sadd.s32 %s443, 1
    %p447 = scmp.eq.s32.totalorder %s31, 1
    %p448 = scmp.ne.s32.totalorder %s443, %s445
    %p449 = scmp.eq.s32.totalorder %s31, 0
    %p450 = por %p448, %p449
    %p451 = scmp.ne.s32.totalorder %s443, %s445
    %p452 = scmp.eq.s32.totalorder %s36, 1
    %p453 = por %p451, %p452
    %p454 = scmp.ne.s32.totalorder %s445, %s446
    %p455 = scmp.eq.s32.totalorder %s36, 0
    %p456 = por %p454, %p455
    %p457 = scmp.ne.s32.totalorder %s445, %s446
    %p458 = scmp.eq.s32.totalorder %s37, 1
    %p459 = por %p457, %p458
    %p461 = scmp.ne.s32.totalorder %s446, %s460
    %p462 = scmp.eq.s32.totalorder %s37, 0
    %p463 = por %p461, %p462
    %s465 = sadd.s32 %s464, 1
    %p468 = scmp.eq.s32.totalorder %s31, 1
    %p469 = scmp.ne.s32.totalorder %s464, %s466
    %p470 = scmp.eq.s32.totalorder %s31, 0
    %p471 = por %p469, %p470
    %p472 = scmp.ne.s32.totalorder %s464, %s466
    %p473 = scmp.eq.s32.totalorder %s36, 1
    %p474 = por %p472, %p473
    %p475 = scmp.ne.s32.totalorder %s466, %s467
    %p476 = scmp.eq.s32.totalorder %s36, 0
    %p477 = por %p475, %p476
    %p478 = scmp.ne.s32.totalorder %s466, %s467
    %p479 = scmp.eq.s32.totalorder %s37, 1
    %p480 = por %p478, %p479
    %p482 = scmp.ne.s32.totalorder %s467, %s481
    %p483 = scmp.eq.s32.totalorder %s37, 0
    %p484 = por %p482, %p483
    %s486 = sadd.s32 %s485, 1
    %p489 = scmp.eq.s32.totalorder %s31, 1
    %p490 = scmp.ne.s32.totalorder %s485, %s487
    %p491 = scmp.eq.s32.totalorder %s31, 0
    %p492 = por %p490, %p491
    %p493 = scmp.ne.s32.totalorder %s485, %s487
    %p494 = scmp.eq.s32.totalorder %s36, 1
    %p495 = por %p493, %p494
    %p496 = scmp.ne.s32.totalorder %s487, %s488
    %p497 = scmp.eq.s32.totalorder %s36, 0
    %p498 = por %p496, %p497
    %p499 = scmp.ne.s32.totalorder %s487, %s488
    %p500 = scmp.eq.s32.totalorder %s37, 1
    %p501 = por %p499, %p500
    %p503 = scmp.ne.s32.totalorder %s488, %s502
    %p504 = scmp.eq.s32.totalorder %s37, 0
    %p505 = por %p503, %p504
    %s507 = sadd.s32 %s506, 1
    %p510 = scmp.eq.s32.totalorder %s31, 1
    %p511 = scmp.ne.s32.totalorder %s506, %s508
    %p512 = scmp.eq.s32.totalorder %s31, 0
    %p513 = por %p511, %p512
    %p514 = scmp.ne.s32.totalorder %s506, %s508
    %p515 = scmp.eq.s32.totalorder %s36, 1
    %p516 = por %p514, %p515
    %p517 = scmp.ne.s32.totalorder %s508, %s509
    %p518 = scmp.eq.s32.totalorder %s36, 0
    %p519 = por %p517, %p518
    %p520 = scmp.ne.s32.totalorder %s508, %s509
    %p521 = scmp.eq.s32.totalorder %s37, 1
    %p522 = por %p520, %p521
    %p524 = scmp.ne.s32.totalorder %s509, %s523
    %p525 = scmp.eq.s32.totalorder %s37, 0
    %p526 = por %p524, %p525
    %s528 = sadd.s32 %s527, 1
    %p531 = scmp.eq.s32.totalorder %s31, 1
    %p532 = scmp.ne.s32.totalorder %s527, %s529
    %p533 = scmp.eq.s32.totalorder %s31, 0
    %p534 = por %p532, %p533
    %p535 = scmp.ne.s32.totalorder %s527, %s529
    %p536 = scmp.eq.s32.totalorder %s36, 1
    %p537 = por %p535, %p536
    %p538 = scmp.ne.s32.totalorder %s529, %s530
    %p539 = scmp.eq.s32.totalorder %s36, 0
    %p540 = por %p538, %p539
    %p541 = scmp.ne.s32.totalorder %s529, %s530
    %p542 = scmp.eq.s32.totalorder %s37, 1
    %p543 = por %p541, %p542
    %p545 = scmp.ne.s32.totalorder %s530, %s544
    %p546 = scmp.eq.s32.totalorder %s37, 0
    %p547 = por %p545, %p546
    %s549 = sadd.s32 %s548, 1
    %p552 = scmp.eq.s32.totalorder %s31, 1
    %p553 = scmp.ne.s32.totalorder %s548, %s550
    %p554 = scmp.eq.s32.totalorder %s31, 0
    %p555 = por %p553, %p554
    %p556 = scmp.ne.s32.totalorder %s548, %s550
    %p557 = scmp.eq.s32.totalorder %s36, 1
    %p558 = por %p556, %p557
    %p559 = scmp.ne.s32.totalorder %s550, %s551
    %p560 = scmp.eq.s32.totalorder %s36, 0
    %p561 = por %p559, %p560
    %p562 = scmp.ne.s32.totalorder %s550, %s551
    %p563 = scmp.eq.s32.totalorder %s37, 1
    %p564 = por %p562, %p563
    %p566 = scmp.ne.s32.totalorder %s551, %s565
    %p567 = scmp.eq.s32.totalorder %s37, 0
    %p568 = por %p566, %p567
    %s569 = ssub.s32 %s31, %s38
    %p570 = scmp.eq.s32.totalorder %s569, 0
    %s572 = sadd.s32 %s571, 1
    %s573 = scalar_select %p570, %s571, %s572
    %p576 = pneg %p570
    %p577 = scmp.eq.s32.totalorder %s31, 1
    %p578 = por %p576, %p577
    %p579 = scmp.ne.s32.totalorder %s571, %s574
    %p580 = scmp.eq.s32.totalorder %s31, 0
    %p581 = por %p579, %p580
    %p582 = scmp.ne.s32.totalorder %s571, %s574
    %p583 = scmp.eq.s32.totalorder %s36, 1
    %p584 = por %p582, %p583
    %p585 = scmp.ne.s32.totalorder %s574, %s575
    %p586 = scmp.eq.s32.totalorder %s36, 0
    %p587 = por %p585, %p586
    %p588 = scmp.ne.s32.totalorder %s574, %s575
    %p589 = scmp.eq.s32.totalorder %s37, 1
    %p590 = por %p588, %p589
    %p592 = scmp.ne.s32.totalorder %s575, %s591
    %p593 = scmp.eq.s32.totalorder %s37, 0
    %p594 = por %p592, %p593
    %p595 = scmp.le.s32.totalorder 1, %s31
    %p596 = scmp.lt.s32.totalorder %s31, 3
    %p597 = pnand %p595, %p596
    %p598 = pneg %p597
    // Predicated region
    $region9: #{mlpmixer_forward.4} parent=5 // pred_check
      _
    $region10: #{mlpmixer_forward.4} parent=5 // pred_check_branch
      %600 = sbr.rel (%p597) target = $region12
    $region11: #{mlpmixer_forward.4} parent=5 // pred_region
      %s601 = ssub.s32 %s31, 1
      // Predicated region
      $region13: #{mlpmixer_forward.4} parent=11 // pred_check
        %p602 = pneg %p78
      $region14: #{mlpmixer_forward.4} parent=11 // pred_check_branch
        %604 = sbr.rel (%p602) target = $region16
      $region15: #{mlpmixer_forward.4} parent=11 // pred_region
        _
      $region16: #{mlpmixer_forward.4} parent=11 // pred_fallthru
        _
      // Predicated region
      $region17: #{mlpmixer_forward.4} parent=11 // pred_check
        %p605 = pneg %p99
      $region18: #{mlpmixer_forward.4} parent=11 // pred_check_branch
        %607 = sbr.rel (%p605) target = $region20
      $region19: #{mlpmixer_forward.4} parent=11 // pred_region
        _
      $region20: #{mlpmixer_forward.4} parent=11 // pred_fallthru
        _
      // Predicated region
      $region21: #{mlpmixer_forward.4} parent=11 // pred_check
        %p608 = pneg %p120
      $region22: #{mlpmixer_forward.4} parent=11 // pred_check_branch
        %610 = sbr.rel (%p608) target = $region24
      $region23: #{mlpmixer_forward.4} parent=11 // pred_region
        _
      $region24: #{mlpmixer_forward.4} parent=11 // pred_fallthru
        _
      // Predicated region
      $region25: #{mlpmixer_forward.4} parent=11 // pred_check
        %p611 = pneg %p141
      $region26: #{mlpmixer_forward.4} parent=11 // pred_check_branch
        %613 = sbr.rel (%p611) target = $region28
      $region27: #{mlpmixer_forward.4} parent=11 // pred_region
        _
      $region28: #{mlpmixer_forward.4} parent=11 // pred_fallthru
        _
      // Predicated region
      $region29: #{mlpmixer_forward.4} parent=11 // pred_check
        %p614 = pneg %p162
      $region30: #{mlpmixer_forward.4} parent=11 // pred_check_branch
        %616 = sbr.rel (%p614) target = $region32
      $region31: #{mlpmixer_forward.4} parent=11 // pred_region
        _
      $region32: #{mlpmixer_forward.4} parent=11 // pred_fallthru
        _
      // Predicated region
      $region33: #{mlpmixer_forward.4} parent=11 // pred_check
        %p617 = pneg %p183
      $region34: #{mlpmixer_forward.4} parent=11 // pred_check_branch
        %619 = sbr.rel (%p617) target = $region36
      $region35: #{mlpmixer_forward.4} parent=11 // pred_region
        _
      $region36: #{mlpmixer_forward.4} parent=11 // pred_fallthru
        _
      // Predicated region
      $region37: #{mlpmixer_forward.4} parent=11 // pred_check
        %p620 = pneg %p204
      $region38: #{mlpmixer_forward.4} parent=11 // pred_check_branch
        %622 = sbr.rel (%p620) target = $region40
      $region39: #{mlpmixer_forward.4} parent=11 // pred_region
        _
      $region40: #{mlpmixer_forward.4} parent=11 // pred_fallthru
        _
      // Predicated region
      $region41: #{mlpmixer_forward.4} parent=11 // pred_check
        %p623 = pneg %p225
      $region42: #{mlpmixer_forward.4} parent=11 // pred_check_branch
        %625 = sbr.rel (%p623) target = $region44
      $region43: #{mlpmixer_forward.4} parent=11 // pred_region
        _
      $region44: #{mlpmixer_forward.4} parent=11 // pred_fallthru
        _
      // Predicated region
      $region45: #{mlpmixer_forward.4} parent=11 // pred_check
        %p626 = pneg %p246
      $region46: #{mlpmixer_forward.4} parent=11 // pred_check_branch
        %628 = sbr.rel (%p626) target = $region48
      $region47: #{mlpmixer_forward.4} parent=11 // pred_region
        _
      $region48: #{mlpmixer_forward.4} parent=11 // pred_fallthru
        _
      // Predicated region
      $region49: #{mlpmixer_forward.4} parent=11 // pred_check
        %p629 = pneg %p267
      $region50: #{mlpmixer_forward.4} parent=11 // pred_check_branch
        %631 = sbr.rel (%p629) target = $region52
      $region51: #{mlpmixer_forward.4} parent=11 // pred_region
        _
      $region52: #{mlpmixer_forward.4} parent=11 // pred_fallthru
        _
      // Predicated region
      $region53: #{mlpmixer_forward.4} parent=11 // pred_check
        %p632 = pneg %p288
      $region54: #{mlpmixer_forward.4} parent=11 // pred_check_branch
        %634 = sbr.rel (%p632) target = $region56
      $region55: #{mlpmixer_forward.4} parent=11 // pred_region
        _
      $region56: #{mlpmixer_forward.4} parent=11 // pred_fallthru
        _
      // Predicated region
      $region57: #{mlpmixer_forward.4} parent=11 // pred_check
        %p635 = pneg %p309
      $region58: #{mlpmixer_forward.4} parent=11 // pred_check_branch
        %637 = sbr.rel (%p635) target = $region60
      $region59: #{mlpmixer_forward.4} parent=11 // pred_region
        _
      $region60: #{mlpmixer_forward.4} parent=11 // pred_fallthru
        _
      // Predicated region
      $region61: #{mlpmixer_forward.4} parent=11 // pred_check
        %p638 = pneg %p330
      $region62: #{mlpmixer_forward.4} parent=11 // pred_check_branch
        %640 = sbr.rel (%p638) target = $region64
      $region63: #{mlpmixer_forward.4} parent=11 // pred_region
        _
      $region64: #{mlpmixer_forward.4} parent=11 // pred_fallthru
        _
      // Predicated region
      $region65: #{mlpmixer_forward.4} parent=11 // pred_check
        %p641 = pneg %p351
      $region66: #{mlpmixer_forward.4} parent=11 // pred_check_branch
        %643 = sbr.rel (%p641) target = $region68
      $region67: #{mlpmixer_forward.4} parent=11 // pred_region
        _
      $region68: #{mlpmixer_forward.4} parent=11 // pred_fallthru
        _
      // Predicated region
      $region69: #{mlpmixer_forward.4} parent=11 // pred_check
        %p644 = pneg %p372
      $region70: #{mlpmixer_forward.4} parent=11 // pred_check_branch
        %646 = sbr.rel (%p644) target = $region72
      $region71: #{mlpmixer_forward.4} parent=11 // pred_region
        _
      $region72: #{mlpmixer_forward.4} parent=11 // pred_fallthru
        _
      // Predicated region
      $region73: #{mlpmixer_forward.4} parent=11 // pred_check
        %p647 = pneg %p393
      $region74: #{mlpmixer_forward.4} parent=11 // pred_check_branch
        %649 = sbr.rel (%p647) target = $region76
      $region75: #{mlpmixer_forward.4} parent=11 // pred_region
        _
      $region76: #{mlpmixer_forward.4} parent=11 // pred_fallthru
        _
      // Predicated region
      $region77: #{mlpmixer_forward.4} parent=11 // pred_check
        %p650 = pneg %p414
      $region78: #{mlpmixer_forward.4} parent=11 // pred_check_branch
        %652 = sbr.rel (%p650) target = $region80
      $region79: #{mlpmixer_forward.4} parent=11 // pred_region
        _
      $region80: #{mlpmixer_forward.4} parent=11 // pred_fallthru
        _
      // Predicated region
      $region81: #{mlpmixer_forward.4} parent=11 // pred_check
        %p653 = pneg %p435
      $region82: #{mlpmixer_forward.4} parent=11 // pred_check_branch
        %655 = sbr.rel (%p653) target = $region84
      $region83: #{mlpmixer_forward.4} parent=11 // pred_region
        _
      $region84: #{mlpmixer_forward.4} parent=11 // pred_fallthru
        _
      // Predicated region
      $region85: #{mlpmixer_forward.4} parent=11 // pred_check
        %p656 = pneg %p456
      $region86: #{mlpmixer_forward.4} parent=11 // pred_check_branch
        %658 = sbr.rel (%p656) target = $region88
      $region87: #{mlpmixer_forward.4} parent=11 // pred_region
        _
      $region88: #{mlpmixer_forward.4} parent=11 // pred_fallthru
        _
      // Predicated region
      $region89: #{mlpmixer_forward.4} parent=11 // pred_check
        %p659 = pneg %p477
      $region90: #{mlpmixer_forward.4} parent=11 // pred_check_branch
        %661 = sbr.rel (%p659) target = $region92
      $region91: #{mlpmixer_forward.4} parent=11 // pred_region
        _
      $region92: #{mlpmixer_forward.4} parent=11 // pred_fallthru
        _
      // Predicated region
      $region93: #{mlpmixer_forward.4} parent=11 // pred_check
        %p662 = pneg %p498
      $region94: #{mlpmixer_forward.4} parent=11 // pred_check_branch
        %664 = sbr.rel (%p662) target = $region96
      $region95: #{mlpmixer_forward.4} parent=11 // pred_region
        _
      $region96: #{mlpmixer_forward.4} parent=11 // pred_fallthru
        _
      // Predicated region
      $region97: #{mlpmixer_forward.4} parent=11 // pred_check
        %p665 = pneg %p519
      $region98: #{mlpmixer_forward.4} parent=11 // pred_check_branch
        %667 = sbr.rel (%p665) target = $region100
      $region99: #{mlpmixer_forward.4} parent=11 // pred_region
        _
      $region100: #{mlpmixer_forward.4} parent=11 // pred_fallthru
        _
      // Predicated region
      $region101: #{mlpmixer_forward.4} parent=11 // pred_check
        %p668 = pneg %p540
      $region102: #{mlpmixer_forward.4} parent=11 // pred_check_branch
        %670 = sbr.rel (%p668) target = $region104
      $region103: #{mlpmixer_forward.4} parent=11 // pred_region
        _
      $region104: #{mlpmixer_forward.4} parent=11 // pred_fallthru
        _
      // Predicated region
      $region105: #{mlpmixer_forward.4} parent=11 // pred_check
        %p671 = pneg %p561
      $region106: #{mlpmixer_forward.4} parent=11 // pred_check_branch
        %673 = sbr.rel (%p671) target = $region108
      $region107: #{mlpmixer_forward.4} parent=11 // pred_region
        _
      $region108: #{mlpmixer_forward.4} parent=11 // pred_fallthru
        _
    $region12: #{mlpmixer_forward.4} parent=5 // pred_fallthru
      _
    %p674 = scmp.lt.s32.totalorder %s31, 2
    // Predicated region
    $region109: #{mlpmixer_forward.4} parent=5 // pred_check
      %p675 = pneg %p674
    $region110: #{mlpmixer_forward.4} parent=5 // pred_check_branch
      %677 = sbr.rel (%p675) target = $region112
    $region111: #{mlpmixer_forward.4} parent=5 // pred_region
      // Predicated region
      $region113: #{mlpmixer_forward.4} parent=111 // pred_check
        %p678 = pneg %p51
      $region114: #{mlpmixer_forward.4} parent=111 // pred_check_branch
        %680 = sbr.rel (%p678) target = $region116
      $region115: #{mlpmixer_forward.4} parent=111 // pred_region
        %p681 = scmp.lt.s32.totalorder %s31, 1
        %s682 = scalar_select %p681, %s31, 1
        %s683 = smul.addr %s682, 2
        %s684 = smul.addr %s683, 8
        %s685 = scalar_lea.vmem %s0, %s684
      $region116: #{mlpmixer_forward.4} parent=111 // pred_fallthru
        _
    $region112: #{mlpmixer_forward.4} parent=5 // pred_fallthru
      _
    %p686 = scmp.le.s32.totalorder 1, %s31
    %p687 = scmp.lt.s32.totalorder %s31, 3
    %p688 = pnand %p686, %p687
    %p689 = pneg %p688
    // Predicated region
    $region117: #{mlpmixer_forward.4} parent=5 // pred_check
      _
    $region118: #{mlpmixer_forward.4} parent=5 // pred_check_branch
      %691 = sbr.rel (%p688) target = $region120
    $region119: #{mlpmixer_forward.4} parent=5 // pred_region
      %s692 = ssub.s32 %s31, 1
      %p693 = scmp.lt.s32.totalorder %s36, 1
      %s694 = scalar_select %p693, %s36, 1
      %s695 = smul.addr %s694, 2
      %s696 = smul.addr %s695, 8
      %s697 = scalar_lea.vmem %s0, %s696
      %p698 = pneg %p57
      %p699 = pneg %p54
      %p700 = pneg %p78
      %p701 = pneg %p75
      %p702 = pneg %p99
      %p703 = pneg %p96
      %p704 = pneg %p120
      %p705 = pneg %p117
      %p706 = pneg %p141
      %p707 = pneg %p138
      %p708 = pneg %p162
      %p709 = pneg %p159
      %p710 = pneg %p183
      %p711 = pneg %p180
      %p712 = pneg %p204
      %p713 = pneg %p201
      %p714 = pneg %p225
      %p715 = pneg %p222
      %p716 = pneg %p246
      %p717 = pneg %p243
      %p718 = pneg %p267
      %p719 = pneg %p264
      %p720 = pneg %p288
      %p721 = pneg %p285
      %p722 = pneg %p309
      %p723 = pneg %p306
      %p724 = pneg %p330
      %p725 = pneg %p327
      %p726 = pneg %p351
      %p727 = pneg %p348
      %p728 = pneg %p372
      %p729 = pneg %p369
      %p730 = pneg %p393
      %p731 = pneg %p390
      %p732 = pneg %p414
      %p733 = pneg %p411
      %p734 = pneg %p435
      %p735 = pneg %p432
      %p736 = pneg %p456
      %p737 = pneg %p453
      %p738 = pneg %p477
      %p739 = pneg %p474
      %p740 = pneg %p498
      %p741 = pneg %p495
      %p742 = pneg %p519
      %p743 = pneg %p516
      %p744 = pneg %p540
      %p745 = pneg %p537
      %p746 = pneg %p561
      %p747 = pneg %p558
      %p748 = pneg %p587
      %p749 = pneg %p584
      %p750 = scmp.lt.s32.totalorder %s36, 1
      %s751 = scalar_select %p750, %s36, 1
      %s752 = smul.addr %s751, 2
      %s753 = smul.addr %s752, 8
      %s754 = scalar_lea.vmem %s25, %s753
      %p755 = scmp.lt.s32.totalorder %s36, 1
      %s756 = scalar_select %p755, %s36, 1
      %s757 = smul.addr %s756, 2
      %s758 = smul.addr %s757, 8
      %s759 = scalar_lea.vmem %s0, %s758
      %p760 = scmp.lt.s32.totalorder %s36, 1
      %s761 = scalar_select %p760, %s36, 1
      %s762 = smul.addr %s761, 2
      %s763 = smul.addr %s762, 8
      %s764 = scalar_lea.vmem %s25, %s763
      %v766 = vld [vmem:[%s759] sm:$0xff]
      %v767 = vld [vmem:[%s759 + $0x8] sm:$0xff]
      %v768 = vld [vmem:[%s1] sm:$0x1]
      %v769 = vld [vmem:[%s2] sm:$0x1]
      %v770 = vlaneseq
      %v771 = vand.u32 %v770, 127
      %vm772 = vcmp.lt.s32.totalorder %v771, 32
      %v773 = vsel %vm772, 1, 0
      %vm774 = vcmp.eq.s32.totalorder %v773, 1
      %v775 = vsel %vm774, %v766, 0.0
      %v776 = vsel %vm774, %v767, 0.0
      %777 = vadd.xlane.f32.xlu0 %v775
      %v778 = vpop.xlane.xlu0 %777
      %779 = vadd.xlane.f32.xlu0 %v776
      %v780 = vpop.xlane.xlu0 %779
      %v781 = vmul.f32 %v778, 0.03125
      %v782 = vmul.f32 %v780, 0.03125
      %v783 = vsub.f32 %v766, %v781
      %v784 = vsub.f32 %v767, %v782
      %v785 = vsel %vm774, %v783, 0.0
      %v786 = vsel %vm774, %v784, 0.0
      %v787 = vmul.f32 %v785, %v785
      %v788 = vmul.f32 %v786, %v786
      %789 = vadd.xlane.f32.xlu0 %v787
      %v790 = vpop.xlane.xlu0 %789
      %791 = vadd.xlane.f32.xlu0 %v788
      %v792 = vpop.xlane.xlu0 %791
      %v793 = vmul.f32 %v790, 0.03125
      %v794 = vmul.f32 %v792, 0.03125
      %v795 = vadd.f32 %v793, 1e-05
      %v796 = vadd.f32 %v794, 1e-05
      %v797 = vrsqrt.pop %v795
      %v798 = vrsqrt.pop %v796
      %v799 = vmul.f32 %v785, %v797
      %v800 = vmul.f32 %v786, %v798
      %v802 = vlaneseq
      %v803 = vshrl.u32 %v802, 7
      %v804 = vsub.s32 0, %v803
      %v805 = vrot.slane %v768, %v804
      %v807 = vmul.f32 %v799, %v805
      %v808 = vmul.f32 %v800, %v805
      %v810 = vlaneseq
      %v811 = vshrl.u32 %v810, 7
      %v812 = vsub.s32 0, %v811
      %v813 = vrot.slane %v769, %v812
      %v815 = vadd.f32 %v807, %v813
      %v816 = vadd.f32 %v808, %v813
      %817 = vxpose.xlu0.b32.start [1/16] %v815, 128
      %818 = vxpose.xlu0.b32.cont [2/16] %v816, 128
      %819 = vxpose.xlu0.b32.cont [3/16] 0.0, 128
      %820 = vxpose.xlu0.b32.cont [4/16] 0.0, 128
      %821 = vxpose.xlu0.b32.cont [5/16] 0.0, 128
      %822 = vxpose.xlu0.b32.cont [6/16] 0.0, 128
      %823 = vxpose.xlu0.b32.cont [7/16] 0.0, 128
      %824 = vxpose.xlu0.b32.cont [8/16] 0.0, 128
      %825 = vxpose.xlu0.b32.cont [9/16] 0.0, 128
      %826 = vxpose.xlu0.b32.cont [10/16] 0.0, 128
      %827 = vxpose.xlu0.b32.cont [11/16] 0.0, 128
      %828 = vxpose.xlu0.b32.cont [12/16] 0.0, 128
      %829 = vxpose.xlu0.b32.cont [13/16] 0.0, 128
      %830 = vxpose.xlu0.b32.cont [14/16] 0.0, 128
      %831 = vxpose.xlu0.b32.cont [15/16] 0.0, 128
      %832 = vxpose.xlu0.b32.end [16/16] 0.0, 128
      %v833 = vpop.trf.xlu0
      %v834 = vpop.trf.xlu0
      %v835 = vpop.trf.xlu0
      %v836 = vpop.trf.xlu0
      %v837 = vpop.trf.xlu0
      %v838 = vpop.trf.xlu0
      %v839 = vpop.trf.xlu0
      %v840 = vpop.trf.xlu0
      %v841 = vpop.trf.xlu0
      %v842 = vpop.trf.xlu0
      %v843 = vpop.trf.xlu0
      %v844 = vpop.trf.xlu0
      %v845 = vpop.trf.xlu0
      %v846 = vpop.trf.xlu0
      %v847 = vpop.trf.xlu0
      %v848 = vpop.trf.xlu0
      %v849 = vpack.c.bf16 %v834, %v833
      %v850 = vpack.c.bf16 %v836, %v835
      %v851 = vpack.c.bf16 %v838, %v837
      %v852 = vpack.c.bf16 %v840, %v839
      %v853 = vpack.c.bf16 %v842, %v841
      %v854 = vpack.c.bf16 %v844, %v843
      %v855 = vpack.c.bf16 %v846, %v845
      %v856 = vpack.c.bf16 %v848, %v847
      %v857 = vld [vmem:[%s3] sm:$0xf]
      %v858 = vld [vmem:[%s3 + $0x4] sm:$0xf]
      %v859 = vld [vmem:[%s4] sm:$0x1]
      %v861 = vlaneseq
      %v862 = vshrl.u32 %v861, 7
      %v863 = vsub.s32 0, %v862
      %v864 = vrot.slane %v859, %v863
      %v868 = vunpack.c.l.b16 %v857
      %v869 = vunpack.c.l.b16 %v858
      %v870 = vpack.c.b16 %v869, %v868
      %vm872 = vcmask 130048
      %v874 = vsel %vm872, %v849, 0
      %v877 = vsel %vm872, %v850, 0
      %v880 = vsel %vm872, %v851, 0
      %v883 = vsel %vm872, %v852, 0
      %v886 = vsel %vm872, %v853, 0
      %v889 = vsel %vm872, %v854, 0
      %v892 = vsel %vm872, %v855, 0
      %v895 = vsel %vm872, %v856, 0
      %897 = vmatprep.subr.bf16.mxu0 0
      %898 = vmatpush1.bf16.msra.mxu0 %v870
      %899 = vmatprep.subr.bf16.mxu0 0
      %900 = vmatpush1.bf16.msra.mxu0 0
      %901 = vmatprep.subr.bf16.mxu0 0
      %902 = vmatpush1.bf16.msra.mxu0 0
      %903 = vmatprep.subr.bf16.mxu0 0
      %904 = vmatpush1.bf16.msra.mxu0 0
      %905 = vmatprep.subr.bf16.mxu0 0
      %906 = vmatpush1.bf16.msra.mxu0 0
      %907 = vmatprep.subr.bf16.mxu0 0
      %908 = vmatpush1.bf16.msra.mxu0 0
      %909 = vmatprep.subr.bf16.mxu0 0
      %910 = vmatpush1.bf16.msra.mxu0 0
      %911 = vmatprep.subr.bf16.mxu0 0
      %912 = vmatpush1.bf16.msra.mxu0 0
      %913 = vmatprep.subr.bf16.mxu0 0
      %914 = vmatpush1.bf16.msra.mxu0 0
      %915 = vmatprep.subr.bf16.mxu0 0
      %916 = vmatpush1.bf16.msra.mxu0 0
      %917 = vmatprep.subr.bf16.mxu0 0
      %918 = vmatpush1.bf16.msra.mxu0 0
      %919 = vmatprep.subr.bf16.mxu0 0
      %920 = vmatpush1.bf16.msra.mxu0 0
      %921 = vmatprep.subr.bf16.mxu0 0
      %922 = vmatpush1.bf16.msra.mxu0 0
      %923 = vmatprep.subr.bf16.mxu0 0
      %924 = vmatpush1.bf16.msra.mxu0 0
      %925 = vmatprep.subr.bf16.mxu0 0
      %926 = vmatpush1.bf16.msra.mxu0 0
      %927 = vmatprep.subr.bf16.mxu0 0
      %928 = vmatpush1.bf16.msra.mxu0 0
      %929 = vmatprep.mubr.bf16.mxu0 0
      %930 = vmatmul.mubr.bf16.gmra.mrb[0].mxu0 %v874
      %v931 = vpop.f32.mrb[0].mxu0
      %v932 = vadd.f32 %v864, %v931
      %v933 = vpop.f32.mrb[0].mxu0
      %v934 = vpop.f32.mrb[0].mxu0
      %v935 = vadd.f32 %v864, %v934
      %v936 = vpop.f32.mrb[0].mxu0
      %937 = vmatprep.mubr.bf16.mxu0 0
      %938 = vmatmul.mubr.bf16.gmra.mrb[0].mxu0 %v877
      %v939 = vpop.f32.mrb[0].mxu0
      %v940 = vadd.f32 %v864, %v939
      %v941 = vpop.f32.mrb[0].mxu0
      %v942 = vpop.f32.mrb[0].mxu0
      %v943 = vadd.f32 %v864, %v942
      %v944 = vpop.f32.mrb[0].mxu0
      %945 = vmatprep.mubr.bf16.mxu0 0
      %946 = vmatmul.mubr.bf16.gmra.mrb[0].mxu0 %v880
      %v947 = vpop.f32.mrb[0].mxu0
      %v948 = vadd.f32 %v864, %v947
      %v949 = vpop.f32.mrb[0].mxu0
      %v950 = vpop.f32.mrb[0].mxu0
      %v951 = vadd.f32 %v864, %v950
      %v952 = vpop.f32.mrb[0].mxu0
      %953 = vmatprep.mubr.bf16.mxu0 0
      %954 = vmatmul.mubr.bf16.gmra.mrb[0].mxu0 %v883
      %v955 = vpop.f32.mrb[0].mxu0
      %v956 = vadd.f32 %v864, %v955
      %v957 = vpop.f32.mrb[0].mxu0
      %v958 = vpop.f32.mrb[0].mxu0
      %v959 = vadd.f32 %v864, %v958
      %v960 = vpop.f32.mrb[0].mxu0
      %961 = vmatprep.mubr.bf16.mxu0 0
      %962 = vmatmul.mubr.bf16.gmra.mrb[0].mxu0 %v886
      %v963 = vpop.f32.mrb[0].mxu0
      %v964 = vadd.f32 %v864, %v963
      %v965 = vpop.f32.mrb[0].mxu0
      %v966 = vpop.f32.mrb[0].mxu0
      %v967 = vadd.f32 %v864, %v966
      %v968 = vpop.f32.mrb[0].mxu0
      %969 = vmatprep.mubr.bf16.mxu0 0
      %970 = vmatmul.mubr.bf16.gmra.mrb[0].mxu0 %v889
      %v971 = vpop.f32.mrb[0].mxu0
      %v972 = vadd.f32 %v864, %v971
      %v973 = vpop.f32.mrb[0].mxu0
      %v974 = vpop.f32.mrb[0].mxu0
      %v975 = vadd.f32 %v864, %v974
      %v976 = vpop.f32.mrb[0].mxu0
      %977 = vmatprep.mubr.bf16.mxu0 0
      %978 = vmatmul.mubr.bf16.gmra.mrb[0].mxu0 %v892
      %v979 = vpop.f32.mrb[0].mxu0
      %v980 = vadd.f32 %v864, %v979
      %v981 = vpop.f32.mrb[0].mxu0
      %v982 = vpop.f32.mrb[0].mxu0
      %v983 = vadd.f32 %v864, %v982
      %v984 = vpop.f32.mrb[0].mxu0
      %985 = vmatprep.mubr.bf16.mxu0 0
      %986 = vmatmul.mubr.bf16.gmra.mrb[0].mxu0 %v895
      %v987 = vpop.f32.mrb[0].mxu0
      %v988 = vadd.f32 %v864, %v987
      %v989 = vpop.f32.mrb[0].mxu0
      %v990 = vpop.f32.mrb[0].mxu0
      %v991 = vadd.f32 %v864, %v990
      %v992 = vpop.f32.mrb[0].mxu0
      %993 = vdwg.mxu0
      %v994 = vmul.f32 %v932, 0.5
      %v995 = vmul.f32 %v935, 0.5
      %v996 = vmul.f32 %v940, 0.5
      %v997 = vmul.f32 %v943, 0.5
      %v998 = vmul.f32 %v948, 0.5
      %v999 = vmul.f32 %v951, 0.5
      %v1000 = vmul.f32 %v956, 0.5
      %v1001 = vmul.f32 %v959, 0.5
      %v1002 = vmul.f32 %v964, 0.5
      %v1003 = vmul.f32 %v967, 0.5
      %v1004 = vmul.f32 %v972, 0.5
      %v1005 = vmul.f32 %v975, 0.5
      %v1006 = vmul.f32 %v980, 0.5
      %v1007 = vmul.f32 %v983, 0.5
      %v1008 = vmul.f32 %v988, 0.5
      %v1009 = vmul.f32 %v991, 0.5
      %v1010 = vmul.f32 %v932, 0.70710677
      %v1011 = vmul.f32 %v935, 0.70710677
      %v1012 = vmul.f32 %v940, 0.70710677
      %v1013 = vmul.f32 %v943, 0.70710677
      %v1014 = vmul.f32 %v948, 0.70710677
      %v1015 = vmul.f32 %v951, 0.70710677
      %v1016 = vmul.f32 %v956, 0.70710677
      %v1017 = vmul.f32 %v959, 0.70710677
      %v1018 = vmul.f32 %v964, 0.70710677
      %v1019 = vmul.f32 %v967, 0.70710677
      %v1020 = vmul.f32 %v972, 0.70710677
      %v1021 = vmul.f32 %v975, 0.70710677
      %v1022 = vmul.f32 %v980, 0.70710677
      %v1023 = vmul.f32 %v983, 0.70710677
      %v1024 = vmul.f32 %v988, 0.70710677
      %v1025 = vmul.f32 %v991, 0.70710677
      %v1026 = verf.f32.pop %v1010
      %v1027 = verf.f32.pop %v1011
      %v1028 = verf.f32.pop %v1012
      %v1029 = verf.f32.pop %v1013
      %v1030 = verf.f32.pop %v1014
      %v1031 = verf.f32.pop %v1015
      %v1032 = verf.f32.pop %v1016
      %v1033 = verf.f32.pop %v1017
      %v1034 = verf.f32.pop %v1018
      %v1035 = verf.f32.pop %v1019
      %v1036 = verf.f32.pop %v1020
      %v1037 = verf.f32.pop %v1021
      %v1038 = verf.f32.pop %v1022
      %v1039 = verf.f32.pop %v1023
      %v1040 = verf.f32.pop %v1024
      %v1041 = verf.f32.pop %v1025
      %v1042 = vadd.f32 %v1026, 1.0
      %v1043 = vadd.f32 %v1027, 1.0
      %v1044 = vadd.f32 %v1028, 1.0
      %v1045 = vadd.f32 %v1029, 1.0
      %v1046 = vadd.f32 %v1030, 1.0
      %v1047 = vadd.f32 %v1031, 1.0
      %v1048 = vadd.f32 %v1032, 1.0
      %v1049 = vadd.f32 %v1033, 1.0
      %v1050 = vadd.f32 %v1034, 1.0
      %v1051 = vadd.f32 %v1035, 1.0
      %v1052 = vadd.f32 %v1036, 1.0
      %v1053 = vadd.f32 %v1037, 1.0
      %v1054 = vadd.f32 %v1038, 1.0
      %v1055 = vadd.f32 %v1039, 1.0
      %v1056 = vadd.f32 %v1040, 1.0
      %v1057 = vadd.f32 %v1041, 1.0
      %v1058 = vmul.f32 %v994, %v1042
      %v1059 = vmul.f32 %v995, %v1043
      %v1060 = vmul.f32 %v996, %v1044
      %v1061 = vmul.f32 %v997, %v1045
      %v1062 = vmul.f32 %v998, %v1046
      %v1063 = vmul.f32 %v999, %v1047
      %v1064 = vmul.f32 %v1000, %v1048
      %v1065 = vmul.f32 %v1001, %v1049
      %v1066 = vmul.f32 %v1002, %v1050
      %v1067 = vmul.f32 %v1003, %v1051
      %v1068 = vmul.f32 %v1004, %v1052
      %v1069 = vmul.f32 %v1005, %v1053
      %v1070 = vmul.f32 %v1006, %v1054
      %v1071 = vmul.f32 %v1007, %v1055
      %v1072 = vmul.f32 %v1008, %v1056
      %v1073 = vmul.f32 %v1009, %v1057
      %v1074 = vpack.c.bf16 %v1059, %v1058
      %v1075 = vpack.c.bf16 %v1061, %v1060
      %v1076 = vpack.c.bf16 %v1063, %v1062
      %v1077 = vpack.c.bf16 %v1065, %v1064
      %v1078 = vpack.c.bf16 %v1067, %v1066
      %v1079 = vpack.c.bf16 %v1069, %v1068
      %v1080 = vpack.c.bf16 %v1071, %v1070
      %v1081 = vpack.c.bf16 %v1073, %v1072
      %v1082 = vld [vmem:[%s5] sm:$0xf]
      %v1083 = vld [vmem:[%s5 + $0x4] sm:$0xf]
      %v1084 = vld [vmem:[%s5 + $0x8] sm:$0xf]
      %v1085 = vld [vmem:[%s5 + $0xc] sm:$0xf]
      %v1086 = vld [vmem:[%s5 + $0x10] sm:$0xf]
      %v1087 = vld [vmem:[%s5 + $0x14] sm:$0xf]
      %v1088 = vld [vmem:[%s5 + $0x18] sm:$0xf]
      %v1089 = vld [vmem:[%s5 + $0x1c] sm:$0xf]
      %v1090 = vld [vmem:[%s5 + $0x20] sm:$0xf]
      %v1091 = vld [vmem:[%s5 + $0x24] sm:$0xf]
      %v1092 = vld [vmem:[%s5 + $0x28] sm:$0xf]
      %v1093 = vld [vmem:[%s5 + $0x2c] sm:$0xf]
      %v1094 = vld [vmem:[%s5 + $0x30] sm:$0xf]
      %v1095 = vld [vmem:[%s5 + $0x34] sm:$0xf]
      %v1096 = vld [vmem:[%s5 + $0x38] sm:$0xf]
      %v1097 = vld [vmem:[%s5 + $0x3c] sm:$0xf]
      %v1098 = vld [vmem:[%s6] sm:$0x1]
      %v1100 = vlaneseq
      %v1101 = vshrl.u32 %v1100, 7
      %v1102 = vsub.s32 0, %v1101
      %v1103 = vrot.slane %v1098, %v1102
      %v1121 = vunpack.c.l.b16 %v1082
      %v1122 = vunpack.c.l.b16 %v1083
      %v1123 = vunpack.c.l.b16 %v1084
      %v1124 = vunpack.c.l.b16 %v1085
      %v1125 = vunpack.c.l.b16 %v1086
      %v1126 = vunpack.c.l.b16 %v1087
      %v1127 = vunpack.c.l.b16 %v1088
      %v1128 = vunpack.c.l.b16 %v1089
      %v1129 = vunpack.c.l.b16 %v1090
      %v1130 = vunpack.c.l.b16 %v1091
      %v1131 = vunpack.c.l.b16 %v1092
      %v1132 = vunpack.c.l.b16 %v1093
      %v1133 = vunpack.c.l.b16 %v1094
      %v1134 = vunpack.c.l.b16 %v1095
      %v1135 = vunpack.c.l.b16 %v1096
      %v1136 = vunpack.c.l.b16 %v1097
      %v1137 = vpack.c.b16 %v1122, %v1121
      %v1138 = vpack.c.b16 %v1124, %v1123
      %v1139 = vpack.c.b16 %v1126, %v1125
      %v1140 = vpack.c.b16 %v1128, %v1127
      %v1141 = vpack.c.b16 %v1130, %v1129
      %v1142 = vpack.c.b16 %v1132, %v1131
      %v1143 = vpack.c.b16 %v1134, %v1133
      %v1144 = vpack.c.b16 %v1136, %v1135
      %1153 = vmatprep.subr.bf16.mxu0 0
      %1154 = vmatpush1.bf16.msra.mxu0 %v1137
      %1155 = vmatprep.subr.bf16.mxu0 0
      %1156 = vmatpush1.bf16.msra.mxu0 %v1138
      %1157 = vmatprep.subr.bf16.mxu0 0
      %1158 = vmatpush1.bf16.msra.mxu0 %v1139
      %1159 = vmatprep.subr.bf16.mxu0 0
      %1160 = vmatpush1.bf16.msra.mxu0 %v1140
      %1161 = vmatprep.subr.bf16.mxu0 0
      %1162 = vmatpush1.bf16.msra.mxu0 %v1141
      %1163 = vmatprep.subr.bf16.mxu0 0
      %1164 = vmatpush1.bf16.msra.mxu0 %v1142
      %1165 = vmatprep.subr.bf16.mxu0 0
      %1166 = vmatpush1.bf16.msra.mxu0 %v1143
      %1167 = vmatprep.subr.bf16.mxu0 0
      %1168 = vmatpush1.bf16.msra.mxu0 %v1144
      %1169 = vmatprep.subr.bf16.mxu0 0
      %1170 = vmatpush1.bf16.msra.mxu0 0
      %1171 = vmatprep.subr.bf16.mxu0 0
      %1172 = vmatpush1.bf16.msra.mxu0 0
      %1173 = vmatprep.subr.bf16.mxu0 0
      %1174 = vmatpush1.bf16.msra.mxu0 0
      %1175 = vmatprep.subr.bf16.mxu0 0
      %1176 = vmatpush1.bf16.msra.mxu0 0
      %1177 = vmatprep.subr.bf16.mxu0 0
      %1178 = vmatpush1.bf16.msra.mxu0 0
      %1179 = vmatprep.subr.bf16.mxu0 0
      %1180 = vmatpush1.bf16.msra.mxu0 0
      %1181 = vmatprep.subr.bf16.mxu0 0
      %1182 = vmatpush1.bf16.msra.mxu0 0
      %1183 = vmatprep.subr.bf16.mxu0 0
      %1184 = vmatpush1.bf16.msra.mxu0 0
      %1185 = vmatprep.mubr.bf16.mxu0 0
      %1186 = vmatmul.mubr.bf16.gmra.mrb[0].mxu0 %v1074
      %v1187 = vpop.f32.mrb[0].mxu0
      %v1188 = vadd.f32 %v1103, %v1187
      %v1189 = vpop.f32.mrb[0].mxu0
      %v1190 = vpop.f32.mrb[0].mxu0
      %v1191 = vadd.f32 %v1103, %v1190
      %v1192 = vpop.f32.mrb[0].mxu0
      %1193 = vmatprep.mubr.bf16.mxu0 0
      %1194 = vmatmul.mubr.bf16.gmra.mrb[0].mxu0 %v1075
      %v1195 = vpop.f32.mrb[0].mxu0
      %v1196 = vadd.f32 %v1103, %v1195
      %v1197 = vpop.f32.mrb[0].mxu0
      %v1198 = vpop.f32.mrb[0].mxu0
      %v1199 = vadd.f32 %v1103, %v1198
      %v1200 = vpop.f32.mrb[0].mxu0
      %1201 = vmatprep.mubr.bf16.mxu0 0
      %1202 = vmatmul.mubr.bf16.gmra.mrb[0].mxu0 %v1076
      %v1203 = vpop.f32.mrb[0].mxu0
      %v1204 = vadd.f32 %v1103, %v1203
      %v1205 = vpop.f32.mrb[0].mxu0
      %v1206 = vpop.f32.mrb[0].mxu0
      %v1207 = vadd.f32 %v1103, %v1206
      %v1208 = vpop.f32.mrb[0].mxu0
      %1209 = vmatprep.mubr.bf16.mxu0 0
      %1210 = vmatmul.mubr.bf16.gmra.mrb[0].mxu0 %v1077
      %v1211 = vpop.f32.mrb[0].mxu0
      %v1212 = vadd.f32 %v1103, %v1211
      %v1213 = vpop.f32.mrb[0].mxu0
      %v1214 = vpop.f32.mrb[0].mxu0
      %v1215 = vadd.f32 %v1103, %v1214
      %v1216 = vpop.f32.mrb[0].mxu0
      %1217 = vmatprep.mubr.bf16.mxu0 0
      %1218 = vmatmul.mubr.bf16.gmra.mrb[0].mxu0 %v1078
      %v1219 = vpop.f32.mrb[0].mxu0
      %v1220 = vadd.f32 %v1103, %v1219
      %v1221 = vpop.f32.mrb[0].mxu0
      %v1222 = vpop.f32.mrb[0].mxu0
      %v1223 = vadd.f32 %v1103, %v1222
      %v1224 = vpop.f32.mrb[0].mxu0
      %1225 = vmatprep.mubr.bf16.mxu0 0
      %1226 = vmatmul.mubr.bf16.gmra.mrb[0].mxu0 %v1079
      %v1227 = vpop.f32.mrb[0].mxu0
      %v1228 = vadd.f32 %v1103, %v1227
      %v1229 = vpop.f32.mrb[0].mxu0
      %v1230 = vpop.f32.mrb[0].mxu0
      %v1231 = vadd.f32 %v1103, %v1230
      %v1232 = vpop.f32.mrb[0].mxu0
      %1233 = vmatprep.mubr.bf16.mxu0 0
      %1234 = vmatmul.mubr.bf16.gmra.mrb[0].mxu0 %v1080
      %v1235 = vpop.f32.mrb[0].mxu0
      %v1236 = vadd.f32 %v1103, %v1235
      %v1237 = vpop.f32.mrb[0].mxu0
      %v1238 = vpop.f32.mrb[0].mxu0
      %v1239 = vadd.f32 %v1103, %v1238
      %v1240 = vpop.f32.mrb[0].mxu0
      %1241 = vmatprep.mubr.bf16.mxu0 0
      %1242 = vmatmul.mubr.bf16.gmra.mrb[0].mxu0 %v1081
      %v1243 = vpop.f32.mrb[0].mxu0
      %v1244 = vadd.f32 %v1103, %v1243
      %v1245 = vpop.f32.mrb[0].mxu0
      %v1246 = vpop.f32.mrb[0].mxu0
      %v1247 = vadd.f32 %v1103, %v1246
      %v1248 = vpop.f32.mrb[0].mxu0
      %1249 = vdwg.mxu0
      %1250 = vxpose.xlu0.b32.start [1/16] %v1188, 128
      %1251 = vxpose.xlu0.b32.cont [2/16] %v1191, 128
      %1252 = vxpose.xlu0.b32.cont [3/16] %v1196, 128
      %1253 = vxpose.xlu0.b32.cont [4/16] %v1199, 128
      %1254 = vxpose.xlu0.b32.cont [5/16] %v1204, 128
      %1255 = vxpose.xlu0.b32.cont [6/16] %v1207, 128
      %1256 = vxpose.xlu0.b32.cont [7/16] %v1212, 128
      %1257 = vxpose.xlu0.b32.cont [8/16] %v1215, 128
      %1258 = vxpose.xlu0.b32.cont [9/16] %v1220, 128
      %1259 = vxpose.xlu0.b32.cont [10/16] %v1223, 128
      %1260 = vxpose.xlu0.b32.cont [11/16] %v1228, 128
      %1261 = vxpose.xlu0.b32.cont [12/16] %v1231, 128
      %1262 = vxpose.xlu0.b32.cont [13/16] %v1236, 128
      %1263 = vxpose.xlu0.b32.cont [14/16] %v1239, 128
      %1264 = vxpose.xlu0.b32.cont [15/16] %v1244, 128
      %1265 = vxpose.xlu0.b32.end [16/16] %v1247, 128
      %v1266 = vpop.trf.xlu0
      %v1267 = vpop.trf.xlu0
      %v1268 = vpop.trf.xlu0
      %v1269 = vpop.trf.xlu0
      %v1270 = vpop.trf.xlu0
      %v1271 = vpop.trf.xlu0
      %v1272 = vpop.trf.xlu0
      %v1273 = vpop.trf.xlu0
      %v1274 = vpop.trf.xlu0
      %v1275 = vpop.trf.xlu0
      %v1276 = vpop.trf.xlu0
      %v1277 = vpop.trf.xlu0
      %v1278 = vpop.trf.xlu0
      %v1279 = vpop.trf.xlu0
      %v1280 = vpop.trf.xlu0
      %v1281 = vpop.trf.xlu0
      %v1282 = vadd.f32 %v1266, %v766
      %v1283 = vadd.f32 %v1267, %v767
      %v1284 = vld [vmem:[%s7] sm:$0x1]
      %v1285 = vld [vmem:[%s8] sm:$0x1]
      %v1286 = vsel %vm774, %v1282, 0.0
      %v1287 = vsel %vm774, %v1283, 0.0
      %1288 = vadd.xlane.f32.xlu0 %v1286
      %v1289 = vpop.xlane.xlu0 %1288
      %1290 = vadd.xlane.f32.xlu0 %v1287
      %v1291 = vpop.xlane.xlu0 %1290
      %v1292 = vmul.f32 %v1289, 0.03125
      %v1293 = vmul.f32 %v1291, 0.03125
      %v1294 = vsub.f32 %v1282, %v1292
      %v1295 = vsub.f32 %v1283, %v1293
      %v1296 = vsel %vm774, %v1294, 0.0
      %v1297 = vsel %vm774, %v1295, 0.0
      %v1298 = vmul.f32 %v1296, %v1296
      %v1299 = vmul.f32 %v1297, %v1297
      %1300 = vadd.xlane.f32.xlu0 %v1298
      %v1301 = vpop.xlane.xlu0 %1300
      %1302 = vadd.xlane.f32.xlu0 %v1299
      %v1303 = vpop.xlane.xlu0 %1302
      %v1304 = vmul.f32 %v1301, 0.03125
      %v1305 = vmul.f32 %v1303, 0.03125
      %v1306 = vadd.f32 %v1304, 1e-05
      %v1307 = vadd.f32 %v1305, 1e-05
      %v1308 = vrsqrt.pop %v1306
      %v1309 = vrsqrt.pop %v1307
      %v1310 = vmul.f32 %v1296, %v1308
      %v1311 = vmul.f32 %v1297, %v1309
      %v1313 = vlaneseq
      %v1314 = vshrl.u32 %v1313, 7
      %v1315 = vsub.s32 0, %v1314
      %v1316 = vrot.slane %v1284, %v1315
      %v1318 = vmul.f32 %v1310, %v1316
      %v1319 = vmul.f32 %v1311, %v1316
      %v1321 = vlaneseq
      %v1322 = vshrl.u32 %v1321, 7
      %v1323 = vsub.s32 0, %v1322
      %v1324 = vrot.slane %v1285, %v1323
      %v1326 = vadd.f32 %v1318, %v1324
      %v1327 = vadd.f32 %v1319, %v1324
      %v1328 = vpack.c.bf16 %v1327, %v1326
      %v1329 = vld [vmem:[%s9] sm:$0xf]
      %v1330 = vld [vmem:[%s9 + $0x4] sm:$0xf]
      %v1331 = vld [vmem:[%s9 + $0x8] sm:$0xf]
      %v1332 = vld [vmem:[%s9 + $0xc] sm:$0xf]
      %v1333 = vld [vmem:[%s9 + $0x10] sm:$0xf]
      %v1334 = vld [vmem:[%s9 + $0x14] sm:$0xf]
      %v1335 = vld [vmem:[%s9 + $0x18] sm:$0xf]
      %v1336 = vld [vmem:[%s9 + $0x1c] sm:$0xf]
      %v1337 = vld [vmem:[%s9 + $0x20] sm:$0xf]
      %v1338 = vld [vmem:[%s9 + $0x24] sm:$0xf]
      %v1339 = vld [vmem:[%s9 + $0x28] sm:$0xf]
      %v1340 = vld [vmem:[%s9 + $0x2c] sm:$0xf]
      %v1341 = vld [vmem:[%s9 + $0x30] sm:$0xf]
      %v1342 = vld [vmem:[%s9 + $0x34] sm:$0xf]
      %v1343 = vld [vmem:[%s9 + $0x38] sm:$0xf]
      %v1344 = vld [vmem:[%s9 + $0x3c] sm:$0xf]
      %v1345 = vld [vmem:[%s10] sm:$0x1]
      %v1347 = vlaneseq
      %v1348 = vshrl.u32 %v1347, 7
      %v1349 = vsub.s32 0, %v1348
      %v1350 = vrot.slane %v1345, %v1349
      %v1368 = vunpack.c.l.b16 %v1329
      %v1369 = vunpack.c.l.b16 %v1330
      %v1370 = vunpack.c.l.b16 %v1331
      %v1371 = vunpack.c.l.b16 %v1332
      %v1372 = vunpack.c.l.b16 %v1333
      %v1373 = vunpack.c.l.b16 %v1334
      %v1374 = vunpack.c.l.b16 %v1335
      %v1375 = vunpack.c.l.b16 %v1336
      %v1376 = vunpack.c.l.b16 %v1337
      %v1377 = vunpack.c.l.b16 %v1338
      %v1378 = vunpack.c.l.b16 %v1339
      %v1379 = vunpack.c.l.b16 %v1340
      %v1380 = vunpack.c.l.b16 %v1341
      %v1381 = vunpack.c.l.b16 %v1342
      %v1382 = vunpack.c.l.b16 %v1343
      %v1383 = vunpack.c.l.b16 %v1344
      %v1384 = vpack.c.b16 %v1369, %v1368
      %v1385 = vpack.c.b16 %v1371, %v1370
      %v1386 = vpack.c.b16 %v1373, %v1372
      %v1387 = vpack.c.b16 %v1375, %v1374
      %v1388 = vpack.c.b16 %v1377, %v1376
      %v1389 = vpack.c.b16 %v1379, %v1378
      %v1390 = vpack.c.b16 %v1381, %v1380
      %v1391 = vpack.c.b16 %v1383, %v1382
      %1400 = vmatprep.subr.bf16.mxu0 0
      %1401 = vmatpush1.bf16.msra.mxu0 %v1384
      %1402 = vmatprep.subr.bf16.mxu0 0
      %1403 = vmatpush1.bf16.msra.mxu0 %v1385
      %1404 = vmatprep.subr.bf16.mxu0 0
      %1405 = vmatpush1.bf16.msra.mxu0 %v1386
      %1406 = vmatprep.subr.bf16.mxu0 0
      %1407 = vmatpush1.bf16.msra.mxu0 %v1387
      %1408 = vmatprep.subr.bf16.mxu0 0
      %1409 = vmatpush1.bf16.msra.mxu0 %v1388
      %1410 = vmatprep.subr.bf16.mxu0 0
      %1411 = vmatpush1.bf16.msra.mxu0 %v1389
      %1412 = vmatprep.subr.bf16.mxu0 0
      %1413 = vmatpush1.bf16.msra.mxu0 %v1390
      %1414 = vmatprep.subr.bf16.mxu0 0
      %1415 = vmatpush1.bf16.msra.mxu0 %v1391
      %1416 = vmatprep.subr.bf16.mxu0 0
      %1417 = vmatpush1.bf16.msra.mxu0 0
      %1418 = vmatprep.subr.bf16.mxu0 0
      %1419 = vmatpush1.bf16.msra.mxu0 0
      %1420 = vmatprep.subr.bf16.mxu0 0
      %1421 = vmatpush1.bf16.msra.mxu0 0
      %1422 = vmatprep.subr.bf16.mxu0 0
      %1423 = vmatpush1.bf16.msra.mxu0 0
      %1424 = vmatprep.subr.bf16.mxu0 0
      %1425 = vmatpush1.bf16.msra.mxu0 0
      %1426 = vmatprep.subr.bf16.mxu0 0
      %1427 = vmatpush1.bf16.msra.mxu0 0
      %1428 = vmatprep.subr.bf16.mxu0 0
      %1429 = vmatpush1.bf16.msra.mxu0 0
      %1430 = vmatprep.subr.bf16.mxu0 0
      %1431 = vmatpush1.bf16.msra.mxu0 0
      %1432 = vmatprep.mubr.bf16.mxu0 0
      %1433 = vmatmul.mubr.bf16.gmra.mrb[0].mxu0 %v1328
      %v1434 = vpop.f32.mrb[0].mxu0
      %v1435 = vadd.f32 %v1350, %v1434
      %v1436 = vpop.f32.mrb[0].mxu0
      %v1437 = vpop.f32.mrb[0].mxu0
      %v1438 = vadd.f32 %v1350, %v1437
      %v1439 = vpop.f32.mrb[0].mxu0
      %1440 = vdwg.mxu0
      %v1441 = vmul.f32 %v1435, 0.5
      %v1442 = vmul.f32 %v1438, 0.5
      %v1443 = vmul.f32 %v1435, 0.70710677
      %v1444 = vmul.f32 %v1438, 0.70710677
      %v1445 = verf.f32.pop %v1443
      %v1446 = verf.f32.pop %v1444
      %v1447 = vadd.f32 %v1445, 1.0
      %v1448 = vadd.f32 %v1446, 1.0
      %v1449 = vmul.f32 %v1441, %v1447
      %v1450 = vmul.f32 %v1442, %v1448
      %v1451 = vpack.c.bf16 %v1450, %v1449
      %v1452 = vld [vmem:[%s11] sm:$0xf]
      %v1453 = vld [vmem:[%s11 + $0x4] sm:$0xf]
      %v1454 = vld [vmem:[%s11 + $0x8] sm:$0xf]
      %v1455 = vld [vmem:[%s11 + $0xc] sm:$0xf]
      %v1456 = vld [vmem:[%s11 + $0x10] sm:$0xf]
      %v1457 = vld [vmem:[%s11 + $0x14] sm:$0xf]
      %v1458 = vld [vmem:[%s11 + $0x18] sm:$0xf]
      %v1459 = vld [vmem:[%s11 + $0x1c] sm:$0xf]
      %v1460 = vld [vmem:[%s11 + $0x20] sm:$0xf]
      %v1461 = vld [vmem:[%s11 + $0x24] sm:$0xf]
      %v1462 = vld [vmem:[%s11 + $0x28] sm:$0xf]
      %v1463 = vld [vmem:[%s11 + $0x2c] sm:$0xf]
      %v1464 = vld [vmem:[%s11 + $0x30] sm:$0xf]
      %v1465 = vld [vmem:[%s11 + $0x34] sm:$0xf]
      %v1466 = vld [vmem:[%s11 + $0x38] sm:$0xf]
      %v1467 = vld [vmem:[%s11 + $0x3c] sm:$0xf]
      %v1468 = vld [vmem:[%s12] sm:$0x1]
      %v1470 = vlaneseq
      %v1471 = vshrl.u32 %v1470, 7
      %v1472 = vsub.s32 0, %v1471
      %v1473 = vrot.slane %v1468, %v1472
      %v1491 = vunpack.c.l.b16 %v1452
      %v1492 = vunpack.c.l.b16 %v1453
      %v1493 = vunpack.c.l.b16 %v1454
      %v1494 = vunpack.c.l.b16 %v1455
      %v1495 = vunpack.c.l.b16 %v1456
      %v1496 = vunpack.c.l.b16 %v1457
      %v1497 = vunpack.c.l.b16 %v1458
      %v1498 = vunpack.c.l.b16 %v1459
      %v1499 = vunpack.c.l.b16 %v1460
      %v1500 = vunpack.c.l.b16 %v1461
      %v1501 = vunpack.c.l.b16 %v1462
      %v1502 = vunpack.c.l.b16 %v1463
      %v1503 = vunpack.c.l.b16 %v1464
      %v1504 = vunpack.c.l.b16 %v1465
      %v1505 = vunpack.c.l.b16 %v1466
      %v1506 = vunpack.c.l.b16 %v1467
      %v1507 = vpack.c.b16 %v1492, %v1491
      %v1508 = vpack.c.b16 %v1494, %v1493
      %v1509 = vpack.c.b16 %v1496, %v1495
      %v1510 = vpack.c.b16 %v1498, %v1497
      %v1511 = vpack.c.b16 %v1500, %v1499
      %v1512 = vpack.c.b16 %v1502, %v1501
      %v1513 = vpack.c.b16 %v1504, %v1503
      %v1514 = vpack.c.b16 %v1506, %v1505
      %1523 = vmatprep.subr.bf16.mxu0 0
      %1524 = vmatpush1.bf16.msra.mxu0 %v1507
      %1525 = vmatprep.subr.bf16.mxu0 0
      %1526 = vmatpush1.bf16.msra.mxu0 %v1508
      %1527 = vmatprep.subr.bf16.mxu0 0
      %1528 = vmatpush1.bf16.msra.mxu0 %v1509
      %1529 = vmatprep.subr.bf16.mxu0 0
      %1530 = vmatpush1.bf16.msra.mxu0 %v1510
      %1531 = vmatprep.subr.bf16.mxu0 0
      %1532 = vmatpush1.bf16.msra.mxu0 %v1511
      %1533 = vmatprep.subr.bf16.mxu0 0
      %1534 = vmatpush1.bf16.msra.mxu0 %v1512
      %1535 = vmatprep.subr.bf16.mxu0 0
      %1536 = vmatpush1.bf16.msra.mxu0 %v1513
      %1537 = vmatprep.subr.bf16.mxu0 0
      %1538 = vmatpush1.bf16.msra.mxu0 %v1514
      %1539 = vmatprep.subr.bf16.mxu0 0
      %1540 = vmatpush1.bf16.msra.mxu0 0
      %1541 = vmatprep.subr.bf16.mxu0 0
      %1542 = vmatpush1.bf16.msra.mxu0 0
      %1543 = vmatprep.subr.bf16.mxu0 0
      %1544 = vmatpush1.bf16.msra.mxu0 0
      %1545 = vmatprep.subr.bf16.mxu0 0
      %1546 = vmatpush1.bf16.msra.mxu0 0
      %1547 = vmatprep.subr.bf16.mxu0 0
      %1548 = vmatpush1.bf16.msra.mxu0 0
      %1549 = vmatprep.subr.bf16.mxu0 0
      %1550 = vmatpush1.bf16.msra.mxu0 0
      %1551 = vmatprep.subr.bf16.mxu0 0
      %1552 = vmatpush1.bf16.msra.mxu0 0
      %1553 = vmatprep.subr.bf16.mxu0 0
      %1554 = vmatpush1.bf16.msra.mxu0 0
      %1555 = vmatprep.mubr.bf16.mxu0 0
      %1556 = vmatmul.mubr.bf16.gmra.mrb[0].mxu0 %v1451
      %v1557 = vpop.f32.mrb[0].mxu0
      %v1558 = vadd.f32 %v1473, %v1557
      %v1559 = vpop.f32.mrb[0].mxu0
      %v1560 = vpop.f32.mrb[0].mxu0
      %v1561 = vadd.f32 %v1473, %v1560
      %v1562 = vpop.f32.mrb[0].mxu0
      %1563 = vdwg.mxu0
      %v1564 = vadd.f32 %v1558, %v1282
      %v1565 = vadd.f32 %v1561, %v1283
      %v1566 = vld [vmem:[%s13] sm:$0x1]
      %v1567 = vld [vmem:[%s14] sm:$0x1]
      %v1568 = vsel %vm774, %v1564, 0.0
      %v1569 = vsel %vm774, %v1565, 0.0
      %1570 = vadd.xlane.f32.xlu0 %v1568
      %v1571 = vpop.xlane.xlu0 %1570
      %1572 = vadd.xlane.f32.xlu0 %v1569
      %v1573 = vpop.xlane.xlu0 %1572
      %v1574 = vmul.f32 %v1571, 0.03125
      %v1575 = vmul.f32 %v1573, 0.03125
      %v1576 = vsub.f32 %v1564, %v1574
      %v1577 = vsub.f32 %v1565, %v1575
      %v1578 = vsel %vm774, %v1576, 0.0
      %v1579 = vsel %vm774, %v1577, 0.0
      %v1580 = vmul.f32 %v1578, %v1578
      %v1581 = vmul.f32 %v1579, %v1579
      %1582 = vadd.xlane.f32.xlu0 %v1580
      %v1583 = vpop.xlane.xlu0 %1582
      %1584 = vadd.xlane.f32.xlu0 %v1581
      %v1585 = vpop.xlane.xlu0 %1584
      %v1586 = vmul.f32 %v1583, 0.03125
      %v1587 = vmul.f32 %v1585, 0.03125
      %v1588 = vadd.f32 %v1586, 1e-05
      %v1589 = vadd.f32 %v1587, 1e-05
      %v1590 = vrsqrt.pop %v1588
      %v1591 = vrsqrt.pop %v1589
      %v1592 = vmul.f32 %v1578, %v1590
      %v1593 = vmul.f32 %v1579, %v1591
      %v1595 = vlaneseq
      %v1596 = vshrl.u32 %v1595, 7
      %v1597 = vsub.s32 0, %v1596
      %v1598 = vrot.slane %v1566, %v1597
      %v1600 = vmul.f32 %v1592, %v1598
      %v1601 = vmul.f32 %v1593, %v1598
      %v1603 = vlaneseq
      %v1604 = vshrl.u32 %v1603, 7
      %v1605 = vsub.s32 0, %v1604
      %v1606 = vrot.slane %v1567, %v1605
      %v1608 = vadd.f32 %v1600, %v1606
      %v1609 = vadd.f32 %v1601, %v1606
      %1610 = vxpose.xlu0.b32.start [1/16] %v1608, 128
      %1611 = vxpose.xlu0.b32.cont [2/16] %v1609, 128
      %1612 = vxpose.xlu0.b32.cont [3/16] 0.0, 128
      %1613 = vxpose.xlu0.b32.cont [4/16] 0.0, 128
      %1614 = vxpose.xlu0.b32.cont [5/16] 0.0, 128
      %1615 = vxpose.xlu0.b32.cont [6/16] 0.0, 128
      %1616 = vxpose.xlu0.b32.cont [7/16] 0.0, 128
      %1617 = vxpose.xlu0.b32.cont [8/16] 0.0, 128
      %1618 = vxpose.xlu0.b32.cont [9/16] 0.0, 128
      %1619 = vxpose.xlu0.b32.cont [10/16] 0.0, 128
      %1620 = vxpose.xlu0.b32.cont [11/16] 0.0, 128
      %1621 = vxpose.xlu0.b32.cont [12/16] 0.0, 128
      %1622 = vxpose.xlu0.b32.cont [13/16] 0.0, 128
      %1623 = vxpose.xlu0.b32.cont [14/16] 0.0, 128
      %1624 = vxpose.xlu0.b32.cont [15/16] 0.0, 128
      %1625 = vxpose.xlu0.b32.end [16/16] 0.0, 128
      %v1626 = vpop.trf.xlu0
      %v1627 = vpop.trf.xlu0
      %v1628 = vpop.trf.xlu0
      %v1629 = vpop.trf.xlu0
      %v1630 = vpop.trf.xlu0
      %v1631 = vpop.trf.xlu0
      %v1632 = vpop.trf.xlu0
      %v1633 = vpop.trf.xlu0
      %v1634 = vpop.trf.xlu0
      %v1635 = vpop.trf.xlu0
      %v1636 = vpop.trf.xlu0
      %v1637 = vpop.trf.xlu0
      %v1638 = vpop.trf.xlu0
      %v1639 = vpop.trf.xlu0
      %v1640 = vpop.trf.xlu0
      %v1641 = vpop.trf.xlu0
      %v1642 = vpack.c.bf16 %v1627, %v1626
      %v1643 = vpack.c.bf16 %v1629, %v1628
      %v1644 = vpack.c.bf16 %v1631, %v1630
      %v1645 = vpack.c.bf16 %v1633, %v1632
      %v1646 = vpack.c.bf16 %v1635, %v1634
      %v1647 = vpack.c.bf16 %v1637, %v1636
      %v1648 = vpack.c.bf16 %v1639, %v1638
      %v1649 = vpack.c.bf16 %v1641, %v1640
      %v1650 = vld [vmem:[%s15] sm:$0xf]
      %v1651 = vld [vmem:[%s15 + $0x4] sm:$0xf]
      %v1652 = vld [vmem:[%s16] sm:$0x1]
      %v1654 = vlaneseq
      %v1655 = vshrl.u32 %v1654, 7
      %v1656 = vsub.s32 0, %v1655
      %v1657 = vrot.slane %v1652, %v1656
      %v1661 = vunpack.c.l.b16 %v1650
      %v1662 = vunpack.c.l.b16 %v1651
      %v1663 = vpack.c.b16 %v1662, %v1661
      %v1666 = vsel %vm872, %v1642, 0
      %v1669 = vsel %vm872, %v1643, 0
      %v1672 = vsel %vm872, %v1644, 0
      %v1675 = vsel %vm872, %v1645, 0
      %v1678 = vsel %vm872, %v1646, 0
      %v1681 = vsel %vm872, %v1647, 0
      %v1684 = vsel %vm872, %v1648, 0
      %v1687 = vsel %vm872, %v1649, 0
      %1689 = vmatprep.subr.bf16.mxu0 0
      %1690 = vmatpush1.bf16.msra.mxu0 %v1663
      %1691 = vmatprep.subr.bf16.mxu0 0
      %1692 = vmatpush1.bf16.msra.mxu0 0
      %1693 = vmatprep.subr.bf16.mxu0 0
      %1694 = vmatpush1.bf16.msra.mxu0 0
      %1695 = vmatprep.subr.bf16.mxu0 0
      %1696 = vmatpush1.bf16.msra.mxu0 0
      %1697 = vmatprep.subr.bf16.mxu0 0
      %1698 = vmatpush1.bf16.msra.mxu0 0
      %1699 = vmatprep.subr.bf16.mxu0 0
      %1700 = vmatpush1.bf16.msra.mxu0 0
      %1701 = vmatprep.subr.bf16.mxu0 0
      %1702 = vmatpush1.bf16.msra.mxu0 0
      %1703 = vmatprep.subr.bf16.mxu0 0
      %1704 = vmatpush1.bf16.msra.mxu0 0
      %1705 = vmatprep.subr.bf16.mxu0 0
      %1706 = vmatpush1.bf16.msra.mxu0 0
      %1707 = vmatprep.subr.bf16.mxu0 0
      %1708 = vmatpush1.bf16.msra.mxu0 0
      %1709 = vmatprep.subr.bf16.mxu0 0
      %1710 = vmatpush1.bf16.msra.mxu0 0
      %1711 = vmatprep.subr.bf16.mxu0 0
      %1712 = vmatpush1.bf16.msra.mxu0 0
      %1713 = vmatprep.subr.bf16.mxu0 0
      %1714 = vmatpush1.bf16.msra.mxu0 0
      %1715 = vmatprep.subr.bf16.mxu0 0
      %1716 = vmatpush1.bf16.msra.mxu0 0
      %1717 = vmatprep.subr.bf16.mxu0 0
      %1718 = vmatpush1.bf16.msra.mxu0 0
      %1719 = vmatprep.subr.bf16.mxu0 0
      %1720 = vmatpush1.bf16.msra.mxu0 0
      %1721 = vmatprep.mubr.bf16.mxu0 0
      %1722 = vmatmul.mubr.bf16.gmra.mrb[0].mxu0 %v1666
      %v1723 = vpop.f32.mrb[0].mxu0
      %v1724 = vadd.f32 %v1657, %v1723
      %v1725 = vpop.f32.mrb[0].mxu0
      %v1726 = vpop.f32.mrb[0].mxu0
      %v1727 = vadd.f32 %v1657, %v1726
      %v1728 = vpop.f32.mrb[0].mxu0
      %1729 = vmatprep.mubr.bf16.mxu0 0
      %1730 = vmatmul.mubr.bf16.gmra.mrb[0].mxu0 %v1669
      %v1731 = vpop.f32.mrb[0].mxu0
      %v1732 = vadd.f32 %v1657, %v1731
      %v1733 = vpop.f32.mrb[0].mxu0
      %v1734 = vpop.f32.mrb[0].mxu0
      %v1735 = vadd.f32 %v1657, %v1734
      %v1736 = vpop.f32.mrb[0].mxu0
      %1737 = vmatprep.mubr.bf16.mxu0 0
      %1738 = vmatmul.mubr.bf16.gmra.mrb[0].mxu0 %v1672
      %v1739 = vpop.f32.mrb[0].mxu0
      %v1740 = vadd.f32 %v1657, %v1739
      %v1741 = vpop.f32.mrb[0].mxu0
      %v1742 = vpop.f32.mrb[0].mxu0
      %v1743 = vadd.f32 %v1657, %v1742
      %v1744 = vpop.f32.mrb[0].mxu0
      %1745 = vmatprep.mubr.bf16.mxu0 0
      %1746 = vmatmul.mubr.bf16.gmra.mrb[0].mxu0 %v1675
      %v1747 = vpop.f32.mrb[0].mxu0
      %v1748 = vadd.f32 %v1657, %v1747
      %v1749 = vpop.f32.mrb[0].mxu0
      %v1750 = vpop.f32.mrb[0].mxu0
      %v1751 = vadd.f32 %v1657, %v1750
      %v1752 = vpop.f32.mrb[0].mxu0
      %1753 = vmatprep.mubr.bf16.mxu0 0
      %1754 = vmatmul.mubr.bf16.gmra.mrb[0].mxu0 %v1678
      %v1755 = vpop.f32.mrb[0].mxu0
      %v1756 = vadd.f32 %v1657, %v1755
      %v1757 = vpop.f32.mrb[0].mxu0
      %v1758 = vpop.f32.mrb[0].mxu0
      %v1759 = vadd.f32 %v1657, %v1758
      %v1760 = vpop.f32.mrb[0].mxu0
      %1761 = vmatprep.mubr.bf16.mxu0 0
      %1762 = vmatmul.mubr.bf16.gmra.mrb[0].mxu0 %v1681
      %v1763 = vpop.f32.mrb[0].mxu0
      %v1764 = vadd.f32 %v1657, %v1763
      %v1765 = vpop.f32.mrb[0].mxu0
      %v1766 = vpop.f32.mrb[0].mxu0
      %v1767 = vadd.f32 %v1657, %v1766
      %v1768 = vpop.f32.mrb[0].mxu0
      %1769 = vmatprep.mubr.bf16.mxu0 0
      %1770 = vmatmul.mubr.bf16.gmra.mrb[0].mxu0 %v1684
      %v1771 = vpop.f32.mrb[0].mxu0
      %v1772 = vadd.f32 %v1657, %v1771
      %v1773 = vpop.f32.mrb[0].mxu0
      %v1774 = vpop.f32.mrb[0].mxu0
      %v1775 = vadd.f32 %v1657, %v1774
      %v1776 = vpop.f32.mrb[0].mxu0
      %1777 = vmatprep.mubr.bf16.mxu0 0
      %1778 = vmatmul.mubr.bf16.gmra.mrb[0].mxu0 %v1687
      %v1779 = vpop.f32.mrb[0].mxu0
      %v1780 = vadd.f32 %v1657, %v1779
      %v1781 = vpop.f32.mrb[0].mxu0
      %v1782 = vpop.f32.mrb[0].mxu0
      %v1783 = vadd.f32 %v1657, %v1782
      %v1784 = vpop.f32.mrb[0].mxu0
      %1785 = vdwg.mxu0
      %v1786 = vmul.f32 %v1724, 0.5
      %v1787 = vmul.f32 %v1727, 0.5
      %v1788 = vmul.f32 %v1732, 0.5
      %v1789 = vmul.f32 %v1735, 0.5
      %v1790 = vmul.f32 %v1740, 0.5
      %v1791 = vmul.f32 %v1743, 0.5
      %v1792 = vmul.f32 %v1748, 0.5
      %v1793 = vmul.f32 %v1751, 0.5
      %v1794 = vmul.f32 %v1756, 0.5
      %v1795 = vmul.f32 %v1759, 0.5
      %v1796 = vmul.f32 %v1764, 0.5
      %v1797 = vmul.f32 %v1767, 0.5
      %v1798 = vmul.f32 %v1772, 0.5
      %v1799 = vmul.f32 %v1775, 0.5
      %v1800 = vmul.f32 %v1780, 0.5
      %v1801 = vmul.f32 %v1783, 0.5
      %v1802 = vmul.f32 %v1724, 0.70710677
      %v1803 = vmul.f32 %v1727, 0.70710677
      %v1804 = vmul.f32 %v1732, 0.70710677
      %v1805 = vmul.f32 %v1735, 0.70710677
      %v1806 = vmul.f32 %v1740, 0.70710677
      %v1807 = vmul.f32 %v1743, 0.70710677
      %v1808 = vmul.f32 %v1748, 0.70710677
      %v1809 = vmul.f32 %v1751, 0.70710677
      %v1810 = vmul.f32 %v1756, 0.70710677
      %v1811 = vmul.f32 %v1759, 0.70710677
      %v1812 = vmul.f32 %v1764, 0.70710677
      %v1813 = vmul.f32 %v1767, 0.70710677
      %v1814 = vmul.f32 %v1772, 0.70710677
      %v1815 = vmul.f32 %v1775, 0.70710677
      %v1816 = vmul.f32 %v1780, 0.70710677
      %v1817 = vmul.f32 %v1783, 0.70710677
      %v1818 = verf.f32.pop %v1802
      %v1819 = verf.f32.pop %v1803
      %v1820 = verf.f32.pop %v1804
      %v1821 = verf.f32.pop %v1805
      %v1822 = verf.f32.pop %v1806
      %v1823 = verf.f32.pop %v1807
      %v1824 = verf.f32.pop %v1808
      %v1825 = verf.f32.pop %v1809
      %v1826 = verf.f32.pop %v1810
      %v1827 = verf.f32.pop %v1811
      %v1828 = verf.f32.pop %v1812
      %v1829 = verf.f32.pop %v1813
      %v1830 = verf.f32.pop %v1814
      %v1831 = verf.f32.pop %v1815
      %v1832 = verf.f32.pop %v1816
      %v1833 = verf.f32.pop %v1817
      %v1834 = vadd.f32 %v1818, 1.0
      %v1835 = vadd.f32 %v1819, 1.0
      %v1836 = vadd.f32 %v1820, 1.0
      %v1837 = vadd.f32 %v1821, 1.0
      %v1838 = vadd.f32 %v1822, 1.0
      %v1839 = vadd.f32 %v1823, 1.0
      %v1840 = vadd.f32 %v1824, 1.0
      %v1841 = vadd.f32 %v1825, 1.0
      %v1842 = vadd.f32 %v1826, 1.0
      %v1843 = vadd.f32 %v1827, 1.0
      %v1844 = vadd.f32 %v1828, 1.0
      %v1845 = vadd.f32 %v1829, 1.0
      %v1846 = vadd.f32 %v1830, 1.0
      %v1847 = vadd.f32 %v1831, 1.0
      %v1848 = vadd.f32 %v1832, 1.0
      %v1849 = vadd.f32 %v1833, 1.0
      %v1850 = vmul.f32 %v1786, %v1834
      %v1851 = vmul.f32 %v1787, %v1835
      %v1852 = vmul.f32 %v1788, %v1836
      %v1853 = vmul.f32 %v1789, %v1837
      %v1854 = vmul.f32 %v1790, %v1838
      %v1855 = vmul.f32 %v1791, %v1839
      %v1856 = vmul.f32 %v1792, %v1840
      %v1857 = vmul.f32 %v1793, %v1841
      %v1858 = vmul.f32 %v1794, %v1842
      %v1859 = vmul.f32 %v1795, %v1843
      %v1860 = vmul.f32 %v1796, %v1844
      %v1861 = vmul.f32 %v1797, %v1845
      %v1862 = vmul.f32 %v1798, %v1846
      %v1863 = vmul.f32 %v1799, %v1847
      %v1864 = vmul.f32 %v1800, %v1848
      %v1865 = vmul.f32 %v1801, %v1849
      %v1866 = vpack.c.bf16 %v1851, %v1850
      %v1867 = vpack.c.bf16 %v1853, %v1852
      %v1868 = vpack.c.bf16 %v1855, %v1854
      %v1869 = vpack.c.bf16 %v1857, %v1856
      %v1870 = vpack.c.bf16 %v1859, %v1858
      %v1871 = vpack.c.bf16 %v1861, %v1860
      %v1872 = vpack.c.bf16 %v1863, %v1862
      %v1873 = vpack.c.bf16 %v1865, %v1864
      %v1874 = vld [vmem:[%s17] sm:$0xf]
      %v1875 = vld [vmem:[%s17 + $0x4] sm:$0xf]
      %v1876 = vld [vmem:[%s17 + $0x8] sm:$0xf]
      %v1877 = vld [vmem:[%s17 + $0xc] sm:$0xf]
      %v1878 = vld [vmem:[%s17 + $0x10] sm:$0xf]
      %v1879 = vld [vmem:[%s17 + $0x14] sm:$0xf]
      %v1880 = vld [vmem:[%s17 + $0x18] sm:$0xf]
      %v1881 = vld [vmem:[%s17 + $0x1c] sm:$0xf]
      %v1882 = vld [vmem:[%s17 + $0x20] sm:$0xf]
      %v1883 = vld [vmem:[%s17 + $0x24] sm:$0xf]
      %v1884 = vld [vmem:[%s17 + $0x28] sm:$0xf]
      %v1885 = vld [vmem:[%s17 + $0x2c] sm:$0xf]
      %v1886 = vld [vmem:[%s17 + $0x30] sm:$0xf]
      %v1887 = vld [vmem:[%s17 + $0x34] sm:$0xf]
      %v1888 = vld [vmem:[%s17 + $0x38] sm:$0xf]
      %v1889 = vld [vmem:[%s17 + $0x3c] sm:$0xf]
      %v1890 = vld [vmem:[%s18] sm:$0x1]
      %v1892 = vlaneseq
      %v1893 = vshrl.u32 %v1892, 7
      %v1894 = vsub.s32 0, %v1893
      %v1895 = vrot.slane %v1890, %v1894
      %v1913 = vunpack.c.l.b16 %v1874
      %v1914 = vunpack.c.l.b16 %v1875
      %v1915 = vunpack.c.l.b16 %v1876
      %v1916 = vunpack.c.l.b16 %v1877
      %v1917 = vunpack.c.l.b16 %v1878
      %v1918 = vunpack.c.l.b16 %v1879
      %v1919 = vunpack.c.l.b16 %v1880
      %v1920 = vunpack.c.l.b16 %v1881
      %v1921 = vunpack.c.l.b16 %v1882
      %v1922 = vunpack.c.l.b16 %v1883
      %v1923 = vunpack.c.l.b16 %v1884
      %v1924 = vunpack.c.l.b16 %v1885
      %v1925 = vunpack.c.l.b16 %v1886
      %v1926 = vunpack.c.l.b16 %v1887
      %v1927 = vunpack.c.l.b16 %v1888
      %v1928 = vunpack.c.l.b16 %v1889
      %v1929 = vpack.c.b16 %v1914, %v1913
      %v1930 = vpack.c.b16 %v1916, %v1915
      %v1931 = vpack.c.b16 %v1918, %v1917
      %v1932 = vpack.c.b16 %v1920, %v1919
      %v1933 = vpack.c.b16 %v1922, %v1921
      %v1934 = vpack.c.b16 %v1924, %v1923
      %v1935 = vpack.c.b16 %v1926, %v1925
      %v1936 = vpack.c.b16 %v1928, %v1927
      %1945 = vmatprep.subr.bf16.mxu0 0
      %1946 = vmatpush1.bf16.msra.mxu0 %v1929
      %1947 = vmatprep.subr.bf16.mxu0 0
      %1948 = vmatpush1.bf16.msra.mxu0 %v1930
      %1949 = vmatprep.subr.bf16.mxu0 0
      %1950 = vmatpush1.bf16.msra.mxu0 %v1931
      %1951 = vmatprep.subr.bf16.mxu0 0
      %1952 = vmatpush1.bf16.msra.mxu0 %v1932
      %1953 = vmatprep.subr.bf16.mxu0 0
      %1954 = vmatpush1.bf16.msra.mxu0 %v1933
      %1955 = vmatprep.subr.bf16.mxu0 0
      %1956 = vmatpush1.bf16.msra.mxu0 %v1934
      %1957 = vmatprep.subr.bf16.mxu0 0
      %1958 = vmatpush1.bf16.msra.mxu0 %v1935
      %1959 = vmatprep.subr.bf16.mxu0 0
      %1960 = vmatpush1.bf16.msra.mxu0 %v1936
      %1961 = vmatprep.subr.bf16.mxu0 0
      %1962 = vmatpush1.bf16.msra.mxu0 0
      %1963 = vmatprep.subr.bf16.mxu0 0
      %1964 = vmatpush1.bf16.msra.mxu0 0
      %1965 = vmatprep.subr.bf16.mxu0 0
      %1966 = vmatpush1.bf16.msra.mxu0 0
      %1967 = vmatprep.subr.bf16.mxu0 0
      %1968 = vmatpush1.bf16.msra.mxu0 0
      %1969 = vmatprep.subr.bf16.mxu0 0
      %1970 = vmatpush1.bf16.msra.mxu0 0
      %1971 = vmatprep.subr.bf16.mxu0 0
      %1972 = vmatpush1.bf16.msra.mxu0 0
      %1973 = vmatprep.subr.bf16.mxu0 0
      %1974 = vmatpush1.bf16.msra.mxu0 0
      %1975 = vmatprep.subr.bf16.mxu0 0
      %1976 = vmatpush1.bf16.msra.mxu0 0
      %1977 = vmatprep.mubr.bf16.mxu0 0
      %1978 = vmatmul.mubr.bf16.gmra.mrb[0].mxu0 %v1866
      %v1979 = vpop.f32.mrb[0].mxu0
      %v1980 = vadd.f32 %v1895, %v1979
      %v1981 = vpop.f32.mrb[0].mxu0
      %v1982 = vpop.f32.mrb[0].mxu0
      %v1983 = vadd.f32 %v1895, %v1982
      %v1984 = vpop.f32.mrb[0].mxu0
      %1985 = vmatprep.mubr.bf16.mxu0 0
      %1986 = vmatmul.mubr.bf16.gmra.mrb[0].mxu0 %v1867
      %v1987 = vpop.f32.mrb[0].mxu0
      %v1988 = vadd.f32 %v1895, %v1987
      %v1989 = vpop.f32.mrb[0].mxu0
      %v1990 = vpop.f32.mrb[0].mxu0
      %v1991 = vadd.f32 %v1895, %v1990
      %v1992 = vpop.f32.mrb[0].mxu0
      %1993 = vmatprep.mubr.bf16.mxu0 0
      %1994 = vmatmul.mubr.bf16.gmra.mrb[0].mxu0 %v1868
      %v1995 = vpop.f32.mrb[0].mxu0
      %v1996 = vadd.f32 %v1895, %v1995
      %v1997 = vpop.f32.mrb[0].mxu0
      %v1998 = vpop.f32.mrb[0].mxu0
      %v1999 = vadd.f32 %v1895, %v1998
      %v2000 = vpop.f32.mrb[0].mxu0
      %2001 = vmatprep.mubr.bf16.mxu0 0
      %2002 = vmatmul.mubr.bf16.gmra.mrb[0].mxu0 %v1869
      %v2003 = vpop.f32.mrb[0].mxu0
      %v2004 = vadd.f32 %v1895, %v2003
      %v2005 = vpop.f32.mrb[0].mxu0
      %v2006 = vpop.f32.mrb[0].mxu0
      %v2007 = vadd.f32 %v1895, %v2006
      %v2008 = vpop.f32.mrb[0].mxu0
      %2009 = vmatprep.mubr.bf16.mxu0 0
      %2010 = vmatmul.mubr.bf16.gmra.mrb[0].mxu0 %v1870
      %v2011 = vpop.f32.mrb[0].mxu0
      %v2012 = vadd.f32 %v1895, %v2011
      %v2013 = vpop.f32.mrb[0].mxu0
      %v2014 = vpop.f32.mrb[0].mxu0
      %v2015 = vadd.f32 %v1895, %v2014
      %v2016 = vpop.f32.mrb[0].mxu0
      %2017 = vmatprep.mubr.bf16.mxu0 0
      %2018 = vmatmul.mubr.bf16.gmra.mrb[0].mxu0 %v1871
      %v2019 = vpop.f32.mrb[0].mxu0
      %v2020 = vadd.f32 %v1895, %v2019
      %v2021 = vpop.f32.mrb[0].mxu0
      %v2022 = vpop.f32.mrb[0].mxu0
      %v2023 = vadd.f32 %v1895, %v2022
      %v2024 = vpop.f32.mrb[0].mxu0
      %2025 = vmatprep.mubr.bf16.mxu0 0
      %2026 = vmatmul.mubr.bf16.gmra.mrb[0].mxu0 %v1872
      %v2027 = vpop.f32.mrb[0].mxu0
      %v2028 = vadd.f32 %v1895, %v2027
      %v2029 = vpop.f32.mrb[0].mxu0
      %v2030 = vpop.f32.mrb[0].mxu0
      %v2031 = vadd.f32 %v1895, %v2030
      %v2032 = vpop.f32.mrb[0].mxu0
      %2033 = vmatprep.mubr.bf16.mxu0 0
      %2034 = vmatmul.mubr.bf16.gmra.mrb[0].mxu0 %v1873
      %v2035 = vpop.f32.mrb[0].mxu0
      %v2036 = vadd.f32 %v1895, %v2035
      %v2037 = vpop.f32.mrb[0].mxu0
      %v2038 = vpop.f32.mrb[0].mxu0
      %v2039 = vadd.f32 %v1895, %v2038
      %v2040 = vpop.f32.mrb[0].mxu0
      %2041 = vdwg.mxu0
      %2042 = vxpose.xlu0.b32.start [1/16] %v1980, 128
      %2043 = vxpose.xlu0.b32.cont [2/16] %v1983, 128
      %2044 = vxpose.xlu0.b32.cont [3/16] %v1988, 128
      %2045 = vxpose.xlu0.b32.cont [4/16] %v1991, 128
      %2046 = vxpose.xlu0.b32.cont [5/16] %v1996, 128
      %2047 = vxpose.xlu0.b32.cont [6/16] %v1999, 128
      %2048 = vxpose.xlu0.b32.cont [7/16] %v2004, 128
      %2049 = vxpose.xlu0.b32.cont [8/16] %v2007, 128
      %2050 = vxpose.xlu0.b32.cont [9/16] %v2012, 128
      %2051 = vxpose.xlu0.b32.cont [10/16] %v2015, 128
      %2052 = vxpose.xlu0.b32.cont [11/16] %v2020, 128
      %2053 = vxpose.xlu0.b32.cont [12/16] %v2023, 128
      %2054 = vxpose.xlu0.b32.cont [13/16] %v2028, 128
      %2055 = vxpose.xlu0.b32.cont [14/16] %v2031, 128
      %2056 = vxpose.xlu0.b32.cont [15/16] %v2036, 128
      %2057 = vxpose.xlu0.b32.end [16/16] %v2039, 128
      %v2058 = vpop.trf.xlu0
      %v2059 = vpop.trf.xlu0
      %v2060 = vpop.trf.xlu0
      %v2061 = vpop.trf.xlu0
      %v2062 = vpop.trf.xlu0
      %v2063 = vpop.trf.xlu0
      %v2064 = vpop.trf.xlu0
      %v2065 = vpop.trf.xlu0
      %v2066 = vpop.trf.xlu0
      %v2067 = vpop.trf.xlu0
      %v2068 = vpop.trf.xlu0
      %v2069 = vpop.trf.xlu0
      %v2070 = vpop.trf.xlu0
      %v2071 = vpop.trf.xlu0
      %v2072 = vpop.trf.xlu0
      %v2073 = vpop.trf.xlu0
      %v2074 = vadd.f32 %v2058, %v1564
      %v2075 = vadd.f32 %v2059, %v1565
      %v2076 = vld [vmem:[%s19] sm:$0x1]
      %v2077 = vld [vmem:[%s20] sm:$0x1]
      %v2078 = vsel %vm774, %v2074, 0.0
      %v2079 = vsel %vm774, %v2075, 0.0
      %2080 = vadd.xlane.f32.xlu0 %v2078
      %v2081 = vpop.xlane.xlu0 %2080
      %2082 = vadd.xlane.f32.xlu0 %v2079
      %v2083 = vpop.xlane.xlu0 %2082
      %v2084 = vmul.f32 %v2081, 0.03125
      %v2085 = vmul.f32 %v2083, 0.03125
      %v2086 = vsub.f32 %v2074, %v2084
      %v2087 = vsub.f32 %v2075, %v2085
      %v2088 = vsel %vm774, %v2086, 0.0
      %v2089 = vsel %vm774, %v2087, 0.0
      %v2090 = vmul.f32 %v2088, %v2088
      %v2091 = vmul.f32 %v2089, %v2089
      %2092 = vadd.xlane.f32.xlu0 %v2090
      %v2093 = vpop.xlane.xlu0 %2092
      %2094 = vadd.xlane.f32.xlu0 %v2091
      %v2095 = vpop.xlane.xlu0 %2094
      %v2096 = vmul.f32 %v2093, 0.03125
      %v2097 = vmul.f32 %v2095, 0.03125
      %v2098 = vadd.f32 %v2096, 1e-05
      %v2099 = vadd.f32 %v2097, 1e-05
      %v2100 = vrsqrt.pop %v2098
      %v2101 = vrsqrt.pop %v2099
      %v2102 = vmul.f32 %v2088, %v2100
      %v2103 = vmul.f32 %v2089, %v2101
      %v2105 = vlaneseq
      %v2106 = vshrl.u32 %v2105, 7
      %v2107 = vsub.s32 0, %v2106
      %v2108 = vrot.slane %v2076, %v2107
      %v2110 = vmul.f32 %v2102, %v2108
      %v2111 = vmul.f32 %v2103, %v2108
      %v2113 = vlaneseq
      %v2114 = vshrl.u32 %v2113, 7
      %v2115 = vsub.s32 0, %v2114
      %v2116 = vrot.slane %v2077, %v2115
      %v2118 = vadd.f32 %v2110, %v2116
      %v2119 = vadd.f32 %v2111, %v2116
      %v2120 = vpack.c.bf16 %v2119, %v2118
      %v2121 = vld [vmem:[%s21] sm:$0xf]
      %v2122 = vld [vmem:[%s21 + $0x4] sm:$0xf]
      %v2123 = vld [vmem:[%s21 + $0x8] sm:$0xf]
      %v2124 = vld [vmem:[%s21 + $0xc] sm:$0xf]
      %v2125 = vld [vmem:[%s21 + $0x10] sm:$0xf]
      %v2126 = vld [vmem:[%s21 + $0x14] sm:$0xf]
      %v2127 = vld [vmem:[%s21 + $0x18] sm:$0xf]
      %v2128 = vld [vmem:[%s21 + $0x1c] sm:$0xf]
      %v2129 = vld [vmem:[%s21 + $0x20] sm:$0xf]
      %v2130 = vld [vmem:[%s21 + $0x24] sm:$0xf]
      %v2131 = vld [vmem:[%s21 + $0x28] sm:$0xf]
      %v2132 = vld [vmem:[%s21 + $0x2c] sm:$0xf]
      %v2133 = vld [vmem:[%s21 + $0x30] sm:$0xf]
      %v2134 = vld [vmem:[%s21 + $0x34] sm:$0xf]
      %v2135 = vld [vmem:[%s21 + $0x38] sm:$0xf]
      %v2136 = vld [vmem:[%s21 + $0x3c] sm:$0xf]
      %v2137 = vld [vmem:[%s22] sm:$0x1]
      %v2139 = vlaneseq
      %v2140 = vshrl.u32 %v2139, 7
      %v2141 = vsub.s32 0, %v2140
      %v2142 = vrot.slane %v2137, %v2141
      %v2160 = vunpack.c.l.b16 %v2121
      %v2161 = vunpack.c.l.b16 %v2122
      %v2162 = vunpack.c.l.b16 %v2123
      %v2163 = vunpack.c.l.b16 %v2124
      %v2164 = vunpack.c.l.b16 %v2125
      %v2165 = vunpack.c.l.b16 %v2126
      %v2166 = vunpack.c.l.b16 %v2127
      %v2167 = vunpack.c.l.b16 %v2128
      %v2168 = vunpack.c.l.b16 %v2129
      %v2169 = vunpack.c.l.b16 %v2130
      %v2170 = vunpack.c.l.b16 %v2131
      %v2171 = vunpack.c.l.b16 %v2132
      %v2172 = vunpack.c.l.b16 %v2133
      %v2173 = vunpack.c.l.b16 %v2134
      %v2174 = vunpack.c.l.b16 %v2135
      %v2175 = vunpack.c.l.b16 %v2136
      %v2176 = vpack.c.b16 %v2161, %v2160
      %v2177 = vpack.c.b16 %v2163, %v2162
      %v2178 = vpack.c.b16 %v2165, %v2164
      %v2179 = vpack.c.b16 %v2167, %v2166
      %v2180 = vpack.c.b16 %v2169, %v2168
      %v2181 = vpack.c.b16 %v2171, %v2170
      %v2182 = vpack.c.b16 %v2173, %v2172
      %v2183 = vpack.c.b16 %v2175, %v2174
      %2192 = vmatprep.subr.bf16.mxu0 0
      %2193 = vmatpush1.bf16.msra.mxu0 %v2176
      %2194 = vmatprep.subr.bf16.mxu0 0
      %2195 = vmatpush1.bf16.msra.mxu0 %v2177
      %2196 = vmatprep.subr.bf16.mxu0 0
      %2197 = vmatpush1.bf16.msra.mxu0 %v2178
      %2198 = vmatprep.subr.bf16.mxu0 0
      %2199 = vmatpush1.bf16.msra.mxu0 %v2179
      %2200 = vmatprep.subr.bf16.mxu0 0
      %2201 = vmatpush1.bf16.msra.mxu0 %v2180
      %2202 = vmatprep.subr.bf16.mxu0 0
      %2203 = vmatpush1.bf16.msra.mxu0 %v2181
      %2204 = vmatprep.subr.bf16.mxu0 0
      %2205 = vmatpush1.bf16.msra.mxu0 %v2182
      %2206 = vmatprep.subr.bf16.mxu0 0
      %2207 = vmatpush1.bf16.msra.mxu0 %v2183
      %2208 = vmatprep.subr.bf16.mxu0 0
      %2209 = vmatpush1.bf16.msra.mxu0 0
      %2210 = vmatprep.subr.bf16.mxu0 0
      %2211 = vmatpush1.bf16.msra.mxu0 0
      %2212 = vmatprep.subr.bf16.mxu0 0
      %2213 = vmatpush1.bf16.msra.mxu0 0
      %2214 = vmatprep.subr.bf16.mxu0 0
      %2215 = vmatpush1.bf16.msra.mxu0 0
      %2216 = vmatprep.subr.bf16.mxu0 0
      %2217 = vmatpush1.bf16.msra.mxu0 0
      %2218 = vmatprep.subr.bf16.mxu0 0
      %2219 = vmatpush1.bf16.msra.mxu0 0
      %2220 = vmatprep.subr.bf16.mxu0 0
      %2221 = vmatpush1.bf16.msra.mxu0 0
      %2222 = vmatprep.subr.bf16.mxu0 0
      %2223 = vmatpush1.bf16.msra.mxu0 0
      %2224 = vmatprep.mubr.bf16.mxu0 0
      %2225 = vmatmul.mubr.bf16.gmra.mrb[0].mxu0 %v2120
      %v2226 = vpop.f32.mrb[0].mxu0
      %v2227 = vadd.f32 %v2142, %v2226
      %v2228 = vpop.f32.mrb[0].mxu0
      %v2229 = vpop.f32.mrb[0].mxu0
      %v2230 = vadd.f32 %v2142, %v2229
      %v2231 = vpop.f32.mrb[0].mxu0
      %2232 = vdwg.mxu0
      %v2233 = vmul.f32 %v2227, 0.5
      %v2234 = vmul.f32 %v2230, 0.5
      %v2235 = vmul.f32 %v2227, 0.70710677
      %v2236 = vmul.f32 %v2230, 0.70710677
      %v2237 = verf.f32.pop %v2235
      %v2238 = verf.f32.pop %v2236
      %v2239 = vadd.f32 %v2237, 1.0
      %v2240 = vadd.f32 %v2238, 1.0
      %v2241 = vmul.f32 %v2233, %v2239
      %v2242 = vmul.f32 %v2234, %v2240
      %v2243 = vpack.c.bf16 %v2242, %v2241
      %v2244 = vld [vmem:[%s23] sm:$0xf]
      %v2245 = vld [vmem:[%s23 + $0x4] sm:$0xf]
      %v2246 = vld [vmem:[%s23 + $0x8] sm:$0xf]
      %v2247 = vld [vmem:[%s23 + $0xc] sm:$0xf]
      %v2248 = vld [vmem:[%s23 + $0x10] sm:$0xf]
      %v2249 = vld [vmem:[%s23 + $0x14] sm:$0xf]
      %v2250 = vld [vmem:[%s23 + $0x18] sm:$0xf]
      %v2251 = vld [vmem:[%s23 + $0x1c] sm:$0xf]
      %v2252 = vld [vmem:[%s23 + $0x20] sm:$0xf]
      %v2253 = vld [vmem:[%s23 + $0x24] sm:$0xf]
      %v2254 = vld [vmem:[%s23 + $0x28] sm:$0xf]
      %v2255 = vld [vmem:[%s23 + $0x2c] sm:$0xf]
      %v2256 = vld [vmem:[%s23 + $0x30] sm:$0xf]
      %v2257 = vld [vmem:[%s23 + $0x34] sm:$0xf]
      %v2258 = vld [vmem:[%s23 + $0x38] sm:$0xf]
      %v2259 = vld [vmem:[%s23 + $0x3c] sm:$0xf]
      %v2260 = vld [vmem:[%s24] sm:$0x1]
      %v2262 = vlaneseq
      %v2263 = vshrl.u32 %v2262, 7
      %v2264 = vsub.s32 0, %v2263
      %v2265 = vrot.slane %v2260, %v2264
      %v2283 = vunpack.c.l.b16 %v2244
      %v2284 = vunpack.c.l.b16 %v2245
      %v2285 = vunpack.c.l.b16 %v2246
      %v2286 = vunpack.c.l.b16 %v2247
      %v2287 = vunpack.c.l.b16 %v2248
      %v2288 = vunpack.c.l.b16 %v2249
      %v2289 = vunpack.c.l.b16 %v2250
      %v2290 = vunpack.c.l.b16 %v2251
      %v2291 = vunpack.c.l.b16 %v2252
      %v2292 = vunpack.c.l.b16 %v2253
      %v2293 = vunpack.c.l.b16 %v2254
      %v2294 = vunpack.c.l.b16 %v2255
      %v2295 = vunpack.c.l.b16 %v2256
      %v2296 = vunpack.c.l.b16 %v2257
      %v2297 = vunpack.c.l.b16 %v2258
      %v2298 = vunpack.c.l.b16 %v2259
      %v2299 = vpack.c.b16 %v2284, %v2283
      %v2300 = vpack.c.b16 %v2286, %v2285
      %v2301 = vpack.c.b16 %v2288, %v2287
      %v2302 = vpack.c.b16 %v2290, %v2289
      %v2303 = vpack.c.b16 %v2292, %v2291
      %v2304 = vpack.c.b16 %v2294, %v2293
      %v2305 = vpack.c.b16 %v2296, %v2295
      %v2306 = vpack.c.b16 %v2298, %v2297
      %2315 = vmatprep.subr.bf16.mxu0 0
      %2316 = vmatpush1.bf16.msra.mxu0 %v2299
      %2317 = vmatprep.subr.bf16.mxu0 0
      %2318 = vmatpush1.bf16.msra.mxu0 %v2300
      %2319 = vmatprep.subr.bf16.mxu0 0
      %2320 = vmatpush1.bf16.msra.mxu0 %v2301
      %2321 = vmatprep.subr.bf16.mxu0 0
      %2322 = vmatpush1.bf16.msra.mxu0 %v2302
      %2323 = vmatprep.subr.bf16.mxu0 0
      %2324 = vmatpush1.bf16.msra.mxu0 %v2303
      %2325 = vmatprep.subr.bf16.mxu0 0
      %2326 = vmatpush1.bf16.msra.mxu0 %v2304
      %2327 = vmatprep.subr.bf16.mxu0 0
      %2328 = vmatpush1.bf16.msra.mxu0 %v2305
      %2329 = vmatprep.subr.bf16.mxu0 0
      %2330 = vmatpush1.bf16.msra.mxu0 %v2306
      %2331 = vmatprep.subr.bf16.mxu0 0
      %2332 = vmatpush1.bf16.msra.mxu0 0
      %2333 = vmatprep.subr.bf16.mxu0 0
      %2334 = vmatpush1.bf16.msra.mxu0 0
      %2335 = vmatprep.subr.bf16.mxu0 0
      %2336 = vmatpush1.bf16.msra.mxu0 0
      %2337 = vmatprep.subr.bf16.mxu0 0
      %2338 = vmatpush1.bf16.msra.mxu0 0
      %2339 = vmatprep.subr.bf16.mxu0 0
      %2340 = vmatpush1.bf16.msra.mxu0 0
      %2341 = vmatprep.subr.bf16.mxu0 0
      %2342 = vmatpush1.bf16.msra.mxu0 0
      %2343 = vmatprep.subr.bf16.mxu0 0
      %2344 = vmatpush1.bf16.msra.mxu0 0
      %2345 = vmatprep.subr.bf16.mxu0 0
      %2346 = vmatpush1.bf16.msra.mxu0 0
      %2347 = vmatprep.mubr.bf16.mxu0 0
      %2348 = vmatmul.mubr.bf16.gmra.mrb[0].mxu0 %v2243
      %v2349 = vpop.f32.mrb[0].mxu0
      %v2350 = vadd.f32 %v2265, %v2349
      %v2351 = vpop.f32.mrb[0].mxu0
      %v2352 = vpop.f32.mrb[0].mxu0
      %v2353 = vadd.f32 %v2265, %v2352
      %v2354 = vpop.f32.mrb[0].mxu0
      %2355 = vdwg.mxu0
      %v2356 = vadd.f32 %v2350, %v2074
      %v2357 = vadd.f32 %v2353, %v2075
      %2358 = vst [vmem:[%s764] sm:$0xff] %v2356
      %2359 = vst [vmem:[%s764 + $0x8] sm:$0xff] %v2357
      %p2360 = scmp.lt.s32.totalorder %s36, 1
      %s2361 = scalar_select %p2360, %s36, 1
      %s2362 = smul.addr %s2361, 2
      %s2363 = smul.addr %s2362, 8
      %s2364 = scalar_lea.vmem %s25, %s2363
      // Predicated region
      $region121: #{mlpmixer_forward.4} parent=119 // pred_check
        %p2365 = pneg %p584
      $region122: #{mlpmixer_forward.4} parent=119 // pred_check_branch
        %2367 = sbr.rel (%p2365) target = $region124
      $region123: #{mlpmixer_forward.4} parent=119 // pred_region
        _
      $region124: #{mlpmixer_forward.4} parent=119 // pred_fallthru
        _
    $region120: #{mlpmixer_forward.4} parent=5 // pred_fallthru
      _
    %p2368 = scmp.le.s32.totalorder 2, %s31
    // Predicated region
    $region125: #{mlpmixer_forward.4} parent=5 // pred_check
      %p2369 = pneg %p2368
    $region126: #{mlpmixer_forward.4} parent=5 // pred_check_branch
      %2371 = sbr.rel (%p2369) target = $region128
    $region127: #{mlpmixer_forward.4} parent=5 // pred_region
      %s2372 = ssub.s32 %s31, 2
      // Predicated region
      $region129: #{mlpmixer_forward.4} parent=127 // pred_check
        %p2373 = pneg %p590
      $region130: #{mlpmixer_forward.4} parent=127 // pred_check_branch
        %2375 = sbr.rel (%p2373) target = $region132
      $region131: #{mlpmixer_forward.4} parent=127 // pred_region
        %p2376 = scmp.lt.s32.totalorder %s37, 1
        %s2377 = scalar_select %p2376, %s37, 1
        %s2378 = smul.addr %s2377, 2
        %s2379 = smul.addr %s2378, 8
        %s2380 = scalar_lea.vmem %s25, %s2379
      $region132: #{mlpmixer_forward.4} parent=127 // pred_fallthru
        _
    $region128: #{mlpmixer_forward.4} parent=5 // pred_fallthru
      _
  $region6: #{mlpmixer_forward.4} parent=0 // loop_footer
    %s35 = sadd.s32 1, %s31
  $region7: #{mlpmixer_forward.4} parent=0 // loop_footer_branch
    %30 = sbr.rel target = $region3
  $region8: #{mlpmixer_forward.4} parent=0 // loop_exit
    _

</llo_original>
